<compile_context>
chip_gen: v7x
topology: tpu7x:2x2x1
jax: 0.10.0
libtpu: 0.0.40
codegen_flags: <defaults>
</compile_context>

<pallas_src>
import jax
import jax.numpy as jnp
import numpy as np
from jax.experimental import pallas as pl
from jax.experimental.pallas import tpu as pltpu

# ----------------------------- model dims (small) ---------------------------
B = 2            # logical batch
T = 8            # max sequence length
D_IN = 16        # input_size   (module default 117, shrunk for the demo)
H = 128          # hidden_size  (module default 512; 128 keeps gate slices lane-aligned)
C = 8            # num_class
NUM_LAYERS = 2

BP = 8           # batch padded to the f32 sublane count
C_PAD = 128      # lane-dense classifier output width (sliced to C outside)


def _gate_math(gates, c):
    """PyTorch gate order i, f, g, o.  All elementwise math in f32."""
    i = jax.nn.sigmoid(gates[:, 0 * H:1 * H])
    f = jax.nn.sigmoid(gates[:, 1 * H:2 * H])
    g = jnp.tanh(gates[:, 2 * H:3 * H])
    o = jax.nn.sigmoid(gates[:, 3 * H:4 * H])
    c_new = f * c + i * g
    h_new = o * jnp.tanh(c_new)
    return h_new, c_new


def bilstm_kernel(
    len_ref,                      # [BP, 1]  int32 padded sequence lengths
    x_ref,                        # [T*BP, D_IN] bf16 time-major flattened input
    wih0_ref, whh0_ref, b0_ref,   # layer 0: [D_IN,4H] bf16, [H,4H] bf16, [1,4H] f32
    wcat1_ref, b1_ref,            # layer 1 fused: [2H,4H] bf16, [1,4H] f32
    wfc_ref, bfc_ref,             # fc (lane-padded): [H,C_PAD] f32, [1,C_PAD] f32
    out_ref,                      # [BP, C_PAD] f32
    xproj_ref,                    # VMEM scratch [T*BP, 4H] f32 (staged x @ W_ih0 + b0)
    cat_ref,                      # VMEM scratch [BP, 2H] bf16: [ h0(t) | h1(t-1) ]
):
    lengths = len_ref[...]                                 # [BP, 1] int32

    # ---- hoisted weight loads (already bf16 from the wrapper) ----
    whh0 = whh0_ref[...]
    wcat1 = wcat1_ref[...]
    b1 = jnp.broadcast_to(b1_ref[...], (BP, 4 * H))        # hoisted broadcast

    # ---- layer-0 input projections for ALL timesteps, staged to VMEM scratch ----
    xproj_ref[...] = (
        jnp.dot(x_ref[...], wih0_ref[...], preferred_element_type=jnp.float32)
        + b0_ref[...])                                     # [T*BP, 4H] f32

    # ---- prologue: layer-0 step 0 (h0(-1)=c0(-1)=0 -> recurrent matmul is 0) ----
    h0_0, c0 = _gate_math(xproj_ref[0:BP, :], jnp.zeros((BP, H), jnp.float32))
    cat_ref[:, 0:H] = h0_0.astype(jnp.bfloat16)            # h0(0)
    cat_ref[:, H:2 * H] = jnp.zeros((BP, H), jnp.bfloat16)  # h1(-1) = 0

    c1 = jnp.zeros((BP, H), jnp.float32)
    final_h1 = jnp.zeros((BP, H), jnp.float32)

    # ---- skewed, unmasked recurrence (statically unrolled, no grid overhead) ----
    # Iteration t: layer-1 step t  and  layer-0 step t+1 (mutually independent).
    for t in range(T):
        cat = cat_ref[...]                                 # bf16 [ h0(t) | h1(t-1) ]

        # layer-1 step t: fused ih/hh matmul on the persistent concat buffer.
        g1 = jnp.dot(cat, wcat1, preferred_element_type=jnp.float32) + b1
        h1n, c1 = _gate_math(g1, c1)

        if t + 1 < T:
            # layer-0 step t+1 (independent of layer-1 step t -> overlaps with it).
            g0 = xproj_ref[(t + 1) * BP:(t + 2) * BP, :] + jnp.dot(
                cat[:, 0:H], whh0, preferred_element_type=jnp.float32)
            h0n, c0 = _gate_math(g0, c0)
            cat_ref[:, 0:H] = h0n.astype(jnp.bfloat16)

        # Off-chain snapshot of hidden[-1] at each row's own final timestep.
        final_h1 = jnp.where(t == lengths - 1, h1n, final_h1)

        cat_ref[:, H:2 * H] = h1n.astype(jnp.bfloat16)

    # Classifier on hidden[-1] (dropout = identity in eval); f32, lane-dense out.
    logits = (jnp.dot(final_h1, wfc_ref[...], preferred_element_type=jnp.float32)
              + bfc_ref[...])
    out_ref[...] = logits.astype(out_ref.dtype)


@jax.jit
def bilstm_forward(x, lengths, params):
    """x: [B, T, D_IN] float32 (batch-first, like the PyTorch module).
       lengths: [B] int.  Returns logits [B, C]."""
    # Pad batch to 8 sublanes (padded rows have length 0 -> never snapshotted).
    xp = jnp.zeros((BP, T, D_IN), jnp.float32).at[:B].set(x)
    lenp = jnp.zeros((BP,), jnp.int32).at[:B].set(lengths.astype(jnp.int32))

    # Time-major slab, pre-cast to bf16 (halves DMA bytes; matches MXU operand dtype).
    x_tm = jnp.transpose(xp, (1, 0, 2)).reshape(T * BP, D_IN).astype(jnp.bfloat16)
    len2d = lenp.reshape(BP, 1)

    # Pre-cast weights to bf16 in the wrapper; fuse layer-1 ih/hh; lane-pad the fc.
    wih0_bf = params["wih0_t"].astype(jnp.bfloat16)
    whh0_bf = params["whh0_t"].astype(jnp.bfloat16)
    wcat1_bf = jnp.concatenate([params["wih1_t"], params["whh1_t"]],
                               axis=0).astype(jnp.bfloat16)              # [2H, 4H]
    wfc_pad = jnp.zeros((H, C_PAD), jnp.float32).at[:, :C].set(params["wfc_t"])
    bfc_pad = jnp.zeros((1, C_PAD), jnp.float32).at[:, :C].set(params["bfc"])

    full = lambda *shape: pl.BlockSpec(shape, lambda i: (0,) * len(shape))

    grid_spec = pltpu.PrefetchScalarGridSpec(
        num_scalar_prefetch=0,
        grid=(1,),                                  # whole recurrence in one step
        in_specs=[
            full(BP, 1),                            # lengths
            full(T * BP, D_IN),                     # full input slab (bf16)
            full(D_IN, 4 * H), full(H, 4 * H), full(1, 4 * H),   # layer 0
            full(2 * H, 4 * H), full(1, 4 * H),                  # layer 1 (fused)
            full(H, C_PAD), full(1, C_PAD),                      # fc (lane-padded)
        ],
        out_specs=pl.BlockSpec((BP, C_PAD), lambda i: (0, 0)),
        scratch_shapes=[
            pltpu.VMEM((T * BP, 4 * H), jnp.float32),   # staged x @ W_ih0 + b0
            pltpu.VMEM((BP, 2 * H), jnp.bfloat16),      # persistent [h0 | h1] bf16
        ],
    )

    out = pl.pallas_call(
        bilstm_kernel,
        out_shape=jax.ShapeDtypeStruct((BP, C_PAD), jnp.float32),
        grid_spec=grid_spec,
        compiler_params=pltpu.CompilerParams(
            dimension_semantics=("arbitrary",)),
    )(
        len2d, x_tm,
        wih0_bf, whh0_bf, params["b0"],
        wcat1_bf, params["b1"],
        wfc_pad, bfc_pad,
    )
    return out[:B, :C]


def reference_forward(x, lengths, p):
    """Pure-JAX reference of the packed-LSTM + fc forward (same bf16 MXU operand
    / f32 accumulation precision policy as the kernel; explicit masking)."""
    wih0 = p["wih0_t"].astype(jnp.bfloat16)
    whh0 = p["whh0_t"].astype(jnp.bfloat16)
    wih1 = p["wih1_t"].astype(jnp.bfloat16)
    whh1 = p["whh1_t"].astype(jnp.bfloat16)

    h0 = jnp.zeros((B, H), jnp.float32)
    c0 = jnp.zeros((B, H), jnp.float32)
    h1 = jnp.zeros((B, H), jnp.float32)
    c1 = jnp.zeros((B, H), jnp.float32)
    for t in range(T):
        mask = (t < lengths)[:, None]
        x_t = x[:, t, :].astype(jnp.bfloat16)
        g0 = (jnp.dot(x_t, wih0, preferred_element_type=jnp.float32)
              + jnp.dot(h0.astype(jnp.bfloat16), whh0, preferred_element_type=jnp.float32)
              + p["b0"])
        h0n, c0n = _gate_math(g0, c0)
        h0 = jnp.where(mask, h0n, h0)
        c0 = jnp.where(mask, c0n, c0)

        g1 = (jnp.dot(h0.astype(jnp.bfloat16), wih1, preferred_element_type=jnp.float32)
              + jnp.dot(h1.astype(jnp.bfloat16), whh1, preferred_element_type=jnp.float32)
              + p["b1"])
        h1n, c1n = _gate_math(g1, c1)
        h1 = jnp.where(mask, h1n, h1)
        c1 = jnp.where(mask, c1n, c1)
    return jnp.dot(h1, p["wfc_t"], preferred_element_type=jnp.float32) + p["bfc"]


def init_params(key):
    """Deterministic uniform init ~ PyTorch LSTM default (+/- 1/sqrt(H))."""
    ks = jax.random.split(key, 10)
    s = 1.0 / np.sqrt(H)
    u = lambda k, shape: jax.random.uniform(k, shape, jnp.float32, -s, s)
    return {
        # transposed weights so kernel does x @ W ; biases b_ih + b_hh folded.
        "wih0_t": u(ks[0], (D_IN, 4 * H)),
        "whh0_t": u(ks[1], (H, 4 * H)),
        "b0":     u(ks[2], (1, 4 * H)) + u(ks[3], (1, 4 * H)),
        "wih1_t": u(ks[4], (H, 4 * H)),
        "whh1_t": u(ks[5], (H, 4 * H)),
        "b1":     u(ks[6], (1, 4 * H)) + u(ks[7], (1, 4 * H)),
        "wfc_t":  u(ks[8], (H, C)),
        "bfc":    u(ks[9], (1, C)),
    }


if __name__ == "__main__":
    key = jax.random.PRNGKey(0)
    k_x, k_p = jax.random.split(key)

    x = jax.random.normal(k_x, (B, T, D_IN), jnp.float32)
    lengths = jnp.array([T, 5], jnp.int32)       # variable sequence lengths
    params = init_params(k_p)

    out = bilstm_forward(x, lengths, params)
    out = jax.block_until_ready(out)

    ref = reference_forward(x, lengths, params)
    np.testing.assert_allclose(np.asarray(out), np.asarray(ref),
                               rtol=5e-3, atol=5e-3)
    assert out.shape == (B, C)
    print("KERNEL_OK")
</pallas_src>

<mosaic_0001>
module attributes {stable_mosaic.version = 11 : i64} {
  func.func @bilstm_kernel(%arg0: i32, %arg1: memref<8x1xi32, #tpu.memory_space<vmem>>, %arg2: memref<64x16xbf16, #tpu.memory_space<vmem>>, %arg3: memref<16x512xbf16, #tpu.memory_space<vmem>>, %arg4: memref<128x512xbf16, #tpu.memory_space<vmem>>, %arg5: memref<1x512xf32, #tpu.memory_space<vmem>>, %arg6: memref<256x512xbf16, #tpu.memory_space<vmem>>, %arg7: memref<1x512xf32, #tpu.memory_space<vmem>>, %arg8: memref<128x128xf32, #tpu.memory_space<vmem>>, %arg9: memref<1x128xf32, #tpu.memory_space<vmem>>, %arg10: memref<8x128xf32, #tpu.memory_space<vmem>>, %arg11: memref<64x512xf32, #tpu.memory_space<vmem>>, %arg12: memref<8x256xbf16, #tpu.memory_space<vmem>>) attributes {dimension_semantics = [#tpu.dimension_semantics<arbitrary>], iteration_bounds = array<i64: 1>, scalar_prefetch = 0 : i64, scratch_operands = 2 : i64, tpu.core_type = #tpu.core_type<tc>, window_params = [{pipeline_mode = #tpu.pipeline_mode<synchronous>, transform_indices = @transform_0, window_bounds = array<i64: 8, 1>}, {pipeline_mode = #tpu.pipeline_mode<synchronous>, transform_indices = @transform_1, window_bounds = array<i64: 64, 16>}, {pipeline_mode = #tpu.pipeline_mode<synchronous>, transform_indices = @transform_2, window_bounds = array<i64: 16, 512>}, {pipeline_mode = #tpu.pipeline_mode<synchronous>, transform_indices = @transform_3, window_bounds = array<i64: 128, 512>}, {pipeline_mode = #tpu.pipeline_mode<synchronous>, transform_indices = @transform_4, window_bounds = array<i64: 1, 512>}, {pipeline_mode = #tpu.pipeline_mode<synchronous>, transform_indices = @transform_5, window_bounds = array<i64: 256, 512>}, {pipeline_mode = #tpu.pipeline_mode<synchronous>, transform_indices = @transform_6, window_bounds = array<i64: 1, 512>}, {pipeline_mode = #tpu.pipeline_mode<synchronous>, transform_indices = @transform_7, window_bounds = array<i64: 128, 128>}, {pipeline_mode = #tpu.pipeline_mode<synchronous>, transform_indices = @transform_8, window_bounds = array<i64: 1, 128>}, {pipeline_mode = #tpu.pipeline_mode<synchronous>, transform_indices = @transform_9, window_bounds = array<i64: 8, 128>}]} {
    %c0 = arith.constant 0 : index
    %c0_0 = arith.constant 0 : index
    %0 = vector.load %arg1[%c0, %c0_0] : memref<8x1xi32, #tpu.memory_space<vmem>>, vector<8x1xi32>
    %c0_1 = arith.constant 0 : index
    %c0_2 = arith.constant 0 : index
    %1 = vector.load %arg4[%c0_1, %c0_2] : memref<128x512xbf16, #tpu.memory_space<vmem>>, vector<128x512xbf16>
    %c0_3 = arith.constant 0 : index
    %c0_4 = arith.constant 0 : index
    %2 = vector.load %arg6[%c0_3, %c0_4] : memref<256x512xbf16, #tpu.memory_space<vmem>>, vector<256x512xbf16>
    %c0_5 = arith.constant 0 : index
    %c0_6 = arith.constant 0 : index
    %3 = vector.load %arg7[%c0_5, %c0_6] : memref<1x512xf32, #tpu.memory_space<vmem>>, vector<1x512xf32>
    %4 = vector.shape_cast %3 : vector<1x512xf32> to vector<1x512xf32>
    %5 = vector.broadcast %4 : vector<1x512xf32> to vector<8x512xf32>
    %c0_7 = arith.constant 0 : index
    %c0_8 = arith.constant 0 : index
    %6 = vector.load %arg2[%c0_7, %c0_8] : memref<64x16xbf16, #tpu.memory_space<vmem>>, vector<64x16xbf16>
    %c0_9 = arith.constant 0 : index
    %c0_10 = arith.constant 0 : index
    %7 = vector.load %arg3[%c0_9, %c0_10] : memref<16x512xbf16, #tpu.memory_space<vmem>>, vector<16x512xbf16>
    %cst = arith.constant dense<0.000000e+00> : vector<64x512xf32>
    %8 = tpu.matmul %6, %7, %cst {dimension_numbers = #tpu.dot_dimension_numbers<[1], [0], [0], [1], [0, 0, 1, 1], [], []>} : vector<64x16xbf16>, vector<16x512xbf16>, vector<64x512xf32> -> vector<64x512xf32>
    %c0_11 = arith.constant 0 : index
    %c0_12 = arith.constant 0 : index
    %9 = vector.load %arg5[%c0_11, %c0_12] : memref<1x512xf32, #tpu.memory_space<vmem>>, vector<1x512xf32>
    %10 = vector.broadcast %9 : vector<1x512xf32> to vector<64x512xf32>
    %11 = arith.addf %8, %10 : vector<64x512xf32>
    %c0_13 = arith.constant 0 : index
    %c0_14 = arith.constant 0 : index
    %12 = vector.load %arg11[%c0_13, %c0_14] : memref<64x512xf32, #tpu.memory_space<vmem>>, vector<64x512xf32>
    tpu.vector_store %arg11[%c0_13, %c0_14], %11 {strides = array<i32>} : memref<64x512xf32, #tpu.memory_space<vmem>>, vector<64x512xf32>,
    %c0_15 = arith.constant 0 : index
    %c0_16 = arith.constant 0 : index
    %13 = vector.load %arg11[%c0_15, %c0_16] : memref<64x512xf32, #tpu.memory_space<vmem>>, vector<8x512xf32>
    %cst_17 = arith.constant 0.000000e+00 : f32
    %14 = vector.broadcast %cst_17 : f32 to vector<8x128xf32>
    %15 = vector.extract_strided_slice %13 {offsets = [0, 0], sizes = [8, 128], strides = [1, 1]} : vector<8x512xf32> to vector<8x128xf32>
    %16 = arith.negf %15 : vector<8x128xf32>
    %17 = math.exp %16 : vector<8x128xf32>
    %cst_18 = arith.constant 1.000000e+00 : f32
    %18 = vector.broadcast %cst_18 : f32 to vector<8x128xf32>
    %19 = arith.addf %18, %17 : vector<8x128xf32>
    %20 = arith.divf %18, %19 : vector<8x128xf32>
    %21 = vector.extract_strided_slice %13 {offsets = [0, 128], sizes = [8, 128], strides = [1, 1]} : vector<8x512xf32> to vector<8x128xf32>
    %22 = arith.negf %21 : vector<8x128xf32>
    %23 = math.exp %22 : vector<8x128xf32>
    %cst_19 = arith.constant 1.000000e+00 : f32
    %24 = vector.broadcast %cst_19 : f32 to vector<8x128xf32>
    %25 = arith.addf %24, %23 : vector<8x128xf32>
    %26 = arith.divf %24, %25 : vector<8x128xf32>
    %27 = vector.extract_strided_slice %13 {offsets = [0, 256], sizes = [8, 128], strides = [1, 1]} : vector<8x512xf32> to vector<8x128xf32>
    %28 = math.tanh %27 : vector<8x128xf32>
    %29 = vector.extract_strided_slice %13 {offsets = [0, 384], sizes = [8, 128], strides = [1, 1]} : vector<8x512xf32> to vector<8x128xf32>
    %30 = arith.negf %29 : vector<8x128xf32>
    %31 = math.exp %30 : vector<8x128xf32>
    %cst_20 = arith.constant 1.000000e+00 : f32
    %32 = vector.broadcast %cst_20 : f32 to vector<8x128xf32>
    %33 = arith.addf %32, %31 : vector<8x128xf32>
    %34 = arith.divf %32, %33 : vector<8x128xf32>
    %35 = arith.mulf %26, %14 : vector<8x128xf32>
    %36 = arith.mulf %20, %28 : vector<8x128xf32>
    %37 = arith.addf %35, %36 : vector<8x128xf32>
    %38 = math.tanh %37 : vector<8x128xf32>
    %39 = arith.mulf %34, %38 : vector<8x128xf32>
    %40 = arith.truncf %39 : vector<8x128xf32> to vector<8x128xbf16>
    %c0_21 = arith.constant 0 : index
    %c0_22 = arith.constant 0 : index
    %41 = vector.load %arg12[%c0_21, %c0_22] : memref<8x256xbf16, #tpu.memory_space<vmem>>, vector<8x128xbf16>
    tpu.vector_store %arg12[%c0_21, %c0_22], %40 {strides = array<i32>} : memref<8x256xbf16, #tpu.memory_space<vmem>>, vector<8x128xbf16>,
    %cst_23 = arith.constant 0.000000e+00 : bf16
    %42 = vector.broadcast %cst_23 : bf16 to vector<8x128xbf16>
    %c0_24 = arith.constant 0 : index
    %c128 = arith.constant 128 : index
    %43 = vector.load %arg12[%c0_24, %c128] : memref<8x256xbf16, #tpu.memory_space<vmem>>, vector<8x128xbf16>
    tpu.vector_store %arg12[%c0_24, %c128], %42 {strides = array<i32>} : memref<8x256xbf16, #tpu.memory_space<vmem>>, vector<8x128xbf16>,
    %cst_25 = arith.constant 0.000000e+00 : f32
    %44 = vector.broadcast %cst_25 : f32 to vector<8x128xf32>
    %cst_26 = arith.constant 0.000000e+00 : f32
    %45 = vector.broadcast %cst_26 : f32 to vector<8x128xf32>
    %c0_27 = arith.constant 0 : index
    %c0_28 = arith.constant 0 : index
    %46 = vector.load %arg12[%c0_27, %c0_28] : memref<8x256xbf16, #tpu.memory_space<vmem>>, vector<8x256xbf16>
    %cst_29 = arith.constant dense<0.000000e+00> : vector<8x512xf32>
    %47 = tpu.matmul %46, %2, %cst_29 {dimension_numbers = #tpu.dot_dimension_numbers<[1], [0], [0], [1], [0, 0, 1, 1], [], []>} : vector<8x256xbf16>, vector<256x512xbf16>, vector<8x512xf32> -> vector<8x512xf32>
    %48 = arith.addf %47, %5 : vector<8x512xf32>
    %49 = vector.extract_strided_slice %48 {offsets = [0, 0], sizes = [8, 128], strides = [1, 1]} : vector<8x512xf32> to vector<8x128xf32>
    %50 = arith.negf %49 : vector<8x128xf32>
    %51 = math.exp %50 : vector<8x128xf32>
    %cst_30 = arith.constant 1.000000e+00 : f32
    %52 = vector.broadcast %cst_30 : f32 to vector<8x128xf32>
    %53 = arith.addf %52, %51 : vector<8x128xf32>
    %54 = arith.divf %52, %53 : vector<8x128xf32>
    %55 = vector.extract_strided_slice %48 {offsets = [0, 128], sizes = [8, 128], strides = [1, 1]} : vector<8x512xf32> to vector<8x128xf32>
    %56 = arith.negf %55 : vector<8x128xf32>
    %57 = math.exp %56 : vector<8x128xf32>
    %cst_31 = arith.constant 1.000000e+00 : f32
    %58 = vector.broadcast %cst_31 : f32 to vector<8x128xf32>
    %59 = arith.addf %58, %57 : vector<8x128xf32>
    %60 = arith.divf %58, %59 : vector<8x128xf32>
    %61 = vector.extract_strided_slice %48 {offsets = [0, 256], sizes = [8, 128], strides = [1, 1]} : vector<8x512xf32> to vector<8x128xf32>
    %62 = math.tanh %61 : vector<8x128xf32>
    %63 = vector.extract_strided_slice %48 {offsets = [0, 384], sizes = [8, 128], strides = [1, 1]} : vector<8x512xf32> to vector<8x128xf32>
    %64 = arith.negf %63 : vector<8x128xf32>
    %65 = math.exp %64 : vector<8x128xf32>
    %cst_32 = arith.constant 1.000000e+00 : f32
    %66 = vector.broadcast %cst_32 : f32 to vector<8x128xf32>
    %67 = arith.addf %66, %65 : vector<8x128xf32>
    %68 = arith.divf %66, %67 : vector<8x128xf32>
    %69 = arith.mulf %60, %44 : vector<8x128xf32>
    %70 = arith.mulf %54, %62 : vector<8x128xf32>
    %71 = arith.addf %69, %70 : vector<8x128xf32>
    %72 = math.tanh %71 : vector<8x128xf32>
    %73 = arith.mulf %68, %72 : vector<8x128xf32>
    %c8 = arith.constant 8 : index
    %c0_33 = arith.constant 0 : index
    %74 = vector.load %arg11[%c8, %c0_33] : memref<64x512xf32, #tpu.memory_space<vmem>>, vector<8x512xf32>
    %75 = vector.extract_strided_slice %46 {offsets = [0, 0], sizes = [8, 128], strides = [1, 1]} : vector<8x256xbf16> to vector<8x128xbf16>
    %cst_34 = arith.constant dense<0.000000e+00> : vector<8x512xf32>
    %76 = tpu.matmul %75, %1, %cst_34 {dimension_numbers = #tpu.dot_dimension_numbers<[1], [0], [0], [1], [0, 0, 1, 1], [], []>} : vector<8x128xbf16>, vector<128x512xbf16>, vector<8x512xf32> -> vector<8x512xf32>
    %77 = arith.addf %74, %76 : vector<8x512xf32>
    %78 = vector.extract_strided_slice %77 {offsets = [0, 0], sizes = [8, 128], strides = [1, 1]} : vector<8x512xf32> to vector<8x128xf32>
    %79 = arith.negf %78 : vector<8x128xf32>
    %80 = math.exp %79 : vector<8x128xf32>
    %cst_35 = arith.constant 1.000000e+00 : f32
    %81 = vector.broadcast %cst_35 : f32 to vector<8x128xf32>
    %82 = arith.addf %81, %80 : vector<8x128xf32>
    %83 = arith.divf %81, %82 : vector<8x128xf32>
    %84 = vector.extract_strided_slice %77 {offsets = [0, 128], sizes = [8, 128], strides = [1, 1]} : vector<8x512xf32> to vector<8x128xf32>
    %85 = arith.negf %84 : vector<8x128xf32>
    %86 = math.exp %85 : vector<8x128xf32>
    %cst_36 = arith.constant 1.000000e+00 : f32
    %87 = vector.broadcast %cst_36 : f32 to vector<8x128xf32>
    %88 = arith.addf %87, %86 : vector<8x128xf32>
    %89 = arith.divf %87, %88 : vector<8x128xf32>
    %90 = vector.extract_strided_slice %77 {offsets = [0, 256], sizes = [8, 128], strides = [1, 1]} : vector<8x512xf32> to vector<8x128xf32>
    %91 = math.tanh %90 : vector<8x128xf32>
    %92 = vector.extract_strided_slice %77 {offsets = [0, 384], sizes = [8, 128], strides = [1, 1]} : vector<8x512xf32> to vector<8x128xf32>
    %93 = arith.negf %92 : vector<8x128xf32>
    %94 = math.exp %93 : vector<8x128xf32>
    %cst_37 = arith.constant 1.000000e+00 : f32
    %95 = vector.broadcast %cst_37 : f32 to vector<8x128xf32>
    %96 = arith.addf %95, %94 : vector<8x128xf32>
    %97 = arith.divf %95, %96 : vector<8x128xf32>
    %98 = arith.mulf %89, %37 : vector<8x128xf32>
    %99 = arith.mulf %83, %91 : vector<8x128xf32>
    %100 = arith.addf %98, %99 : vector<8x128xf32>
    %101 = math.tanh %100 : vector<8x128xf32>
    %102 = arith.mulf %97, %101 : vector<8x128xf32>
    %103 = arith.truncf %102 : vector<8x128xf32> to vector<8x128xbf16>
    %c0_38 = arith.constant 0 : index
    %c0_39 = arith.constant 0 : index
    %104 = vector.load %arg12[%c0_38, %c0_39] : memref<8x256xbf16, #tpu.memory_space<vmem>>, vector<8x128xbf16>
    tpu.vector_store %arg12[%c0_38, %c0_39], %103 {strides = array<i32>} : memref<8x256xbf16, #tpu.memory_space<vmem>>, vector<8x128xbf16>,
    %c1_i32 = arith.constant 1 : i32
    %105 = vector.broadcast %c1_i32 : i32 to vector<8x1xi32>
    %106 = arith.subi %0, %105 : vector<8x1xi32>
    %c0_i32 = arith.constant 0 : i32
    %107 = vector.broadcast %c0_i32 : i32 to vector<8x1xi32>
    %108 = arith.cmpi eq, %106, %107 : vector<8x1xi32>
    %109 = vector.shape_cast %108 : vector<8x1xi1> to vector<8x1xi1>
    %110 = vector.broadcast %109 : vector<8x1xi1> to vector<8x128xi1>
    %111 = arith.select %110, %73, %45 : vector<8x128xi1>, vector<8x128xf32>
    %112 = arith.truncf %73 : vector<8x128xf32> to vector<8x128xbf16>
    %c0_40 = arith.constant 0 : index
    %c128_41 = arith.constant 128 : index
    %113 = vector.load %arg12[%c0_40, %c128_41] : memref<8x256xbf16, #tpu.memory_space<vmem>>, vector<8x128xbf16>
    tpu.vector_store %arg12[%c0_40, %c128_41], %112 {strides = array<i32>} : memref<8x256xbf16, #tpu.memory_space<vmem>>, vector<8x128xbf16>,
    %c0_42 = arith.constant 0 : index
    %c0_43 = arith.constant 0 : index
    %114 = vector.load %arg12[%c0_42, %c0_43] : memref<8x256xbf16, #tpu.memory_space<vmem>>, vector<8x256xbf16>
    %cst_44 = arith.constant dense<0.000000e+00> : vector<8x512xf32>
    %115 = tpu.matmul %114, %2, %cst_44 {dimension_numbers = #tpu.dot_dimension_numbers<[1], [0], [0], [1], [0, 0, 1, 1], [], []>} : vector<8x256xbf16>, vector<256x512xbf16>, vector<8x512xf32> -> vector<8x512xf32>
    %116 = arith.addf %115, %5 : vector<8x512xf32>
    %117 = vector.extract_strided_slice %116 {offsets = [0, 0], sizes = [8, 128], strides = [1, 1]} : vector<8x512xf32> to vector<8x128xf32>
    %118 = arith.negf %117 : vector<8x128xf32>
    %119 = math.exp %118 : vector<8x128xf32>
    %cst_45 = arith.constant 1.000000e+00 : f32
    %120 = vector.broadcast %cst_45 : f32 to vector<8x128xf32>
    %121 = arith.addf %120, %119 : vector<8x128xf32>
    %122 = arith.divf %120, %121 : vector<8x128xf32>
    %123 = vector.extract_strided_slice %116 {offsets = [0, 128], sizes = [8, 128], strides = [1, 1]} : vector<8x512xf32> to vector<8x128xf32>
    %124 = arith.negf %123 : vector<8x128xf32>
    %125 = math.exp %124 : vector<8x128xf32>
    %cst_46 = arith.constant 1.000000e+00 : f32
    %126 = vector.broadcast %cst_46 : f32 to vector<8x128xf32>
    %127 = arith.addf %126, %125 : vector<8x128xf32>
    %128 = arith.divf %126, %127 : vector<8x128xf32>
    %129 = vector.extract_strided_slice %116 {offsets = [0, 256], sizes = [8, 128], strides = [1, 1]} : vector<8x512xf32> to vector<8x128xf32>
    %130 = math.tanh %129 : vector<8x128xf32>
    %131 = vector.extract_strided_slice %116 {offsets = [0, 384], sizes = [8, 128], strides = [1, 1]} : vector<8x512xf32> to vector<8x128xf32>
    %132 = arith.negf %131 : vector<8x128xf32>
    %133 = math.exp %132 : vector<8x128xf32>
    %cst_47 = arith.constant 1.000000e+00 : f32
    %134 = vector.broadcast %cst_47 : f32 to vector<8x128xf32>
    %135 = arith.addf %134, %133 : vector<8x128xf32>
    %136 = arith.divf %134, %135 : vector<8x128xf32>
    %137 = arith.mulf %128, %71 : vector<8x128xf32>
    %138 = arith.mulf %122, %130 : vector<8x128xf32>
    %139 = arith.addf %137, %138 : vector<8x128xf32>
    %140 = math.tanh %139 : vector<8x128xf32>
    %141 = arith.mulf %136, %140 : vector<8x128xf32>
    %c16 = arith.constant 16 : index
    %c0_48 = arith.constant 0 : index
    %142 = vector.load %arg11[%c16, %c0_48] : memref<64x512xf32, #tpu.memory_space<vmem>>, vector<8x512xf32>
    %143 = vector.extract_strided_slice %114 {offsets = [0, 0], sizes = [8, 128], strides = [1, 1]} : vector<8x256xbf16> to vector<8x128xbf16>
    %cst_49 = arith.constant dense<0.000000e+00> : vector<8x512xf32>
    %144 = tpu.matmul %143, %1, %cst_49 {dimension_numbers = #tpu.dot_dimension_numbers<[1], [0], [0], [1], [0, 0, 1, 1], [], []>} : vector<8x128xbf16>, vector<128x512xbf16>, vector<8x512xf32> -> vector<8x512xf32>
    %145 = arith.addf %142, %144 : vector<8x512xf32>
    %146 = vector.extract_strided_slice %145 {offsets = [0, 0], sizes = [8, 128], strides = [1, 1]} : vector<8x512xf32> to vector<8x128xf32>
    %147 = arith.negf %146 : vector<8x128xf32>
    %148 = math.exp %147 : vector<8x128xf32>
    %cst_50 = arith.constant 1.000000e+00 : f32
    %149 = vector.broadcast %cst_50 : f32 to vector<8x128xf32>
    %150 = arith.addf %149, %148 : vector<8x128xf32>
    %151 = arith.divf %149, %150 : vector<8x128xf32>
    %152 = vector.extract_strided_slice %145 {offsets = [0, 128], sizes = [8, 128], strides = [1, 1]} : vector<8x512xf32> to vector<8x128xf32>
    %153 = arith.negf %152 : vector<8x128xf32>
    %154 = math.exp %153 : vector<8x128xf32>
    %cst_51 = arith.constant 1.000000e+00 : f32
    %155 = vector.broadcast %cst_51 : f32 to vector<8x128xf32>
    %156 = arith.addf %155, %154 : vector<8x128xf32>
    %157 = arith.divf %155, %156 : vector<8x128xf32>
    %158 = vector.extract_strided_slice %145 {offsets = [0, 256], sizes = [8, 128], strides = [1, 1]} : vector<8x512xf32> to vector<8x128xf32>
    %159 = math.tanh %158 : vector<8x128xf32>
    %160 = vector.extract_strided_slice %145 {offsets = [0, 384], sizes = [8, 128], strides = [1, 1]} : vector<8x512xf32> to vector<8x128xf32>
    %161 = arith.negf %160 : vector<8x128xf32>
    %162 = math.exp %161 : vector<8x128xf32>
    %cst_52 = arith.constant 1.000000e+00 : f32
    %163 = vector.broadcast %cst_52 : f32 to vector<8x128xf32>
    %164 = arith.addf %163, %162 : vector<8x128xf32>
    %165 = arith.divf %163, %164 : vector<8x128xf32>
    %166 = arith.mulf %157, %100 : vector<8x128xf32>
    %167 = arith.mulf %151, %159 : vector<8x128xf32>
    %168 = arith.addf %166, %167 : vector<8x128xf32>
    %169 = math.tanh %168 : vector<8x128xf32>
    %170 = arith.mulf %165, %169 : vector<8x128xf32>
    %171 = arith.truncf %170 : vector<8x128xf32> to vector<8x128xbf16>
    %c0_53 = arith.constant 0 : index
    %c0_54 = arith.constant 0 : index
    %172 = vector.load %arg12[%c0_53, %c0_54] : memref<8x256xbf16, #tpu.memory_space<vmem>>, vector<8x128xbf16>
    tpu.vector_store %arg12[%c0_53, %c0_54], %171 {strides = array<i32>} : memref<8x256xbf16, #tpu.memory_space<vmem>>, vector<8x128xbf16>,
    %c1_i32_55 = arith.constant 1 : i32
    %173 = vector.broadcast %c1_i32_55 : i32 to vector<8x1xi32>
    %174 = arith.subi %0, %173 : vector<8x1xi32>
    %c1_i32_56 = arith.constant 1 : i32
    %175 = vector.broadcast %c1_i32_56 : i32 to vector<8x1xi32>
    %176 = arith.cmpi eq, %174, %175 : vector<8x1xi32>
    %177 = vector.shape_cast %176 : vector<8x1xi1> to vector<8x1xi1>
    %178 = vector.broadcast %177 : vector<8x1xi1> to vector<8x128xi1>
    %179 = arith.select %178, %141, %111 : vector<8x128xi1>, vector<8x128xf32>
    %180 = arith.truncf %141 : vector<8x128xf32> to vector<8x128xbf16>
    %c0_57 = arith.constant 0 : index
    %c128_58 = arith.constant 128 : index
    %181 = vector.load %arg12[%c0_57, %c128_58] : memref<8x256xbf16, #tpu.memory_space<vmem>>, vector<8x128xbf16>
    tpu.vector_store %arg12[%c0_57, %c128_58], %180 {strides = array<i32>} : memref<8x256xbf16, #tpu.memory_space<vmem>>, vector<8x128xbf16>,
    %c0_59 = arith.constant 0 : index
    %c0_60 = arith.constant 0 : index
    %182 = vector.load %arg12[%c0_59, %c0_60] : memref<8x256xbf16, #tpu.memory_space<vmem>>, vector<8x256xbf16>
    %cst_61 = arith.constant dense<0.000000e+00> : vector<8x512xf32>
    %183 = tpu.matmul %182, %2, %cst_61 {dimension_numbers = #tpu.dot_dimension_numbers<[1], [0], [0], [1], [0, 0, 1, 1], [], []>} : vector<8x256xbf16>, vector<256x512xbf16>, vector<8x512xf32> -> vector<8x512xf32>
    %184 = arith.addf %183, %5 : vector<8x512xf32>
    %185 = vector.extract_strided_slice %184 {offsets = [0, 0], sizes = [8, 128], strides = [1, 1]} : vector<8x512xf32> to vector<8x128xf32>
    %186 = arith.negf %185 : vector<8x128xf32>
    %187 = math.exp %186 : vector<8x128xf32>
    %cst_62 = arith.constant 1.000000e+00 : f32
    %188 = vector.broadcast %cst_62 : f32 to vector<8x128xf32>
    %189 = arith.addf %188, %187 : vector<8x128xf32>
    %190 = arith.divf %188, %189 : vector<8x128xf32>
    %191 = vector.extract_strided_slice %184 {offsets = [0, 128], sizes = [8, 128], strides = [1, 1]} : vector<8x512xf32> to vector<8x128xf32>
    %192 = arith.negf %191 : vector<8x128xf32>
    %193 = math.exp %192 : vector<8x128xf32>
    %cst_63 = arith.constant 1.000000e+00 : f32
    %194 = vector.broadcast %cst_63 : f32 to vector<8x128xf32>
    %195 = arith.addf %194, %193 : vector<8x128xf32>
    %196 = arith.divf %194, %195 : vector<8x128xf32>
    %197 = vector.extract_strided_slice %184 {offsets = [0, 256], sizes = [8, 128], strides = [1, 1]} : vector<8x512xf32> to vector<8x128xf32>
    %198 = math.tanh %197 : vector<8x128xf32>
    %199 = vector.extract_strided_slice %184 {offsets = [0, 384], sizes = [8, 128], strides = [1, 1]} : vector<8x512xf32> to vector<8x128xf32>
    %200 = arith.negf %199 : vector<8x128xf32>
    %201 = math.exp %200 : vector<8x128xf32>
    %cst_64 = arith.constant 1.000000e+00 : f32
    %202 = vector.broadcast %cst_64 : f32 to vector<8x128xf32>
    %203 = arith.addf %202, %201 : vector<8x128xf32>
    %204 = arith.divf %202, %203 : vector<8x128xf32>
    %205 = arith.mulf %196, %139 : vector<8x128xf32>
    %206 = arith.mulf %190, %198 : vector<8x128xf32>
    %207 = arith.addf %205, %206 : vector<8x128xf32>
    %208 = math.tanh %207 : vector<8x128xf32>
    %209 = arith.mulf %204, %208 : vector<8x128xf32>
    %c24 = arith.constant 24 : index
    %c0_65 = arith.constant 0 : index
    %210 = vector.load %arg11[%c24, %c0_65] : memref<64x512xf32, #tpu.memory_space<vmem>>, vector<8x512xf32>
    %211 = vector.extract_strided_slice %182 {offsets = [0, 0], sizes = [8, 128], strides = [1, 1]} : vector<8x256xbf16> to vector<8x128xbf16>
    %cst_66 = arith.constant dense<0.000000e+00> : vector<8x512xf32>
    %212 = tpu.matmul %211, %1, %cst_66 {dimension_numbers = #tpu.dot_dimension_numbers<[1], [0], [0], [1], [0, 0, 1, 1], [], []>} : vector<8x128xbf16>, vector<128x512xbf16>, vector<8x512xf32> -> vector<8x512xf32>
    %213 = arith.addf %210, %212 : vector<8x512xf32>
    %214 = vector.extract_strided_slice %213 {offsets = [0, 0], sizes = [8, 128], strides = [1, 1]} : vector<8x512xf32> to vector<8x128xf32>
    %215 = arith.negf %214 : vector<8x128xf32>
    %216 = math.exp %215 : vector<8x128xf32>
    %cst_67 = arith.constant 1.000000e+00 : f32
    %217 = vector.broadcast %cst_67 : f32 to vector<8x128xf32>
    %218 = arith.addf %217, %216 : vector<8x128xf32>
    %219 = arith.divf %217, %218 : vector<8x128xf32>
    %220 = vector.extract_strided_slice %213 {offsets = [0, 128], sizes = [8, 128], strides = [1, 1]} : vector<8x512xf32> to vector<8x128xf32>
    %221 = arith.negf %220 : vector<8x128xf32>
    %222 = math.exp %221 : vector<8x128xf32>
    %cst_68 = arith.constant 1.000000e+00 : f32
    %223 = vector.broadcast %cst_68 : f32 to vector<8x128xf32>
    %224 = arith.addf %223, %222 : vector<8x128xf32>
    %225 = arith.divf %223, %224 : vector<8x128xf32>
    %226 = vector.extract_strided_slice %213 {offsets = [0, 256], sizes = [8, 128], strides = [1, 1]} : vector<8x512xf32> to vector<8x128xf32>
    %227 = math.tanh %226 : vector<8x128xf32>
    %228 = vector.extract_strided_slice %213 {offsets = [0, 384], sizes = [8, 128], strides = [1, 1]} : vector<8x512xf32> to vector<8x128xf32>
    %229 = arith.negf %228 : vector<8x128xf32>
    %230 = math.exp %229 : vector<8x128xf32>
    %cst_69 = arith.constant 1.000000e+00 : f32
    %231 = vector.broadcast %cst_69 : f32 to vector<8x128xf32>
    %232 = arith.addf %231, %230 : vector<8x128xf32>
    %233 = arith.divf %231, %232 : vector<8x128xf32>
    %234 = arith.mulf %225, %168 : vector<8x128xf32>
    %235 = arith.mulf %219, %227 : vector<8x128xf32>
    %236 = arith.addf %234, %235 : vector<8x128xf32>
    %237 = math.tanh %236 : vector<8x128xf32>
    %238 = arith.mulf %233, %237 : vector<8x128xf32>
    %239 = arith.truncf %238 : vector<8x128xf32> to vector<8x128xbf16>
    %c0_70 = arith.constant 0 : index
    %c0_71 = arith.constant 0 : index
    %240 = vector.load %arg12[%c0_70, %c0_71] : memref<8x256xbf16, #tpu.memory_space<vmem>>, vector<8x128xbf16>
    tpu.vector_store %arg12[%c0_70, %c0_71], %239 {strides = array<i32>} : memref<8x256xbf16, #tpu.memory_space<vmem>>, vector<8x128xbf16>,
    %c1_i32_72 = arith.constant 1 : i32
    %241 = vector.broadcast %c1_i32_72 : i32 to vector<8x1xi32>
    %242 = arith.subi %0, %241 : vector<8x1xi32>
    %c2_i32 = arith.constant 2 : i32
    %243 = vector.broadcast %c2_i32 : i32 to vector<8x1xi32>
    %244 = arith.cmpi eq, %242, %243 : vector<8x1xi32>
    %245 = vector.shape_cast %244 : vector<8x1xi1> to vector<8x1xi1>
    %246 = vector.broadcast %245 : vector<8x1xi1> to vector<8x128xi1>
    %247 = arith.select %246, %209, %179 : vector<8x128xi1>, vector<8x128xf32>
    %248 = arith.truncf %209 : vector<8x128xf32> to vector<8x128xbf16>
    %c0_73 = arith.constant 0 : index
    %c128_74 = arith.constant 128 : index
    %249 = vector.load %arg12[%c0_73, %c128_74] : memref<8x256xbf16, #tpu.memory_space<vmem>>, vector<8x128xbf16>
    tpu.vector_store %arg12[%c0_73, %c128_74], %248 {strides = array<i32>} : memref<8x256xbf16, #tpu.memory_space<vmem>>, vector<8x128xbf16>,
    %c0_75 = arith.constant 0 : index
    %c0_76 = arith.constant 0 : index
    %250 = vector.load %arg12[%c0_75, %c0_76] : memref<8x256xbf16, #tpu.memory_space<vmem>>, vector<8x256xbf16>
    %cst_77 = arith.constant dense<0.000000e+00> : vector<8x512xf32>
    %251 = tpu.matmul %250, %2, %cst_77 {dimension_numbers = #tpu.dot_dimension_numbers<[1], [0], [0], [1], [0, 0, 1, 1], [], []>} : vector<8x256xbf16>, vector<256x512xbf16>, vector<8x512xf32> -> vector<8x512xf32>
    %252 = arith.addf %251, %5 : vector<8x512xf32>
    %253 = vector.extract_strided_slice %252 {offsets = [0, 0], sizes = [8, 128], strides = [1, 1]} : vector<8x512xf32> to vector<8x128xf32>
    %254 = arith.negf %253 : vector<8x128xf32>
    %255 = math.exp %254 : vector<8x128xf32>
    %cst_78 = arith.constant 1.000000e+00 : f32
    %256 = vector.broadcast %cst_78 : f32 to vector<8x128xf32>
    %257 = arith.addf %256, %255 : vector<8x128xf32>
    %258 = arith.divf %256, %257 : vector<8x128xf32>
    %259 = vector.extract_strided_slice %252 {offsets = [0, 128], sizes = [8, 128], strides = [1, 1]} : vector<8x512xf32> to vector<8x128xf32>
    %260 = arith.negf %259 : vector<8x128xf32>
    %261 = math.exp %260 : vector<8x128xf32>
    %cst_79 = arith.constant 1.000000e+00 : f32
    %262 = vector.broadcast %cst_79 : f32 to vector<8x128xf32>
    %263 = arith.addf %262, %261 : vector<8x128xf32>
    %264 = arith.divf %262, %263 : vector<8x128xf32>
    %265 = vector.extract_strided_slice %252 {offsets = [0, 256], sizes = [8, 128], strides = [1, 1]} : vector<8x512xf32> to vector<8x128xf32>
    %266 = math.tanh %265 : vector<8x128xf32>
    %267 = vector.extract_strided_slice %252 {offsets = [0, 384], sizes = [8, 128], strides = [1, 1]} : vector<8x512xf32> to vector<8x128xf32>
    %268 = arith.negf %267 : vector<8x128xf32>
    %269 = math.exp %268 : vector<8x128xf32>
    %cst_80 = arith.constant 1.000000e+00 : f32
    %270 = vector.broadcast %cst_80 : f32 to vector<8x128xf32>
    %271 = arith.addf %270, %269 : vector<8x128xf32>
    %272 = arith.divf %270, %271 : vector<8x128xf32>
    %273 = arith.mulf %264, %207 : vector<8x128xf32>
    %274 = arith.mulf %258, %266 : vector<8x128xf32>
    %275 = arith.addf %273, %274 : vector<8x128xf32>
    %276 = math.tanh %275 : vector<8x128xf32>
    %277 = arith.mulf %272, %276 : vector<8x128xf32>
    %c32 = arith.constant 32 : index
    %c0_81 = arith.constant 0 : index
    %278 = vector.load %arg11[%c32, %c0_81] : memref<64x512xf32, #tpu.memory_space<vmem>>, vector<8x512xf32>
    %279 = vector.extract_strided_slice %250 {offsets = [0, 0], sizes = [8, 128], strides = [1, 1]} : vector<8x256xbf16> to vector<8x128xbf16>
    %cst_82 = arith.constant dense<0.000000e+00> : vector<8x512xf32>
    %280 = tpu.matmul %279, %1, %cst_82 {dimension_numbers = #tpu.dot_dimension_numbers<[1], [0], [0], [1], [0, 0, 1, 1], [], []>} : vector<8x128xbf16>, vector<128x512xbf16>, vector<8x512xf32> -> vector<8x512xf32>
    %281 = arith.addf %278, %280 : vector<8x512xf32>
    %282 = vector.extract_strided_slice %281 {offsets = [0, 0], sizes = [8, 128], strides = [1, 1]} : vector<8x512xf32> to vector<8x128xf32>
    %283 = arith.negf %282 : vector<8x128xf32>
    %284 = math.exp %283 : vector<8x128xf32>
    %cst_83 = arith.constant 1.000000e+00 : f32
    %285 = vector.broadcast %cst_83 : f32 to vector<8x128xf32>
    %286 = arith.addf %285, %284 : vector<8x128xf32>
    %287 = arith.divf %285, %286 : vector<8x128xf32>
    %288 = vector.extract_strided_slice %281 {offsets = [0, 128], sizes = [8, 128], strides = [1, 1]} : vector<8x512xf32> to vector<8x128xf32>
    %289 = arith.negf %288 : vector<8x128xf32>
    %290 = math.exp %289 : vector<8x128xf32>
    %cst_84 = arith.constant 1.000000e+00 : f32
    %291 = vector.broadcast %cst_84 : f32 to vector<8x128xf32>
    %292 = arith.addf %291, %290 : vector<8x128xf32>
    %293 = arith.divf %291, %292 : vector<8x128xf32>
    %294 = vector.extract_strided_slice %281 {offsets = [0, 256], sizes = [8, 128], strides = [1, 1]} : vector<8x512xf32> to vector<8x128xf32>
    %295 = math.tanh %294 : vector<8x128xf32>
    %296 = vector.extract_strided_slice %281 {offsets = [0, 384], sizes = [8, 128], strides = [1, 1]} : vector<8x512xf32> to vector<8x128xf32>
    %297 = arith.negf %296 : vector<8x128xf32>
    %298 = math.exp %297 : vector<8x128xf32>
    %cst_85 = arith.constant 1.000000e+00 : f32
    %299 = vector.broadcast %cst_85 : f32 to vector<8x128xf32>
    %300 = arith.addf %299, %298 : vector<8x128xf32>
    %301 = arith.divf %299, %300 : vector<8x128xf32>
    %302 = arith.mulf %293, %236 : vector<8x128xf32>
    %303 = arith.mulf %287, %295 : vector<8x128xf32>
    %304 = arith.addf %302, %303 : vector<8x128xf32>
    %305 = math.tanh %304 : vector<8x128xf32>
    %306 = arith.mulf %301, %305 : vector<8x128xf32>
    %307 = arith.truncf %306 : vector<8x128xf32> to vector<8x128xbf16>
    %c0_86 = arith.constant 0 : index
    %c0_87 = arith.constant 0 : index
    %308 = vector.load %arg12[%c0_86, %c0_87] : memref<8x256xbf16, #tpu.memory_space<vmem>>, vector<8x128xbf16>
    tpu.vector_store %arg12[%c0_86, %c0_87], %307 {strides = array<i32>} : memref<8x256xbf16, #tpu.memory_space<vmem>>, vector<8x128xbf16>,
    %c1_i32_88 = arith.constant 1 : i32
    %309 = vector.broadcast %c1_i32_88 : i32 to vector<8x1xi32>
    %310 = arith.subi %0, %309 : vector<8x1xi32>
    %c3_i32 = arith.constant 3 : i32
    %311 = vector.broadcast %c3_i32 : i32 to vector<8x1xi32>
    %312 = arith.cmpi eq, %310, %311 : vector<8x1xi32>
    %313 = vector.shape_cast %312 : vector<8x1xi1> to vector<8x1xi1>
    %314 = vector.broadcast %313 : vector<8x1xi1> to vector<8x128xi1>
    %315 = arith.select %314, %277, %247 : vector<8x128xi1>, vector<8x128xf32>
    %316 = arith.truncf %277 : vector<8x128xf32> to vector<8x128xbf16>
    %c0_89 = arith.constant 0 : index
    %c128_90 = arith.constant 128 : index
    %317 = vector.load %arg12[%c0_89, %c128_90] : memref<8x256xbf16, #tpu.memory_space<vmem>>, vector<8x128xbf16>
    tpu.vector_store %arg12[%c0_89, %c128_90], %316 {strides = array<i32>} : memref<8x256xbf16, #tpu.memory_space<vmem>>, vector<8x128xbf16>,
    %c0_91 = arith.constant 0 : index
    %c0_92 = arith.constant 0 : index
    %318 = vector.load %arg12[%c0_91, %c0_92] : memref<8x256xbf16, #tpu.memory_space<vmem>>, vector<8x256xbf16>
    %cst_93 = arith.constant dense<0.000000e+00> : vector<8x512xf32>
    %319 = tpu.matmul %318, %2, %cst_93 {dimension_numbers = #tpu.dot_dimension_numbers<[1], [0], [0], [1], [0, 0, 1, 1], [], []>} : vector<8x256xbf16>, vector<256x512xbf16>, vector<8x512xf32> -> vector<8x512xf32>
    %320 = arith.addf %319, %5 : vector<8x512xf32>
    %321 = vector.extract_strided_slice %320 {offsets = [0, 0], sizes = [8, 128], strides = [1, 1]} : vector<8x512xf32> to vector<8x128xf32>
    %322 = arith.negf %321 : vector<8x128xf32>
    %323 = math.exp %322 : vector<8x128xf32>
    %cst_94 = arith.constant 1.000000e+00 : f32
    %324 = vector.broadcast %cst_94 : f32 to vector<8x128xf32>
    %325 = arith.addf %324, %323 : vector<8x128xf32>
    %326 = arith.divf %324, %325 : vector<8x128xf32>
    %327 = vector.extract_strided_slice %320 {offsets = [0, 128], sizes = [8, 128], strides = [1, 1]} : vector<8x512xf32> to vector<8x128xf32>
    %328 = arith.negf %327 : vector<8x128xf32>
    %329 = math.exp %328 : vector<8x128xf32>
    %cst_95 = arith.constant 1.000000e+00 : f32
    %330 = vector.broadcast %cst_95 : f32 to vector<8x128xf32>
    %331 = arith.addf %330, %329 : vector<8x128xf32>
    %332 = arith.divf %330, %331 : vector<8x128xf32>
    %333 = vector.extract_strided_slice %320 {offsets = [0, 256], sizes = [8, 128], strides = [1, 1]} : vector<8x512xf32> to vector<8x128xf32>
    %334 = math.tanh %333 : vector<8x128xf32>
    %335 = vector.extract_strided_slice %320 {offsets = [0, 384], sizes = [8, 128], strides = [1, 1]} : vector<8x512xf32> to vector<8x128xf32>
    %336 = arith.negf %335 : vector<8x128xf32>
    %337 = math.exp %336 : vector<8x128xf32>
    %cst_96 = arith.constant 1.000000e+00 : f32
    %338 = vector.broadcast %cst_96 : f32 to vector<8x128xf32>
    %339 = arith.addf %338, %337 : vector<8x128xf32>
    %340 = arith.divf %338, %339 : vector<8x128xf32>
    %341 = arith.mulf %332, %275 : vector<8x128xf32>
    %342 = arith.mulf %326, %334 : vector<8x128xf32>
    %343 = arith.addf %341, %342 : vector<8x128xf32>
    %344 = math.tanh %343 : vector<8x128xf32>
    %345 = arith.mulf %340, %344 : vector<8x128xf32>
    %c40 = arith.constant 40 : index
    %c0_97 = arith.constant 0 : index
    %346 = vector.load %arg11[%c40, %c0_97] : memref<64x512xf32, #tpu.memory_space<vmem>>, vector<8x512xf32>
    %347 = vector.extract_strided_slice %318 {offsets = [0, 0], sizes = [8, 128], strides = [1, 1]} : vector<8x256xbf16> to vector<8x128xbf16>
    %cst_98 = arith.constant dense<0.000000e+00> : vector<8x512xf32>
    %348 = tpu.matmul %347, %1, %cst_98 {dimension_numbers = #tpu.dot_dimension_numbers<[1], [0], [0], [1], [0, 0, 1, 1], [], []>} : vector<8x128xbf16>, vector<128x512xbf16>, vector<8x512xf32> -> vector<8x512xf32>
    %349 = arith.addf %346, %348 : vector<8x512xf32>
    %350 = vector.extract_strided_slice %349 {offsets = [0, 0], sizes = [8, 128], strides = [1, 1]} : vector<8x512xf32> to vector<8x128xf32>
    %351 = arith.negf %350 : vector<8x128xf32>
    %352 = math.exp %351 : vector<8x128xf32>
    %cst_99 = arith.constant 1.000000e+00 : f32
    %353 = vector.broadcast %cst_99 : f32 to vector<8x128xf32>
    %354 = arith.addf %353, %352 : vector<8x128xf32>
    %355 = arith.divf %353, %354 : vector<8x128xf32>
    %356 = vector.extract_strided_slice %349 {offsets = [0, 128], sizes = [8, 128], strides = [1, 1]} : vector<8x512xf32> to vector<8x128xf32>
    %357 = arith.negf %356 : vector<8x128xf32>
    %358 = math.exp %357 : vector<8x128xf32>
    %cst_100 = arith.constant 1.000000e+00 : f32
    %359 = vector.broadcast %cst_100 : f32 to vector<8x128xf32>
    %360 = arith.addf %359, %358 : vector<8x128xf32>
    %361 = arith.divf %359, %360 : vector<8x128xf32>
    %362 = vector.extract_strided_slice %349 {offsets = [0, 256], sizes = [8, 128], strides = [1, 1]} : vector<8x512xf32> to vector<8x128xf32>
    %363 = math.tanh %362 : vector<8x128xf32>
    %364 = vector.extract_strided_slice %349 {offsets = [0, 384], sizes = [8, 128], strides = [1, 1]} : vector<8x512xf32> to vector<8x128xf32>
    %365 = arith.negf %364 : vector<8x128xf32>
    %366 = math.exp %365 : vector<8x128xf32>
    %cst_101 = arith.constant 1.000000e+00 : f32
    %367 = vector.broadcast %cst_101 : f32 to vector<8x128xf32>
    %368 = arith.addf %367, %366 : vector<8x128xf32>
    %369 = arith.divf %367, %368 : vector<8x128xf32>
    %370 = arith.mulf %361, %304 : vector<8x128xf32>
    %371 = arith.mulf %355, %363 : vector<8x128xf32>
    %372 = arith.addf %370, %371 : vector<8x128xf32>
    %373 = math.tanh %372 : vector<8x128xf32>
    %374 = arith.mulf %369, %373 : vector<8x128xf32>
    %375 = arith.truncf %374 : vector<8x128xf32> to vector<8x128xbf16>
    %c0_102 = arith.constant 0 : index
    %c0_103 = arith.constant 0 : index
    %376 = vector.load %arg12[%c0_102, %c0_103] : memref<8x256xbf16, #tpu.memory_space<vmem>>, vector<8x128xbf16>
    tpu.vector_store %arg12[%c0_102, %c0_103], %375 {strides = array<i32>} : memref<8x256xbf16, #tpu.memory_space<vmem>>, vector<8x128xbf16>,
    %c1_i32_104 = arith.constant 1 : i32
    %377 = vector.broadcast %c1_i32_104 : i32 to vector<8x1xi32>
    %378 = arith.subi %0, %377 : vector<8x1xi32>
    %c4_i32 = arith.constant 4 : i32
    %379 = vector.broadcast %c4_i32 : i32 to vector<8x1xi32>
    %380 = arith.cmpi eq, %378, %379 : vector<8x1xi32>
    %381 = vector.shape_cast %380 : vector<8x1xi1> to vector<8x1xi1>
    %382 = vector.broadcast %381 : vector<8x1xi1> to vector<8x128xi1>
    %383 = arith.select %382, %345, %315 : vector<8x128xi1>, vector<8x128xf32>
    %384 = arith.truncf %345 : vector<8x128xf32> to vector<8x128xbf16>
    %c0_105 = arith.constant 0 : index
    %c128_106 = arith.constant 128 : index
    %385 = vector.load %arg12[%c0_105, %c128_106] : memref<8x256xbf16, #tpu.memory_space<vmem>>, vector<8x128xbf16>
    tpu.vector_store %arg12[%c0_105, %c128_106], %384 {strides = array<i32>} : memref<8x256xbf16, #tpu.memory_space<vmem>>, vector<8x128xbf16>,
    %c0_107 = arith.constant 0 : index
    %c0_108 = arith.constant 0 : index
    %386 = vector.load %arg12[%c0_107, %c0_108] : memref<8x256xbf16, #tpu.memory_space<vmem>>, vector<8x256xbf16>
    %cst_109 = arith.constant dense<0.000000e+00> : vector<8x512xf32>
    %387 = tpu.matmul %386, %2, %cst_109 {dimension_numbers = #tpu.dot_dimension_numbers<[1], [0], [0], [1], [0, 0, 1, 1], [], []>} : vector<8x256xbf16>, vector<256x512xbf16>, vector<8x512xf32> -> vector<8x512xf32>
    %388 = arith.addf %387, %5 : vector<8x512xf32>
    %389 = vector.extract_strided_slice %388 {offsets = [0, 0], sizes = [8, 128], strides = [1, 1]} : vector<8x512xf32> to vector<8x128xf32>
    %390 = arith.negf %389 : vector<8x128xf32>
    %391 = math.exp %390 : vector<8x128xf32>
    %cst_110 = arith.constant 1.000000e+00 : f32
    %392 = vector.broadcast %cst_110 : f32 to vector<8x128xf32>
    %393 = arith.addf %392, %391 : vector<8x128xf32>
    %394 = arith.divf %392, %393 : vector<8x128xf32>
    %395 = vector.extract_strided_slice %388 {offsets = [0, 128], sizes = [8, 128], strides = [1, 1]} : vector<8x512xf32> to vector<8x128xf32>
    %396 = arith.negf %395 : vector<8x128xf32>
    %397 = math.exp %396 : vector<8x128xf32>
    %cst_111 = arith.constant 1.000000e+00 : f32
    %398 = vector.broadcast %cst_111 : f32 to vector<8x128xf32>
    %399 = arith.addf %398, %397 : vector<8x128xf32>
    %400 = arith.divf %398, %399 : vector<8x128xf32>
    %401 = vector.extract_strided_slice %388 {offsets = [0, 256], sizes = [8, 128], strides = [1, 1]} : vector<8x512xf32> to vector<8x128xf32>
    %402 = math.tanh %401 : vector<8x128xf32>
    %403 = vector.extract_strided_slice %388 {offsets = [0, 384], sizes = [8, 128], strides = [1, 1]} : vector<8x512xf32> to vector<8x128xf32>
    %404 = arith.negf %403 : vector<8x128xf32>
    %405 = math.exp %404 : vector<8x128xf32>
    %cst_112 = arith.constant 1.000000e+00 : f32
    %406 = vector.broadcast %cst_112 : f32 to vector<8x128xf32>
    %407 = arith.addf %406, %405 : vector<8x128xf32>
    %408 = arith.divf %406, %407 : vector<8x128xf32>
    %409 = arith.mulf %400, %343 : vector<8x128xf32>
    %410 = arith.mulf %394, %402 : vector<8x128xf32>
    %411 = arith.addf %409, %410 : vector<8x128xf32>
    %412 = math.tanh %411 : vector<8x128xf32>
    %413 = arith.mulf %408, %412 : vector<8x128xf32>
    %c48 = arith.constant 48 : index
    %c0_113 = arith.constant 0 : index
    %414 = vector.load %arg11[%c48, %c0_113] : memref<64x512xf32, #tpu.memory_space<vmem>>, vector<8x512xf32>
    %415 = vector.extract_strided_slice %386 {offsets = [0, 0], sizes = [8, 128], strides = [1, 1]} : vector<8x256xbf16> to vector<8x128xbf16>
    %cst_114 = arith.constant dense<0.000000e+00> : vector<8x512xf32>
    %416 = tpu.matmul %415, %1, %cst_114 {dimension_numbers = #tpu.dot_dimension_numbers<[1], [0], [0], [1], [0, 0, 1, 1], [], []>} : vector<8x128xbf16>, vector<128x512xbf16>, vector<8x512xf32> -> vector<8x512xf32>
    %417 = arith.addf %414, %416 : vector<8x512xf32>
    %418 = vector.extract_strided_slice %417 {offsets = [0, 0], sizes = [8, 128], strides = [1, 1]} : vector<8x512xf32> to vector<8x128xf32>
    %419 = arith.negf %418 : vector<8x128xf32>
    %420 = math.exp %419 : vector<8x128xf32>
    %cst_115 = arith.constant 1.000000e+00 : f32
    %421 = vector.broadcast %cst_115 : f32 to vector<8x128xf32>
    %422 = arith.addf %421, %420 : vector<8x128xf32>
    %423 = arith.divf %421, %422 : vector<8x128xf32>
    %424 = vector.extract_strided_slice %417 {offsets = [0, 128], sizes = [8, 128], strides = [1, 1]} : vector<8x512xf32> to vector<8x128xf32>
    %425 = arith.negf %424 : vector<8x128xf32>
    %426 = math.exp %425 : vector<8x128xf32>
    %cst_116 = arith.constant 1.000000e+00 : f32
    %427 = vector.broadcast %cst_116 : f32 to vector<8x128xf32>
    %428 = arith.addf %427, %426 : vector<8x128xf32>
    %429 = arith.divf %427, %428 : vector<8x128xf32>
    %430 = vector.extract_strided_slice %417 {offsets = [0, 256], sizes = [8, 128], strides = [1, 1]} : vector<8x512xf32> to vector<8x128xf32>
    %431 = math.tanh %430 : vector<8x128xf32>
    %432 = vector.extract_strided_slice %417 {offsets = [0, 384], sizes = [8, 128], strides = [1, 1]} : vector<8x512xf32> to vector<8x128xf32>
    %433 = arith.negf %432 : vector<8x128xf32>
    %434 = math.exp %433 : vector<8x128xf32>
    %cst_117 = arith.constant 1.000000e+00 : f32
    %435 = vector.broadcast %cst_117 : f32 to vector<8x128xf32>
    %436 = arith.addf %435, %434 : vector<8x128xf32>
    %437 = arith.divf %435, %436 : vector<8x128xf32>
    %438 = arith.mulf %429, %372 : vector<8x128xf32>
    %439 = arith.mulf %423, %431 : vector<8x128xf32>
    %440 = arith.addf %438, %439 : vector<8x128xf32>
    %441 = math.tanh %440 : vector<8x128xf32>
    %442 = arith.mulf %437, %441 : vector<8x128xf32>
    %443 = arith.truncf %442 : vector<8x128xf32> to vector<8x128xbf16>
    %c0_118 = arith.constant 0 : index
    %c0_119 = arith.constant 0 : index
    %444 = vector.load %arg12[%c0_118, %c0_119] : memref<8x256xbf16, #tpu.memory_space<vmem>>, vector<8x128xbf16>
    tpu.vector_store %arg12[%c0_118, %c0_119], %443 {strides = array<i32>} : memref<8x256xbf16, #tpu.memory_space<vmem>>, vector<8x128xbf16>,
    %c1_i32_120 = arith.constant 1 : i32
    %445 = vector.broadcast %c1_i32_120 : i32 to vector<8x1xi32>
    %446 = arith.subi %0, %445 : vector<8x1xi32>
    %c5_i32 = arith.constant 5 : i32
    %447 = vector.broadcast %c5_i32 : i32 to vector<8x1xi32>
    %448 = arith.cmpi eq, %446, %447 : vector<8x1xi32>
    %449 = vector.shape_cast %448 : vector<8x1xi1> to vector<8x1xi1>
    %450 = vector.broadcast %449 : vector<8x1xi1> to vector<8x128xi1>
    %451 = arith.select %450, %413, %383 : vector<8x128xi1>, vector<8x128xf32>
    %452 = arith.truncf %413 : vector<8x128xf32> to vector<8x128xbf16>
    %c0_121 = arith.constant 0 : index
    %c128_122 = arith.constant 128 : index
    %453 = vector.load %arg12[%c0_121, %c128_122] : memref<8x256xbf16, #tpu.memory_space<vmem>>, vector<8x128xbf16>
    tpu.vector_store %arg12[%c0_121, %c128_122], %452 {strides = array<i32>} : memref<8x256xbf16, #tpu.memory_space<vmem>>, vector<8x128xbf16>,
    %c0_123 = arith.constant 0 : index
    %c0_124 = arith.constant 0 : index
    %454 = vector.load %arg12[%c0_123, %c0_124] : memref<8x256xbf16, #tpu.memory_space<vmem>>, vector<8x256xbf16>
    %cst_125 = arith.constant dense<0.000000e+00> : vector<8x512xf32>
    %455 = tpu.matmul %454, %2, %cst_125 {dimension_numbers = #tpu.dot_dimension_numbers<[1], [0], [0], [1], [0, 0, 1, 1], [], []>} : vector<8x256xbf16>, vector<256x512xbf16>, vector<8x512xf32> -> vector<8x512xf32>
    %456 = arith.addf %455, %5 : vector<8x512xf32>
    %457 = vector.extract_strided_slice %456 {offsets = [0, 0], sizes = [8, 128], strides = [1, 1]} : vector<8x512xf32> to vector<8x128xf32>
    %458 = arith.negf %457 : vector<8x128xf32>
    %459 = math.exp %458 : vector<8x128xf32>
    %cst_126 = arith.constant 1.000000e+00 : f32
    %460 = vector.broadcast %cst_126 : f32 to vector<8x128xf32>
    %461 = arith.addf %460, %459 : vector<8x128xf32>
    %462 = arith.divf %460, %461 : vector<8x128xf32>
    %463 = vector.extract_strided_slice %456 {offsets = [0, 128], sizes = [8, 128], strides = [1, 1]} : vector<8x512xf32> to vector<8x128xf32>
    %464 = arith.negf %463 : vector<8x128xf32>
    %465 = math.exp %464 : vector<8x128xf32>
    %cst_127 = arith.constant 1.000000e+00 : f32
    %466 = vector.broadcast %cst_127 : f32 to vector<8x128xf32>
    %467 = arith.addf %466, %465 : vector<8x128xf32>
    %468 = arith.divf %466, %467 : vector<8x128xf32>
    %469 = vector.extract_strided_slice %456 {offsets = [0, 256], sizes = [8, 128], strides = [1, 1]} : vector<8x512xf32> to vector<8x128xf32>
    %470 = math.tanh %469 : vector<8x128xf32>
    %471 = vector.extract_strided_slice %456 {offsets = [0, 384], sizes = [8, 128], strides = [1, 1]} : vector<8x512xf32> to vector<8x128xf32>
    %472 = arith.negf %471 : vector<8x128xf32>
    %473 = math.exp %472 : vector<8x128xf32>
    %cst_128 = arith.constant 1.000000e+00 : f32
    %474 = vector.broadcast %cst_128 : f32 to vector<8x128xf32>
    %475 = arith.addf %474, %473 : vector<8x128xf32>
    %476 = arith.divf %474, %475 : vector<8x128xf32>
    %477 = arith.mulf %468, %411 : vector<8x128xf32>
    %478 = arith.mulf %462, %470 : vector<8x128xf32>
    %479 = arith.addf %477, %478 : vector<8x128xf32>
    %480 = math.tanh %479 : vector<8x128xf32>
    %481 = arith.mulf %476, %480 : vector<8x128xf32>
    %c56 = arith.constant 56 : index
    %c0_129 = arith.constant 0 : index
    %482 = vector.load %arg11[%c56, %c0_129] : memref<64x512xf32, #tpu.memory_space<vmem>>, vector<8x512xf32>
    %483 = vector.extract_strided_slice %454 {offsets = [0, 0], sizes = [8, 128], strides = [1, 1]} : vector<8x256xbf16> to vector<8x128xbf16>
    %cst_130 = arith.constant dense<0.000000e+00> : vector<8x512xf32>
    %484 = tpu.matmul %483, %1, %cst_130 {dimension_numbers = #tpu.dot_dimension_numbers<[1], [0], [0], [1], [0, 0, 1, 1], [], []>} : vector<8x128xbf16>, vector<128x512xbf16>, vector<8x512xf32> -> vector<8x512xf32>
    %485 = arith.addf %482, %484 : vector<8x512xf32>
    %486 = vector.extract_strided_slice %485 {offsets = [0, 0], sizes = [8, 128], strides = [1, 1]} : vector<8x512xf32> to vector<8x128xf32>
    %487 = arith.negf %486 : vector<8x128xf32>
    %488 = math.exp %487 : vector<8x128xf32>
    %cst_131 = arith.constant 1.000000e+00 : f32
    %489 = vector.broadcast %cst_131 : f32 to vector<8x128xf32>
    %490 = arith.addf %489, %488 : vector<8x128xf32>
    %491 = arith.divf %489, %490 : vector<8x128xf32>
    %492 = vector.extract_strided_slice %485 {offsets = [0, 128], sizes = [8, 128], strides = [1, 1]} : vector<8x512xf32> to vector<8x128xf32>
    %493 = arith.negf %492 : vector<8x128xf32>
    %494 = math.exp %493 : vector<8x128xf32>
    %cst_132 = arith.constant 1.000000e+00 : f32
    %495 = vector.broadcast %cst_132 : f32 to vector<8x128xf32>
    %496 = arith.addf %495, %494 : vector<8x128xf32>
    %497 = arith.divf %495, %496 : vector<8x128xf32>
    %498 = vector.extract_strided_slice %485 {offsets = [0, 256], sizes = [8, 128], strides = [1, 1]} : vector<8x512xf32> to vector<8x128xf32>
    %499 = math.tanh %498 : vector<8x128xf32>
    %500 = vector.extract_strided_slice %485 {offsets = [0, 384], sizes = [8, 128], strides = [1, 1]} : vector<8x512xf32> to vector<8x128xf32>
    %501 = arith.negf %500 : vector<8x128xf32>
    %502 = math.exp %501 : vector<8x128xf32>
    %cst_133 = arith.constant 1.000000e+00 : f32
    %503 = vector.broadcast %cst_133 : f32 to vector<8x128xf32>
    %504 = arith.addf %503, %502 : vector<8x128xf32>
    %505 = arith.divf %503, %504 : vector<8x128xf32>
    %506 = arith.mulf %497, %440 : vector<8x128xf32>
    %507 = arith.mulf %491, %499 : vector<8x128xf32>
    %508 = arith.addf %506, %507 : vector<8x128xf32>
    %509 = math.tanh %508 : vector<8x128xf32>
    %510 = arith.mulf %505, %509 : vector<8x128xf32>
    %511 = arith.truncf %510 : vector<8x128xf32> to vector<8x128xbf16>
    %c0_134 = arith.constant 0 : index
    %c0_135 = arith.constant 0 : index
    %512 = vector.load %arg12[%c0_134, %c0_135] : memref<8x256xbf16, #tpu.memory_space<vmem>>, vector<8x128xbf16>
    tpu.vector_store %arg12[%c0_134, %c0_135], %511 {strides = array<i32>} : memref<8x256xbf16, #tpu.memory_space<vmem>>, vector<8x128xbf16>,
    %c1_i32_136 = arith.constant 1 : i32
    %513 = vector.broadcast %c1_i32_136 : i32 to vector<8x1xi32>
    %514 = arith.subi %0, %513 : vector<8x1xi32>
    %c6_i32 = arith.constant 6 : i32
    %515 = vector.broadcast %c6_i32 : i32 to vector<8x1xi32>
    %516 = arith.cmpi eq, %514, %515 : vector<8x1xi32>
    %517 = vector.shape_cast %516 : vector<8x1xi1> to vector<8x1xi1>
    %518 = vector.broadcast %517 : vector<8x1xi1> to vector<8x128xi1>
    %519 = arith.select %518, %481, %451 : vector<8x128xi1>, vector<8x128xf32>
    %520 = arith.truncf %481 : vector<8x128xf32> to vector<8x128xbf16>
    %c0_137 = arith.constant 0 : index
    %c128_138 = arith.constant 128 : index
    %521 = vector.load %arg12[%c0_137, %c128_138] : memref<8x256xbf16, #tpu.memory_space<vmem>>, vector<8x128xbf16>
    tpu.vector_store %arg12[%c0_137, %c128_138], %520 {strides = array<i32>} : memref<8x256xbf16, #tpu.memory_space<vmem>>, vector<8x128xbf16>,
    %c0_139 = arith.constant 0 : index
    %c0_140 = arith.constant 0 : index
    %522 = vector.load %arg12[%c0_139, %c0_140] : memref<8x256xbf16, #tpu.memory_space<vmem>>, vector<8x256xbf16>
    %cst_141 = arith.constant dense<0.000000e+00> : vector<8x512xf32>
    %523 = tpu.matmul %522, %2, %cst_141 {dimension_numbers = #tpu.dot_dimension_numbers<[1], [0], [0], [1], [0, 0, 1, 1], [], []>} : vector<8x256xbf16>, vector<256x512xbf16>, vector<8x512xf32> -> vector<8x512xf32>
    %524 = arith.addf %523, %5 : vector<8x512xf32>
    %525 = vector.extract_strided_slice %524 {offsets = [0, 0], sizes = [8, 128], strides = [1, 1]} : vector<8x512xf32> to vector<8x128xf32>
    %526 = arith.negf %525 : vector<8x128xf32>
    %527 = math.exp %526 : vector<8x128xf32>
    %cst_142 = arith.constant 1.000000e+00 : f32
    %528 = vector.broadcast %cst_142 : f32 to vector<8x128xf32>
    %529 = arith.addf %528, %527 : vector<8x128xf32>
    %530 = arith.divf %528, %529 : vector<8x128xf32>
    %531 = vector.extract_strided_slice %524 {offsets = [0, 128], sizes = [8, 128], strides = [1, 1]} : vector<8x512xf32> to vector<8x128xf32>
    %532 = arith.negf %531 : vector<8x128xf32>
    %533 = math.exp %532 : vector<8x128xf32>
    %cst_143 = arith.constant 1.000000e+00 : f32
    %534 = vector.broadcast %cst_143 : f32 to vector<8x128xf32>
    %535 = arith.addf %534, %533 : vector<8x128xf32>
    %536 = arith.divf %534, %535 : vector<8x128xf32>
    %537 = vector.extract_strided_slice %524 {offsets = [0, 256], sizes = [8, 128], strides = [1, 1]} : vector<8x512xf32> to vector<8x128xf32>
    %538 = math.tanh %537 : vector<8x128xf32>
    %539 = vector.extract_strided_slice %524 {offsets = [0, 384], sizes = [8, 128], strides = [1, 1]} : vector<8x512xf32> to vector<8x128xf32>
    %540 = arith.negf %539 : vector<8x128xf32>
    %541 = math.exp %540 : vector<8x128xf32>
    %cst_144 = arith.constant 1.000000e+00 : f32
    %542 = vector.broadcast %cst_144 : f32 to vector<8x128xf32>
    %543 = arith.addf %542, %541 : vector<8x128xf32>
    %544 = arith.divf %542, %543 : vector<8x128xf32>
    %545 = arith.mulf %536, %479 : vector<8x128xf32>
    %546 = arith.mulf %530, %538 : vector<8x128xf32>
    %547 = arith.addf %545, %546 : vector<8x128xf32>
    %548 = math.tanh %547 : vector<8x128xf32>
    %549 = arith.mulf %544, %548 : vector<8x128xf32>
    %c1_i32_145 = arith.constant 1 : i32
    %550 = vector.broadcast %c1_i32_145 : i32 to vector<8x1xi32>
    %551 = arith.subi %0, %550 : vector<8x1xi32>
    %c7_i32 = arith.constant 7 : i32
    %552 = vector.broadcast %c7_i32 : i32 to vector<8x1xi32>
    %553 = arith.cmpi eq, %551, %552 : vector<8x1xi32>
    %554 = vector.shape_cast %553 : vector<8x1xi1> to vector<8x1xi1>
    %555 = vector.broadcast %554 : vector<8x1xi1> to vector<8x128xi1>
    %556 = arith.select %555, %549, %519 : vector<8x128xi1>, vector<8x128xf32>
    %557 = arith.truncf %549 : vector<8x128xf32> to vector<8x128xbf16>
    %c0_146 = arith.constant 0 : index
    %c128_147 = arith.constant 128 : index
    %558 = vector.load %arg12[%c0_146, %c128_147] : memref<8x256xbf16, #tpu.memory_space<vmem>>, vector<8x128xbf16>
    tpu.vector_store %arg12[%c0_146, %c128_147], %557 {strides = array<i32>} : memref<8x256xbf16, #tpu.memory_space<vmem>>, vector<8x128xbf16>,
    %c0_148 = arith.constant 0 : index
    %c0_149 = arith.constant 0 : index
    %559 = vector.load %arg8[%c0_148, %c0_149] : memref<128x128xf32, #tpu.memory_space<vmem>>, vector<128x128xf32>
    %cst_150 = arith.constant dense<0.000000e+00> : vector<8x128xf32>
    %560 = tpu.matmul %556, %559, %cst_150 {dimension_numbers = #tpu.dot_dimension_numbers<[1], [0], [0], [1], [0, 0, 1, 1], [], []>} : vector<8x128xf32>, vector<128x128xf32>, vector<8x128xf32> -> vector<8x128xf32>
    %c0_151 = arith.constant 0 : index
    %c0_152 = arith.constant 0 : index
    %561 = vector.load %arg9[%c0_151, %c0_152] : memref<1x128xf32, #tpu.memory_space<vmem>>, vector<1x128xf32>
    %562 = vector.broadcast %561 : vector<1x128xf32> to vector<8x128xf32>
    %563 = arith.addf %560, %562 : vector<8x128xf32>
    %c0_153 = arith.constant 0 : index
    %c0_154 = arith.constant 0 : index
    %564 = vector.load %arg10[%c0_153, %c0_154] : memref<8x128xf32, #tpu.memory_space<vmem>>, vector<8x128xf32>
    tpu.vector_store %arg10[%c0_153, %c0_154], %563 {strides = array<i32>} : memref<8x128xf32, #tpu.memory_space<vmem>>, vector<8x128xf32>,
    return
  }
  func.func @transform_0(%arg0: i32) -> (i32, i32) {
    %c0_i32 = arith.constant 0 : i32
    %c0_i32_0 = arith.constant 0 : i32
    %c0_i32_1 = arith.constant 0 : i32
    return %c0_i32, %c0_i32_0 : i32, i32
  }
  func.func @transform_1(%arg0: i32) -> (i32, i32) {
    %c0_i32 = arith.constant 0 : i32
    %c0_i32_0 = arith.constant 0 : i32
    %c0_i32_1 = arith.constant 0 : i32
    return %c0_i32, %c0_i32_0 : i32, i32
  }
  func.func @transform_2(%arg0: i32) -> (i32, i32) {
    %c0_i32 = arith.constant 0 : i32
    %c0_i32_0 = arith.constant 0 : i32
    %c0_i32_1 = arith.constant 0 : i32
    return %c0_i32, %c0_i32_0 : i32, i32
  }
  func.func @transform_3(%arg0: i32) -> (i32, i32) {
    %c0_i32 = arith.constant 0 : i32
    %c0_i32_0 = arith.constant 0 : i32
    %c0_i32_1 = arith.constant 0 : i32
    return %c0_i32, %c0_i32_0 : i32, i32
  }
  func.func @transform_4(%arg0: i32) -> (i32, i32) {
    %c0_i32 = arith.constant 0 : i32
    %c0_i32_0 = arith.constant 0 : i32
    %c0_i32_1 = arith.constant 0 : i32
    return %c0_i32, %c0_i32_0 : i32, i32
  }
  func.func @transform_5(%arg0: i32) -> (i32, i32) {
    %c0_i32 = arith.constant 0 : i32
    %c0_i32_0 = arith.constant 0 : i32
    %c0_i32_1 = arith.constant 0 : i32
    return %c0_i32, %c0_i32_0 : i32, i32
  }
  func.func @transform_6(%arg0: i32) -> (i32, i32) {
    %c0_i32 = arith.constant 0 : i32
    %c0_i32_0 = arith.constant 0 : i32
    %c0_i32_1 = arith.constant 0 : i32
    return %c0_i32, %c0_i32_0 : i32, i32
  }
  func.func @transform_7(%arg0: i32) -> (i32, i32) {
    %c0_i32 = arith.constant 0 : i32
    %c0_i32_0 = arith.constant 0 : i32
    %c0_i32_1 = arith.constant 0 : i32
    return %c0_i32, %c0_i32_0 : i32, i32
  }
  func.func @transform_8(%arg0: i32) -> (i32, i32) {
    %c0_i32 = arith.constant 0 : i32
    %c0_i32_0 = arith.constant 0 : i32
    %c0_i32_1 = arith.constant 0 : i32
    return %c0_i32, %c0_i32_0 : i32, i32
  }
  func.func @transform_9(%arg0: i32) -> (i32, i32) {
    %c0_i32 = arith.constant 0 : i32
    %c0_i32_0 = arith.constant 0 : i32
    %c0_i32_1 = arith.constant 0 : i32
    return %c0_i32, %c0_i32_0 : i32, i32
  }
}

</mosaic_0001>

<llo_original>
// kernel: bilstm_forward.1
$region0: #{bilstm_forward.1}
  #allocation0 [shape = 'u32[]', space=smem, size = 0x4, offset = 0x4, fixed_abs, tag = 'smem constant byte address 0x4 - core index']
  #allocation1 [shape = 'u32[144,128]{1,0:T(1,128)}', space=vmem, size = 0x12000, scoped, tag = 'internal scratch']
  #allocation2 [shape = 'f32[64,512]{1,0:T(8,128)}', space=vmem, size = 0x20000, scoped, tag = 'scratch operand']
  #allocation3 [shape = 'bf16[8,256]{1,0:T(8,128)(2,1)}', space=vmem, size = 0x1000, scoped, tag = 'scratch operand']
  %s0 = inlined_call_operand.vmem [shape: s32[8,1], index: 0, kind: input, shape index: {}]
  %s1 = inlined_call_operand.vmem [shape: bf16[64,16], index: 1, kind: input, shape index: {}]
  %s2 = inlined_call_operand.vmem [shape: bf16[16,512], index: 2, kind: input, shape index: {}]
  %s3 = inlined_call_operand.vmem [shape: bf16[128,512], index: 3, kind: input, shape index: {}]
  %s4 = inlined_call_operand.vmem [shape: f32[1,512], index: 4, kind: input, shape index: {}]
  %s5 = inlined_call_operand.vmem [shape: bf16[256,512], index: 5, kind: input, shape index: {}]
  %s6 = inlined_call_operand.vmem [shape: f32[1,512], index: 6, kind: input, shape index: {}]
  %s7 = inlined_call_operand.vmem [shape: f32[128,128], index: 7, kind: input, shape index: {}]
  %s8 = inlined_call_operand.vmem [shape: f32[1,128], index: 8, kind: input, shape index: {}]
  %s9 = inlined_call_operand.vmem [shape: f32[8,128], index: 9, kind: output, shape index: {}]
  %s10 = sld [smem:[#allocation0]]
  $region46: #{bilstm_forward.1} parent=0
    _
  %s12 = ssub.s32 1, %s10
  %s13 = scalar_select 0, %s12, %s10
  // Predicated region
  $region2: #{bilstm_forward.1} parent=0 // pred_check
    _
  $region3: #{bilstm_forward.1} parent=0 // pred_check_branch
    %15 = sbr.rel (0) target = $region5
  $region4: #{bilstm_forward.1} parent=0 // pred_region
    _
  $region5: #{bilstm_forward.1} parent=0 // pred_fallthru
    _
  // Predicated region
  $region6: #{bilstm_forward.1} parent=0 // pred_check
    _
  $region7: #{bilstm_forward.1} parent=0 // pred_check_branch
    %17 = sbr.rel (0) target = $region9
  $region8: #{bilstm_forward.1} parent=0 // pred_region
    _
  $region9: #{bilstm_forward.1} parent=0 // pred_fallthru
    _
  // Predicated region
  $region10: #{bilstm_forward.1} parent=0 // pred_check
    _
  $region11: #{bilstm_forward.1} parent=0 // pred_check_branch
    %19 = sbr.rel (0) target = $region13
  $region12: #{bilstm_forward.1} parent=0 // pred_region
    _
  $region13: #{bilstm_forward.1} parent=0 // pred_fallthru
    _
  // Predicated region
  $region14: #{bilstm_forward.1} parent=0 // pred_check
    _
  $region15: #{bilstm_forward.1} parent=0 // pred_check_branch
    %21 = sbr.rel (0) target = $region17
  $region16: #{bilstm_forward.1} parent=0 // pred_region
    _
  $region17: #{bilstm_forward.1} parent=0 // pred_fallthru
    _
  // Predicated region
  $region18: #{bilstm_forward.1} parent=0 // pred_check
    _
  $region19: #{bilstm_forward.1} parent=0 // pred_check_branch
    %23 = sbr.rel (0) target = $region21
  $region20: #{bilstm_forward.1} parent=0 // pred_region
    _
  $region21: #{bilstm_forward.1} parent=0 // pred_fallthru
    _
  // Predicated region
  $region22: #{bilstm_forward.1} parent=0 // pred_check
    _
  $region23: #{bilstm_forward.1} parent=0 // pred_check_branch
    %25 = sbr.rel (0) target = $region25
  $region24: #{bilstm_forward.1} parent=0 // pred_region
    _
  $region25: #{bilstm_forward.1} parent=0 // pred_fallthru
    _
  // Predicated region
  $region26: #{bilstm_forward.1} parent=0 // pred_check
    _
  $region27: #{bilstm_forward.1} parent=0 // pred_check_branch
    %27 = sbr.rel (0) target = $region29
  $region28: #{bilstm_forward.1} parent=0 // pred_region
    _
  $region29: #{bilstm_forward.1} parent=0 // pred_fallthru
    _
  // Predicated region
  $region30: #{bilstm_forward.1} parent=0 // pred_check
    _
  $region31: #{bilstm_forward.1} parent=0 // pred_check_branch
    %29 = sbr.rel (0) target = $region33
  $region32: #{bilstm_forward.1} parent=0 // pred_region
    _
  $region33: #{bilstm_forward.1} parent=0 // pred_fallthru
    _
  // Predicated region
  $region34: #{bilstm_forward.1} parent=0 // pred_check
    _
  $region35: #{bilstm_forward.1} parent=0 // pred_check_branch
    %31 = sbr.rel (0) target = $region37
  $region36: #{bilstm_forward.1} parent=0 // pred_region
    _
  $region37: #{bilstm_forward.1} parent=0 // pred_fallthru
    _
  %v33 = vld [vmem:[%s0] sm:$0xff]
  %v34 = vld [vmem:[%s3] sm:$0xff]
  %v35 = vld [vmem:[%s3 + $0x8] sm:$0xff]
  %v36 = vld [vmem:[%s3 + $0x10] sm:$0xff]
  %v37 = vld [vmem:[%s3 + $0x18] sm:$0xff]
  %v38 = vld [vmem:[%s3 + $0x20] sm:$0xff]
  %v39 = vld [vmem:[%s3 + $0x28] sm:$0xff]
  %v40 = vld [vmem:[%s3 + $0x30] sm:$0xff]
  %v41 = vld [vmem:[%s3 + $0x38] sm:$0xff]
  %v42 = vld [vmem:[%s3 + $0x40] sm:$0xff]
  %v43 = vld [vmem:[%s3 + $0x48] sm:$0xff]
  %v44 = vld [vmem:[%s3 + $0x50] sm:$0xff]
  %v45 = vld [vmem:[%s3 + $0x58] sm:$0xff]
  %v46 = vld [vmem:[%s3 + $0x60] sm:$0xff]
  %v47 = vld [vmem:[%s3 + $0x68] sm:$0xff]
  %v48 = vld [vmem:[%s3 + $0x70] sm:$0xff]
  %v49 = vld [vmem:[%s3 + $0x78] sm:$0xff]
  %v50 = vld [vmem:[%s3 + $0x80] sm:$0xff]
  %v51 = vld [vmem:[%s3 + $0x88] sm:$0xff]
  %v52 = vld [vmem:[%s3 + $0x90] sm:$0xff]
  %v53 = vld [vmem:[%s3 + $0x98] sm:$0xff]
  %v54 = vld [vmem:[%s3 + $0xa0] sm:$0xff]
  %v55 = vld [vmem:[%s3 + $0xa8] sm:$0xff]
  %v56 = vld [vmem:[%s3 + $0xb0] sm:$0xff]
  %v57 = vld [vmem:[%s3 + $0xb8] sm:$0xff]
  %v58 = vld [vmem:[%s3 + $0xc0] sm:$0xff]
  %v59 = vld [vmem:[%s3 + $0xc8] sm:$0xff]
  %v60 = vld [vmem:[%s3 + $0xd0] sm:$0xff]
  %v61 = vld [vmem:[%s3 + $0xd8] sm:$0xff]
  %v62 = vld [vmem:[%s3 + $0xe0] sm:$0xff]
  %v63 = vld [vmem:[%s3 + $0xe8] sm:$0xff]
  %v64 = vld [vmem:[%s3 + $0xf0] sm:$0xff]
  %v65 = vld [vmem:[%s3 + $0xf8] sm:$0xff]
  %v66 = vld [vmem:[%s5] sm:$0xff]
  %v67 = vld [vmem:[%s5 + $0x8] sm:$0xff]
  %v68 = vld [vmem:[%s5 + $0x10] sm:$0xff]
  %v69 = vld [vmem:[%s5 + $0x18] sm:$0xff]
  %v70 = vld [vmem:[%s5 + $0x20] sm:$0xff]
  %v71 = vld [vmem:[%s5 + $0x28] sm:$0xff]
  %v72 = vld [vmem:[%s5 + $0x30] sm:$0xff]
  %v73 = vld [vmem:[%s5 + $0x38] sm:$0xff]
  %v74 = vld [vmem:[%s5 + $0x40] sm:$0xff]
  %v75 = vld [vmem:[%s5 + $0x48] sm:$0xff]
  %v76 = vld [vmem:[%s5 + $0x50] sm:$0xff]
  %v77 = vld [vmem:[%s5 + $0x58] sm:$0xff]
  %v78 = vld [vmem:[%s5 + $0x60] sm:$0xff]
  %v79 = vld [vmem:[%s5 + $0x68] sm:$0xff]
  %v80 = vld [vmem:[%s5 + $0x70] sm:$0xff]
  %v81 = vld [vmem:[%s5 + $0x78] sm:$0xff]
  %v82 = vld [vmem:[%s5 + $0x80] sm:$0xff]
  %v83 = vld [vmem:[%s5 + $0x88] sm:$0xff]
  %v84 = vld [vmem:[%s5 + $0x90] sm:$0xff]
  %v85 = vld [vmem:[%s5 + $0x98] sm:$0xff]
  %v86 = vld [vmem:[%s5 + $0xa0] sm:$0xff]
  %v87 = vld [vmem:[%s5 + $0xa8] sm:$0xff]
  %v88 = vld [vmem:[%s5 + $0xb0] sm:$0xff]
  %v89 = vld [vmem:[%s5 + $0xb8] sm:$0xff]
  %v90 = vld [vmem:[%s5 + $0xc0] sm:$0xff]
  %v91 = vld [vmem:[%s5 + $0xc8] sm:$0xff]
  %v92 = vld [vmem:[%s5 + $0xd0] sm:$0xff]
  %v93 = vld [vmem:[%s5 + $0xd8] sm:$0xff]
  %v94 = vld [vmem:[%s5 + $0xe0] sm:$0xff]
  %v95 = vld [vmem:[%s5 + $0xe8] sm:$0xff]
  %v96 = vld [vmem:[%s5 + $0xf0] sm:$0xff]
  %v97 = vld [vmem:[%s5 + $0xf8] sm:$0xff]
  %v98 = vld [vmem:[%s5 + $0x100] sm:$0xff]
  %v99 = vld [vmem:[%s5 + $0x108] sm:$0xff]
  %v100 = vld [vmem:[%s5 + $0x110] sm:$0xff]
  %v101 = vld [vmem:[%s5 + $0x118] sm:$0xff]
  %v102 = vld [vmem:[%s5 + $0x120] sm:$0xff]
  %v103 = vld [vmem:[%s5 + $0x128] sm:$0xff]
  %v104 = vld [vmem:[%s5 + $0x130] sm:$0xff]
  %v105 = vld [vmem:[%s5 + $0x138] sm:$0xff]
  %v106 = vld [vmem:[%s5 + $0x140] sm:$0xff]
  %v107 = vld [vmem:[%s5 + $0x148] sm:$0xff]
  %v108 = vld [vmem:[%s5 + $0x150] sm:$0xff]
  %v109 = vld [vmem:[%s5 + $0x158] sm:$0xff]
  %v110 = vld [vmem:[%s5 + $0x160] sm:$0xff]
  %v111 = vld [vmem:[%s5 + $0x168] sm:$0xff]
  %v112 = vld [vmem:[%s5 + $0x170] sm:$0xff]
  %v113 = vld [vmem:[%s5 + $0x178] sm:$0xff]
  %v114 = vld [vmem:[%s5 + $0x180] sm:$0xff]
  %v115 = vld [vmem:[%s5 + $0x188] sm:$0xff]
  %v116 = vld [vmem:[%s5 + $0x190] sm:$0xff]
  %v117 = vld [vmem:[%s5 + $0x198] sm:$0xff]
  %v118 = vld [vmem:[%s5 + $0x1a0] sm:$0xff]
  %v119 = vld [vmem:[%s5 + $0x1a8] sm:$0xff]
  %v120 = vld [vmem:[%s5 + $0x1b0] sm:$0xff]
  %v121 = vld [vmem:[%s5 + $0x1b8] sm:$0xff]
  %v122 = vld [vmem:[%s5 + $0x1c0] sm:$0xff]
  %v123 = vld [vmem:[%s5 + $0x1c8] sm:$0xff]
  %v124 = vld [vmem:[%s5 + $0x1d0] sm:$0xff]
  %v125 = vld [vmem:[%s5 + $0x1d8] sm:$0xff]
  %v126 = vld [vmem:[%s5 + $0x1e0] sm:$0xff]
  %v127 = vld [vmem:[%s5 + $0x1e8] sm:$0xff]
  %v128 = vld [vmem:[%s5 + $0x1f0] sm:$0xff]
  %v129 = vld [vmem:[%s5 + $0x1f8] sm:$0xff]
  %v130 = vld [vmem:[%s6] sm:$0xf]
  %v132 = vlaneseq
  %v133 = vshrl.u32 %v132, 7
  %v134 = vsub.s32 0, %v133
  %v135 = vrot.slane %v130, %v134
  %v136 = vlaneseq
  %v137 = vshrl.u32 %v136, 7
  %v138 = vsub.s32 1, %v137
  %v139 = vrot.slane %v130, %v138
  %v140 = vlaneseq
  %v141 = vshrl.u32 %v140, 7
  %v142 = vsub.s32 2, %v141
  %v143 = vrot.slane %v130, %v142
  %v144 = vlaneseq
  %v145 = vshrl.u32 %v144, 7
  %v146 = vsub.s32 3, %v145
  %v147 = vrot.slane %v130, %v146
  %v152 = vld [vmem:[%s1] sm:$0xf]
  %v153 = vld [vmem:[%s1 + $0x4] sm:$0xf]
  %v154 = vld [vmem:[%s1 + $0x8] sm:$0xf]
  %v155 = vld [vmem:[%s1 + $0xc] sm:$0xf]
  %v156 = vld [vmem:[%s1 + $0x10] sm:$0xf]
  %v157 = vld [vmem:[%s1 + $0x14] sm:$0xf]
  %v158 = vld [vmem:[%s1 + $0x18] sm:$0xf]
  %v159 = vld [vmem:[%s1 + $0x1c] sm:$0xf]
  %v160 = vld [vmem:[%s2] sm:$0xff]
  %v161 = vld [vmem:[%s2 + $0x8] sm:$0xff]
  %v162 = vld [vmem:[%s2 + $0x10] sm:$0xff]
  %v163 = vld [vmem:[%s2 + $0x18] sm:$0xff]
  %v164 = vld [vmem:[%s4] sm:$0xf]
  %v166 = vlaneseq
  %v167 = vshrl.u32 %v166, 7
  %v168 = vsub.s32 0, %v167
  %v169 = vrot.slane %v164, %v168
  %v170 = vlaneseq
  %v171 = vshrl.u32 %v170, 7
  %v172 = vsub.s32 1, %v171
  %v173 = vrot.slane %v164, %v172
  %v174 = vlaneseq
  %v175 = vshrl.u32 %v174, 7
  %v176 = vsub.s32 2, %v175
  %v177 = vrot.slane %v164, %v176
  %v178 = vlaneseq
  %v179 = vshrl.u32 %v178, 7
  %v180 = vsub.s32 3, %v179
  %v181 = vrot.slane %v164, %v180
  %v194 = vunpack.c.l.b16 %v152
  %v195 = vunpack.c.l.b16 %v153
  %v196 = vunpack.c.l.b16 %v154
  %v197 = vunpack.c.l.b16 %v155
  %v198 = vunpack.c.l.b16 %v156
  %v199 = vunpack.c.l.b16 %v157
  %v200 = vunpack.c.l.b16 %v158
  %v201 = vunpack.c.l.b16 %v159
  %v202 = vpack.c.b16 %v195, %v194
  %v203 = vpack.c.b16 %v197, %v196
  %v204 = vpack.c.b16 %v199, %v198
  %v205 = vpack.c.b16 %v201, %v200
  %v210 = vunpack.c.l.b16 %v160
  %v211 = vunpack.c.h.b16 %v160
  %v212 = vunpack.c.l.b16 %v161
  %v213 = vunpack.c.h.b16 %v161
  %v214 = vunpack.c.l.b16 %v162
  %v215 = vunpack.c.h.b16 %v162
  %v216 = vunpack.c.l.b16 %v163
  %v217 = vunpack.c.h.b16 %v163
  %v218 = vpack.c.b16 %v214, %v210
  %v219 = vpack.c.b16 %v215, %v211
  %v220 = vpack.c.b16 %v216, %v212
  %v221 = vpack.c.b16 %v217, %v213
  %vm226 = vcmask 130048
  %v228 = vsel %vm226, %v202, 0
  %v231 = vsel %vm226, %v203, 0
  %v234 = vsel %vm226, %v204, 0
  %v237 = vsel %vm226, %v205, 0
  %239 = vmatprep.subr.bf16.mxu0 %v219
  %240 = vmatpush1.bf16.msra.mxu0 %v218
  %241 = vmatprep.subr.bf16.mxu0 0
  %242 = vmatpush1.bf16.msra.mxu0 0
  %243 = vmatprep.subr.bf16.mxu0 0
  %244 = vmatpush1.bf16.msra.mxu0 0
  %245 = vmatprep.subr.bf16.mxu0 0
  %246 = vmatpush1.bf16.msra.mxu0 0
  %247 = vmatprep.subr.bf16.mxu0 0
  %248 = vmatpush1.bf16.msra.mxu0 0
  %249 = vmatprep.subr.bf16.mxu0 0
  %250 = vmatpush1.bf16.msra.mxu0 0
  %251 = vmatprep.subr.bf16.mxu0 0
  %252 = vmatpush1.bf16.msra.mxu0 0
  %253 = vmatprep.subr.bf16.mxu0 0
  %254 = vmatpush1.bf16.msra.mxu0 0
  %255 = vmatprep.subr.bf16.mxu0 0
  %256 = vmatpush1.bf16.msra.mxu0 0
  %257 = vmatprep.subr.bf16.mxu0 0
  %258 = vmatpush1.bf16.msra.mxu0 0
  %259 = vmatprep.subr.bf16.mxu0 0
  %260 = vmatpush1.bf16.msra.mxu0 0
  %261 = vmatprep.subr.bf16.mxu0 0
  %262 = vmatpush1.bf16.msra.mxu0 0
  %263 = vmatprep.subr.bf16.mxu0 0
  %264 = vmatpush1.bf16.msra.mxu0 0
  %265 = vmatprep.subr.bf16.mxu0 0
  %266 = vmatpush1.bf16.msra.mxu0 0
  %267 = vmatprep.subr.bf16.mxu0 0
  %268 = vmatpush1.bf16.msra.mxu0 0
  %269 = vmatprep.subr.bf16.mxu0 0
  %270 = vmatpush1.bf16.msra.mxu0 0
  %271 = vmatprep.mubr.bf16.mxu0 0
  %272 = vmatmul.mubr.bf16.gmra.mrb[0].mxu0 %v228
  %v273 = vpop.f32.mrb[0].mxu0
  %v274 = vadd.f32 %v169, %v273
  %v275 = vpop.f32.mrb[0].mxu0
  %v276 = vadd.f32 %v173, %v275
  %v277 = vpop.f32.mrb[0].mxu0
  %v278 = vadd.f32 %v169, %v277
  %v279 = vpop.f32.mrb[0].mxu0
  %v280 = vadd.f32 %v173, %v279
  %281 = vmatprep.mubr.bf16.mxu0 0
  %282 = vmatmul.mubr.bf16.gmra.mrb[0].mxu0 %v231
  %v283 = vpop.f32.mrb[0].mxu0
  %v284 = vadd.f32 %v169, %v283
  %v285 = vpop.f32.mrb[0].mxu0
  %v286 = vadd.f32 %v173, %v285
  %v287 = vpop.f32.mrb[0].mxu0
  %v288 = vadd.f32 %v169, %v287
  %v289 = vpop.f32.mrb[0].mxu0
  %v290 = vadd.f32 %v173, %v289
  %291 = vmatprep.mubr.bf16.mxu0 0
  %292 = vmatmul.mubr.bf16.gmra.mrb[0].mxu0 %v234
  %v293 = vpop.f32.mrb[0].mxu0
  %v294 = vadd.f32 %v169, %v293
  %v295 = vpop.f32.mrb[0].mxu0
  %v296 = vadd.f32 %v173, %v295
  %v297 = vpop.f32.mrb[0].mxu0
  %v298 = vadd.f32 %v169, %v297
  %v299 = vpop.f32.mrb[0].mxu0
  %v300 = vadd.f32 %v173, %v299
  %301 = vmatprep.mubr.bf16.mxu0 0
  %302 = vmatmul.mubr.bf16.gmra.mrb[0].mxu0 %v237
  %v303 = vpop.f32.mrb[0].mxu0
  %v304 = vadd.f32 %v169, %v303
  %v305 = vpop.f32.mrb[0].mxu0
  %v306 = vadd.f32 %v173, %v305
  %v307 = vpop.f32.mrb[0].mxu0
  %v308 = vadd.f32 %v169, %v307
  %v309 = vpop.f32.mrb[0].mxu0
  %v310 = vadd.f32 %v173, %v309
  %311 = vdwg.mxu0
  %312 = vmatprep.subr.bf16.mxu0 %v221
  %313 = vmatpush1.bf16.msra.mxu0 %v220
  %314 = vmatprep.subr.bf16.mxu0 0
  %315 = vmatpush1.bf16.msra.mxu0 0
  %316 = vmatprep.subr.bf16.mxu0 0
  %317 = vmatpush1.bf16.msra.mxu0 0
  %318 = vmatprep.subr.bf16.mxu0 0
  %319 = vmatpush1.bf16.msra.mxu0 0
  %320 = vmatprep.subr.bf16.mxu0 0
  %321 = vmatpush1.bf16.msra.mxu0 0
  %322 = vmatprep.subr.bf16.mxu0 0
  %323 = vmatpush1.bf16.msra.mxu0 0
  %324 = vmatprep.subr.bf16.mxu0 0
  %325 = vmatpush1.bf16.msra.mxu0 0
  %326 = vmatprep.subr.bf16.mxu0 0
  %327 = vmatpush1.bf16.msra.mxu0 0
  %328 = vmatprep.subr.bf16.mxu0 0
  %329 = vmatpush1.bf16.msra.mxu0 0
  %330 = vmatprep.subr.bf16.mxu0 0
  %331 = vmatpush1.bf16.msra.mxu0 0
  %332 = vmatprep.subr.bf16.mxu0 0
  %333 = vmatpush1.bf16.msra.mxu0 0
  %334 = vmatprep.subr.bf16.mxu0 0
  %335 = vmatpush1.bf16.msra.mxu0 0
  %336 = vmatprep.subr.bf16.mxu0 0
  %337 = vmatpush1.bf16.msra.mxu0 0
  %338 = vmatprep.subr.bf16.mxu0 0
  %339 = vmatpush1.bf16.msra.mxu0 0
  %340 = vmatprep.subr.bf16.mxu0 0
  %341 = vmatpush1.bf16.msra.mxu0 0
  %342 = vmatprep.subr.bf16.mxu0 0
  %343 = vmatpush1.bf16.msra.mxu0 0
  %344 = vmatprep.mubr.bf16.mxu0 0
  %345 = vmatmul.mubr.bf16.gmra.mrb[0].mxu0 %v228
  %v346 = vpop.f32.mrb[0].mxu0
  %v347 = vadd.f32 %v177, %v346
  %v348 = vpop.f32.mrb[0].mxu0
  %v349 = vadd.f32 %v181, %v348
  %v350 = vpop.f32.mrb[0].mxu0
  %v351 = vadd.f32 %v177, %v350
  %v352 = vpop.f32.mrb[0].mxu0
  %v353 = vadd.f32 %v181, %v352
  %354 = vmatprep.mubr.bf16.mxu0 0
  %355 = vmatmul.mubr.bf16.gmra.mrb[0].mxu0 %v231
  %v356 = vpop.f32.mrb[0].mxu0
  %v357 = vadd.f32 %v177, %v356
  %v358 = vpop.f32.mrb[0].mxu0
  %v359 = vadd.f32 %v181, %v358
  %v360 = vpop.f32.mrb[0].mxu0
  %v361 = vadd.f32 %v177, %v360
  %v362 = vpop.f32.mrb[0].mxu0
  %v363 = vadd.f32 %v181, %v362
  %364 = vmatprep.mubr.bf16.mxu0 0
  %365 = vmatmul.mubr.bf16.gmra.mrb[0].mxu0 %v234
  %v366 = vpop.f32.mrb[0].mxu0
  %v367 = vadd.f32 %v177, %v366
  %v368 = vpop.f32.mrb[0].mxu0
  %v369 = vadd.f32 %v181, %v368
  %v370 = vpop.f32.mrb[0].mxu0
  %v371 = vadd.f32 %v177, %v370
  %v372 = vpop.f32.mrb[0].mxu0
  %v373 = vadd.f32 %v181, %v372
  %374 = vmatprep.mubr.bf16.mxu0 0
  %375 = vmatmul.mubr.bf16.gmra.mrb[0].mxu0 %v237
  %v376 = vpop.f32.mrb[0].mxu0
  %v377 = vadd.f32 %v177, %v376
  %v378 = vpop.f32.mrb[0].mxu0
  %v379 = vadd.f32 %v181, %v378
  %v380 = vpop.f32.mrb[0].mxu0
  %v381 = vadd.f32 %v177, %v380
  %v382 = vpop.f32.mrb[0].mxu0
  %v383 = vadd.f32 %v181, %v382
  %384 = vdwg.mxu0
  %385 = vst [vmem:[#allocation2] sm:$0xff] %v274
  %386 = vst [vmem:[#allocation2 + $0x8] sm:$0xff] %v276
  %387 = vst [vmem:[#allocation2 + $0x10] sm:$0xff] %v347
  %388 = vst [vmem:[#allocation2 + $0x18] sm:$0xff] %v349
  %389 = vst [vmem:[#allocation2 + $0x20] sm:$0xff] %v278
  %390 = vst [vmem:[#allocation2 + $0x28] sm:$0xff] %v280
  %391 = vst [vmem:[#allocation2 + $0x30] sm:$0xff] %v351
  %392 = vst [vmem:[#allocation2 + $0x38] sm:$0xff] %v353
  %393 = vst [vmem:[#allocation2 + $0x40] sm:$0xff] %v284
  %394 = vst [vmem:[#allocation2 + $0x48] sm:$0xff] %v286
  %395 = vst [vmem:[#allocation2 + $0x50] sm:$0xff] %v357
  %396 = vst [vmem:[#allocation2 + $0x58] sm:$0xff] %v359
  %397 = vst [vmem:[#allocation2 + $0x60] sm:$0xff] %v288
  %398 = vst [vmem:[#allocation2 + $0x68] sm:$0xff] %v290
  %399 = vst [vmem:[#allocation2 + $0x70] sm:$0xff] %v361
  %400 = vst [vmem:[#allocation2 + $0x78] sm:$0xff] %v363
  %401 = vst [vmem:[#allocation2 + $0x80] sm:$0xff] %v294
  %402 = vst [vmem:[#allocation2 + $0x88] sm:$0xff] %v296
  %403 = vst [vmem:[#allocation2 + $0x90] sm:$0xff] %v367
  %404 = vst [vmem:[#allocation2 + $0x98] sm:$0xff] %v369
  %405 = vst [vmem:[#allocation2 + $0xa0] sm:$0xff] %v298
  %406 = vst [vmem:[#allocation2 + $0xa8] sm:$0xff] %v300
  %407 = vst [vmem:[#allocation2 + $0xb0] sm:$0xff] %v371
  %408 = vst [vmem:[#allocation2 + $0xb8] sm:$0xff] %v373
  %409 = vst [vmem:[#allocation2 + $0xc0] sm:$0xff] %v304
  %410 = vst [vmem:[#allocation2 + $0xc8] sm:$0xff] %v306
  %411 = vst [vmem:[#allocation2 + $0xd0] sm:$0xff] %v377
  %412 = vst [vmem:[#allocation2 + $0xd8] sm:$0xff] %v379
  %413 = vst [vmem:[#allocation2 + $0xe0] sm:$0xff] %v308
  %414 = vst [vmem:[#allocation2 + $0xe8] sm:$0xff] %v310
  %415 = vst [vmem:[#allocation2 + $0xf0] sm:$0xff] %v381
  %416 = vst [vmem:[#allocation2 + $0xf8] sm:$0xff] %v383
  %v417 = vld [vmem:[#allocation2] sm:$0xff]
  %v418 = vld [vmem:[#allocation2 + $0x8] sm:$0xff]
  %v419 = vld [vmem:[#allocation2 + $0x10] sm:$0xff]
  %v420 = vld [vmem:[#allocation2 + $0x18] sm:$0xff]
  %v421 = vxor.u32 %v417, 2147483648
  %v422 = vmul.f32 %v421, 1.442695
  %v423 = vpow.pop %v422
  %v424 = vadd.f32 %v423, 1.0
  %v425 = vrcp.pop %v424
  %v426 = vmul.f32 1.0, %v425
  %v427 = vxor.u32 %v418, 2147483648
  %v428 = vmul.f32 %v427, 1.442695
  %v429 = vpow.pop %v428
  %v430 = vadd.f32 %v429, 1.0
  %v431 = vrcp.pop %v430
  %v432 = vmul.f32 1.0, %v431
  %v433 = vtanh.pop %v419
  %v434 = vxor.u32 %v420, 2147483648
  %v435 = vmul.f32 %v434, 1.442695
  %v436 = vpow.pop %v435
  %v437 = vadd.f32 %v436, 1.0
  %v438 = vrcp.pop %v437
  %v439 = vmul.f32 1.0, %v438
  %v440 = vmul.f32 %v432, 0.0
  %v441 = vmul.f32 %v426, %v433
  %v442 = vadd.f32 %v440, %v441
  %v443 = vtanh.pop %v442
  %v444 = vmul.f32 %v439, %v443
  %v445 = vpack.c.bf16 %v444, %v444
  %446 = vst [vmem:[#allocation3] sm:$0xf] %v445
  %447 = vst [vmem:[#allocation3 + $0x4] sm:$0xf] 0
  %v448 = vld [vmem:[#allocation3] sm:$0xff]
  %v450 = vunpack.c.l.b16 %v448
  %v451 = vunpack.c.h.b16 %v448
  %v452 = vpack.c.b16 %v450, %v450
  %v453 = vpack.c.b16 %v451, %v451
  %v520 = vunpack.c.l.b16 %v66
  %v521 = vunpack.c.h.b16 %v66
  %v522 = vunpack.c.l.b16 %v67
  %v523 = vunpack.c.h.b16 %v67
  %v524 = vunpack.c.l.b16 %v68
  %v525 = vunpack.c.h.b16 %v68
  %v526 = vunpack.c.l.b16 %v69
  %v527 = vunpack.c.h.b16 %v69
  %v528 = vunpack.c.l.b16 %v70
  %v529 = vunpack.c.h.b16 %v70
  %v530 = vunpack.c.l.b16 %v71
  %v531 = vunpack.c.h.b16 %v71
  %v532 = vunpack.c.l.b16 %v72
  %v533 = vunpack.c.h.b16 %v72
  %v534 = vunpack.c.l.b16 %v73
  %v535 = vunpack.c.h.b16 %v73
  %v536 = vunpack.c.l.b16 %v74
  %v537 = vunpack.c.h.b16 %v74
  %v538 = vunpack.c.l.b16 %v75
  %v539 = vunpack.c.h.b16 %v75
  %v540 = vunpack.c.l.b16 %v76
  %v541 = vunpack.c.h.b16 %v76
  %v542 = vunpack.c.l.b16 %v77
  %v543 = vunpack.c.h.b16 %v77
  %v544 = vunpack.c.l.b16 %v78
  %v545 = vunpack.c.h.b16 %v78
  %v546 = vunpack.c.l.b16 %v79
  %v547 = vunpack.c.h.b16 %v79
  %v548 = vunpack.c.l.b16 %v80
  %v549 = vunpack.c.h.b16 %v80
  %v550 = vunpack.c.l.b16 %v81
  %v551 = vunpack.c.h.b16 %v81
  %v552 = vunpack.c.l.b16 %v82
  %v553 = vunpack.c.h.b16 %v82
  %v554 = vunpack.c.l.b16 %v83
  %v555 = vunpack.c.h.b16 %v83
  %v556 = vunpack.c.l.b16 %v84
  %v557 = vunpack.c.h.b16 %v84
  %v558 = vunpack.c.l.b16 %v85
  %v559 = vunpack.c.h.b16 %v85
  %v560 = vunpack.c.l.b16 %v86
  %v561 = vunpack.c.h.b16 %v86
  %v562 = vunpack.c.l.b16 %v87
  %v563 = vunpack.c.h.b16 %v87
  %v564 = vunpack.c.l.b16 %v88
  %v565 = vunpack.c.h.b16 %v88
  %v566 = vunpack.c.l.b16 %v89
  %v567 = vunpack.c.h.b16 %v89
  %v568 = vunpack.c.l.b16 %v90
  %v569 = vunpack.c.h.b16 %v90
  %v570 = vunpack.c.l.b16 %v91
  %v571 = vunpack.c.h.b16 %v91
  %v572 = vunpack.c.l.b16 %v92
  %v573 = vunpack.c.h.b16 %v92
  %v574 = vunpack.c.l.b16 %v93
  %v575 = vunpack.c.h.b16 %v93
  %v576 = vunpack.c.l.b16 %v94
  %v577 = vunpack.c.h.b16 %v94
  %v578 = vunpack.c.l.b16 %v95
  %v579 = vunpack.c.h.b16 %v95
  %v580 = vunpack.c.l.b16 %v96
  %v581 = vunpack.c.h.b16 %v96
  %v582 = vunpack.c.l.b16 %v97
  %v583 = vunpack.c.h.b16 %v97
  %v584 = vunpack.c.l.b16 %v98
  %v585 = vunpack.c.h.b16 %v98
  %v586 = vunpack.c.l.b16 %v99
  %v587 = vunpack.c.h.b16 %v99
  %v588 = vunpack.c.l.b16 %v100
  %v589 = vunpack.c.h.b16 %v100
  %v590 = vunpack.c.l.b16 %v101
  %v591 = vunpack.c.h.b16 %v101
  %v592 = vunpack.c.l.b16 %v102
  %v593 = vunpack.c.h.b16 %v102
  %v594 = vunpack.c.l.b16 %v103
  %v595 = vunpack.c.h.b16 %v103
  %v596 = vunpack.c.l.b16 %v104
  %v597 = vunpack.c.h.b16 %v104
  %v598 = vunpack.c.l.b16 %v105
  %v599 = vunpack.c.h.b16 %v105
  %v600 = vunpack.c.l.b16 %v106
  %v601 = vunpack.c.h.b16 %v106
  %v602 = vunpack.c.l.b16 %v107
  %v603 = vunpack.c.h.b16 %v107
  %v604 = vunpack.c.l.b16 %v108
  %v605 = vunpack.c.h.b16 %v108
  %v606 = vunpack.c.l.b16 %v109
  %v607 = vunpack.c.h.b16 %v109
  %v608 = vunpack.c.l.b16 %v110
  %v609 = vunpack.c.h.b16 %v110
  %v610 = vunpack.c.l.b16 %v111
  %v611 = vunpack.c.h.b16 %v111
  %v612 = vunpack.c.l.b16 %v112
  %v613 = vunpack.c.h.b16 %v112
  %v614 = vunpack.c.l.b16 %v113
  %v615 = vunpack.c.h.b16 %v113
  %v616 = vunpack.c.l.b16 %v114
  %v617 = vunpack.c.h.b16 %v114
  %v618 = vunpack.c.l.b16 %v115
  %v619 = vunpack.c.h.b16 %v115
  %v620 = vunpack.c.l.b16 %v116
  %v621 = vunpack.c.h.b16 %v116
  %v622 = vunpack.c.l.b16 %v117
  %v623 = vunpack.c.h.b16 %v117
  %v624 = vunpack.c.l.b16 %v118
  %v625 = vunpack.c.h.b16 %v118
  %v626 = vunpack.c.l.b16 %v119
  %v627 = vunpack.c.h.b16 %v119
  %v628 = vunpack.c.l.b16 %v120
  %v629 = vunpack.c.h.b16 %v120
  %v630 = vunpack.c.l.b16 %v121
  %v631 = vunpack.c.h.b16 %v121
  %v632 = vunpack.c.l.b16 %v122
  %v633 = vunpack.c.h.b16 %v122
  %v634 = vunpack.c.l.b16 %v123
  %v635 = vunpack.c.h.b16 %v123
  %v636 = vunpack.c.l.b16 %v124
  %v637 = vunpack.c.h.b16 %v124
  %v638 = vunpack.c.l.b16 %v125
  %v639 = vunpack.c.h.b16 %v125
  %v640 = vunpack.c.l.b16 %v126
  %v641 = vunpack.c.h.b16 %v126
  %v642 = vunpack.c.l.b16 %v127
  %v643 = vunpack.c.h.b16 %v127
  %v644 = vunpack.c.l.b16 %v128
  %v645 = vunpack.c.h.b16 %v128
  %v646 = vunpack.c.l.b16 %v129
  %v647 = vunpack.c.h.b16 %v129
  %v648 = vpack.c.b16 %v524, %v520
  %v649 = vpack.c.b16 %v525, %v521
  %v650 = vpack.c.b16 %v526, %v522
  %v651 = vpack.c.b16 %v527, %v523
  %v652 = vpack.c.b16 %v532, %v528
  %v653 = vpack.c.b16 %v533, %v529
  %v654 = vpack.c.b16 %v534, %v530
  %v655 = vpack.c.b16 %v535, %v531
  %v656 = vpack.c.b16 %v540, %v536
  %v657 = vpack.c.b16 %v541, %v537
  %v658 = vpack.c.b16 %v542, %v538
  %v659 = vpack.c.b16 %v543, %v539
  %v660 = vpack.c.b16 %v548, %v544
  %v661 = vpack.c.b16 %v549, %v545
  %v662 = vpack.c.b16 %v550, %v546
  %v663 = vpack.c.b16 %v551, %v547
  %v664 = vpack.c.b16 %v556, %v552
  %v665 = vpack.c.b16 %v557, %v553
  %v666 = vpack.c.b16 %v558, %v554
  %v667 = vpack.c.b16 %v559, %v555
  %v668 = vpack.c.b16 %v564, %v560
  %v669 = vpack.c.b16 %v565, %v561
  %v670 = vpack.c.b16 %v566, %v562
  %v671 = vpack.c.b16 %v567, %v563
  %v672 = vpack.c.b16 %v572, %v568
  %v673 = vpack.c.b16 %v573, %v569
  %v674 = vpack.c.b16 %v574, %v570
  %v675 = vpack.c.b16 %v575, %v571
  %v676 = vpack.c.b16 %v580, %v576
  %v677 = vpack.c.b16 %v581, %v577
  %v678 = vpack.c.b16 %v582, %v578
  %v679 = vpack.c.b16 %v583, %v579
  %v680 = vpack.c.b16 %v588, %v584
  %v681 = vpack.c.b16 %v589, %v585
  %v682 = vpack.c.b16 %v590, %v586
  %v683 = vpack.c.b16 %v591, %v587
  %v684 = vpack.c.b16 %v596, %v592
  %v685 = vpack.c.b16 %v597, %v593
  %v686 = vpack.c.b16 %v598, %v594
  %v687 = vpack.c.b16 %v599, %v595
  %v688 = vpack.c.b16 %v604, %v600
  %v689 = vpack.c.b16 %v605, %v601
  %v690 = vpack.c.b16 %v606, %v602
  %v691 = vpack.c.b16 %v607, %v603
  %v692 = vpack.c.b16 %v612, %v608
  %v693 = vpack.c.b16 %v613, %v609
  %v694 = vpack.c.b16 %v614, %v610
  %v695 = vpack.c.b16 %v615, %v611
  %v696 = vpack.c.b16 %v620, %v616
  %v697 = vpack.c.b16 %v621, %v617
  %v698 = vpack.c.b16 %v622, %v618
  %v699 = vpack.c.b16 %v623, %v619
  %v700 = vpack.c.b16 %v628, %v624
  %v701 = vpack.c.b16 %v629, %v625
  %v702 = vpack.c.b16 %v630, %v626
  %v703 = vpack.c.b16 %v631, %v627
  %v704 = vpack.c.b16 %v636, %v632
  %v705 = vpack.c.b16 %v637, %v633
  %v706 = vpack.c.b16 %v638, %v634
  %v707 = vpack.c.b16 %v639, %v635
  %v708 = vpack.c.b16 %v644, %v640
  %v709 = vpack.c.b16 %v645, %v641
  %v710 = vpack.c.b16 %v646, %v642
  %v711 = vpack.c.b16 %v647, %v643
  %776 = vmatprep.subr.bf16.mxu0 %v649
  %777 = vmatpush1.bf16.msra.mxu0 %v648
  %778 = vmatprep.subr.bf16.mxu0 %v653
  %779 = vmatpush1.bf16.msra.mxu0 %v652
  %780 = vmatprep.subr.bf16.mxu0 %v657
  %781 = vmatpush1.bf16.msra.mxu0 %v656
  %782 = vmatprep.subr.bf16.mxu0 %v661
  %783 = vmatpush1.bf16.msra.mxu0 %v660
  %784 = vmatprep.subr.bf16.mxu0 %v665
  %785 = vmatpush1.bf16.msra.mxu0 %v664
  %786 = vmatprep.subr.bf16.mxu0 %v669
  %787 = vmatpush1.bf16.msra.mxu0 %v668
  %788 = vmatprep.subr.bf16.mxu0 %v673
  %789 = vmatpush1.bf16.msra.mxu0 %v672
  %790 = vmatprep.subr.bf16.mxu0 %v677
  %791 = vmatpush1.bf16.msra.mxu0 %v676
  %792 = vmatprep.subr.bf16.mxu0 %v681
  %793 = vmatpush1.bf16.msra.mxu0 %v680
  %794 = vmatprep.subr.bf16.mxu0 %v685
  %795 = vmatpush1.bf16.msra.mxu0 %v684
  %796 = vmatprep.subr.bf16.mxu0 %v689
  %797 = vmatpush1.bf16.msra.mxu0 %v688
  %798 = vmatprep.subr.bf16.mxu0 %v693
  %799 = vmatpush1.bf16.msra.mxu0 %v692
  %800 = vmatprep.subr.bf16.mxu0 %v697
  %801 = vmatpush1.bf16.msra.mxu0 %v696
  %802 = vmatprep.subr.bf16.mxu0 %v701
  %803 = vmatpush1.bf16.msra.mxu0 %v700
  %804 = vmatprep.subr.bf16.mxu0 %v705
  %805 = vmatpush1.bf16.msra.mxu0 %v704
  %806 = vmatprep.subr.bf16.mxu0 %v709
  %807 = vmatpush1.bf16.msra.mxu0 %v708
  %808 = vmatprep.mubr.bf16.mxu0 %v453
  %809 = vmatmul.mubr.bf16.gmra.mrb[0].mxu0 %v452
  %v810 = vpop.f32.mrb[0].mxu0
  %v811 = vadd.f32 %v135, %v810
  %v812 = vpop.f32.mrb[0].mxu0
  %v813 = vadd.f32 %v139, %v812
  %v814 = vpop.f32.mrb[0].mxu0
  %v815 = vpop.f32.mrb[0].mxu0
  %816 = vdwg.mxu0
  %817 = vmatprep.subr.bf16.mxu0 %v651
  %818 = vmatpush1.bf16.msra.mxu0 %v650
  %819 = vmatprep.subr.bf16.mxu0 %v655
  %820 = vmatpush1.bf16.msra.mxu0 %v654
  %821 = vmatprep.subr.bf16.mxu0 %v659
  %822 = vmatpush1.bf16.msra.mxu0 %v658
  %823 = vmatprep.subr.bf16.mxu0 %v663
  %824 = vmatpush1.bf16.msra.mxu0 %v662
  %825 = vmatprep.subr.bf16.mxu0 %v667
  %826 = vmatpush1.bf16.msra.mxu0 %v666
  %827 = vmatprep.subr.bf16.mxu0 %v671
  %828 = vmatpush1.bf16.msra.mxu0 %v670
  %829 = vmatprep.subr.bf16.mxu0 %v675
  %830 = vmatpush1.bf16.msra.mxu0 %v674
  %831 = vmatprep.subr.bf16.mxu0 %v679
  %832 = vmatpush1.bf16.msra.mxu0 %v678
  %833 = vmatprep.subr.bf16.mxu0 %v683
  %834 = vmatpush1.bf16.msra.mxu0 %v682
  %835 = vmatprep.subr.bf16.mxu0 %v687
  %836 = vmatpush1.bf16.msra.mxu0 %v686
  %837 = vmatprep.subr.bf16.mxu0 %v691
  %838 = vmatpush1.bf16.msra.mxu0 %v690
  %839 = vmatprep.subr.bf16.mxu0 %v695
  %840 = vmatpush1.bf16.msra.mxu0 %v694
  %841 = vmatprep.subr.bf16.mxu0 %v699
  %842 = vmatpush1.bf16.msra.mxu0 %v698
  %843 = vmatprep.subr.bf16.mxu0 %v703
  %844 = vmatpush1.bf16.msra.mxu0 %v702
  %845 = vmatprep.subr.bf16.mxu0 %v707
  %846 = vmatpush1.bf16.msra.mxu0 %v706
  %847 = vmatprep.subr.bf16.mxu0 %v711
  %848 = vmatpush1.bf16.msra.mxu0 %v710
  %849 = vmatprep.mubr.bf16.mxu0 %v453
  %850 = vmatmul.mubr.bf16.gmra.mrb[0].mxu0 %v452
  %v851 = vpop.f32.mrb[0].mxu0
  %v852 = vadd.f32 %v143, %v851
  %v853 = vpop.f32.mrb[0].mxu0
  %v854 = vadd.f32 %v147, %v853
  %v855 = vpop.f32.mrb[0].mxu0
  %v856 = vpop.f32.mrb[0].mxu0
  %857 = vdwg.mxu0
  %v858 = vxor.u32 %v811, 2147483648
  %v859 = vmul.f32 %v858, 1.442695
  %v860 = vpow.pop %v859
  %v861 = vadd.f32 %v860, 1.0
  %v862 = vrcp.pop %v861
  %v863 = vmul.f32 1.0, %v862
  %v864 = vxor.u32 %v813, 2147483648
  %v865 = vmul.f32 %v864, 1.442695
  %v866 = vpow.pop %v865
  %v867 = vadd.f32 %v866, 1.0
  %v868 = vrcp.pop %v867
  %v869 = vmul.f32 1.0, %v868
  %v870 = vtanh.pop %v852
  %v871 = vxor.u32 %v854, 2147483648
  %v872 = vmul.f32 %v871, 1.442695
  %v873 = vpow.pop %v872
  %v874 = vadd.f32 %v873, 1.0
  %v875 = vrcp.pop %v874
  %v876 = vmul.f32 1.0, %v875
  %v877 = vmul.f32 %v869, 0.0
  %v878 = vmul.f32 %v863, %v870
  %v879 = vadd.f32 %v877, %v878
  %v880 = vtanh.pop %v879
  %v881 = vmul.f32 %v876, %v880
  %v882 = vld [vmem:[#allocation2 + $0x20] sm:$0xff]
  %v883 = vld [vmem:[#allocation2 + $0x28] sm:$0xff]
  %v884 = vld [vmem:[#allocation2 + $0x30] sm:$0xff]
  %v885 = vld [vmem:[#allocation2 + $0x38] sm:$0xff]
  %v918 = vunpack.c.l.b16 %v34
  %v919 = vunpack.c.h.b16 %v34
  %v920 = vunpack.c.l.b16 %v35
  %v921 = vunpack.c.h.b16 %v35
  %v922 = vunpack.c.l.b16 %v36
  %v923 = vunpack.c.h.b16 %v36
  %v924 = vunpack.c.l.b16 %v37
  %v925 = vunpack.c.h.b16 %v37
  %v926 = vunpack.c.l.b16 %v38
  %v927 = vunpack.c.h.b16 %v38
  %v928 = vunpack.c.l.b16 %v39
  %v929 = vunpack.c.h.b16 %v39
  %v930 = vunpack.c.l.b16 %v40
  %v931 = vunpack.c.h.b16 %v40
  %v932 = vunpack.c.l.b16 %v41
  %v933 = vunpack.c.h.b16 %v41
  %v934 = vunpack.c.l.b16 %v42
  %v935 = vunpack.c.h.b16 %v42
  %v936 = vunpack.c.l.b16 %v43
  %v937 = vunpack.c.h.b16 %v43
  %v938 = vunpack.c.l.b16 %v44
  %v939 = vunpack.c.h.b16 %v44
  %v940 = vunpack.c.l.b16 %v45
  %v941 = vunpack.c.h.b16 %v45
  %v942 = vunpack.c.l.b16 %v46
  %v943 = vunpack.c.h.b16 %v46
  %v944 = vunpack.c.l.b16 %v47
  %v945 = vunpack.c.h.b16 %v47
  %v946 = vunpack.c.l.b16 %v48
  %v947 = vunpack.c.h.b16 %v48
  %v948 = vunpack.c.l.b16 %v49
  %v949 = vunpack.c.h.b16 %v49
  %v950 = vunpack.c.l.b16 %v50
  %v951 = vunpack.c.h.b16 %v50
  %v952 = vunpack.c.l.b16 %v51
  %v953 = vunpack.c.h.b16 %v51
  %v954 = vunpack.c.l.b16 %v52
  %v955 = vunpack.c.h.b16 %v52
  %v956 = vunpack.c.l.b16 %v53
  %v957 = vunpack.c.h.b16 %v53
  %v958 = vunpack.c.l.b16 %v54
  %v959 = vunpack.c.h.b16 %v54
  %v960 = vunpack.c.l.b16 %v55
  %v961 = vunpack.c.h.b16 %v55
  %v962 = vunpack.c.l.b16 %v56
  %v963 = vunpack.c.h.b16 %v56
  %v964 = vunpack.c.l.b16 %v57
  %v965 = vunpack.c.h.b16 %v57
  %v966 = vunpack.c.l.b16 %v58
  %v967 = vunpack.c.h.b16 %v58
  %v968 = vunpack.c.l.b16 %v59
  %v969 = vunpack.c.h.b16 %v59
  %v970 = vunpack.c.l.b16 %v60
  %v971 = vunpack.c.h.b16 %v60
  %v972 = vunpack.c.l.b16 %v61
  %v973 = vunpack.c.h.b16 %v61
  %v974 = vunpack.c.l.b16 %v62
  %v975 = vunpack.c.h.b16 %v62
  %v976 = vunpack.c.l.b16 %v63
  %v977 = vunpack.c.h.b16 %v63
  %v978 = vunpack.c.l.b16 %v64
  %v979 = vunpack.c.h.b16 %v64
  %v980 = vunpack.c.l.b16 %v65
  %v981 = vunpack.c.h.b16 %v65
  %v982 = vpack.c.b16 %v922, %v918
  %v983 = vpack.c.b16 %v923, %v919
  %v984 = vpack.c.b16 %v924, %v920
  %v985 = vpack.c.b16 %v925, %v921
  %v986 = vpack.c.b16 %v930, %v926
  %v987 = vpack.c.b16 %v931, %v927
  %v988 = vpack.c.b16 %v932, %v928
  %v989 = vpack.c.b16 %v933, %v929
  %v990 = vpack.c.b16 %v938, %v934
  %v991 = vpack.c.b16 %v939, %v935
  %v992 = vpack.c.b16 %v940, %v936
  %v993 = vpack.c.b16 %v941, %v937
  %v994 = vpack.c.b16 %v946, %v942
  %v995 = vpack.c.b16 %v947, %v943
  %v996 = vpack.c.b16 %v948, %v944
  %v997 = vpack.c.b16 %v949, %v945
  %v998 = vpack.c.b16 %v954, %v950
  %v999 = vpack.c.b16 %v955, %v951
  %v1000 = vpack.c.b16 %v956, %v952
  %v1001 = vpack.c.b16 %v957, %v953
  %v1002 = vpack.c.b16 %v962, %v958
  %v1003 = vpack.c.b16 %v963, %v959
  %v1004 = vpack.c.b16 %v964, %v960
  %v1005 = vpack.c.b16 %v965, %v961
  %v1006 = vpack.c.b16 %v970, %v966
  %v1007 = vpack.c.b16 %v971, %v967
  %v1008 = vpack.c.b16 %v972, %v968
  %v1009 = vpack.c.b16 %v973, %v969
  %v1010 = vpack.c.b16 %v978, %v974
  %v1011 = vpack.c.b16 %v979, %v975
  %v1012 = vpack.c.b16 %v980, %v976
  %v1013 = vpack.c.b16 %v981, %v977
  %1046 = vmatprep.subr.bf16.mxu0 %v983
  %1047 = vmatpush1.bf16.msra.mxu0 %v982
  %1048 = vmatprep.subr.bf16.mxu0 %v987
  %1049 = vmatpush1.bf16.msra.mxu0 %v986
  %1050 = vmatprep.subr.bf16.mxu0 %v991
  %1051 = vmatpush1.bf16.msra.mxu0 %v990
  %1052 = vmatprep.subr.bf16.mxu0 %v995
  %1053 = vmatpush1.bf16.msra.mxu0 %v994
  %1054 = vmatprep.subr.bf16.mxu0 %v999
  %1055 = vmatpush1.bf16.msra.mxu0 %v998
  %1056 = vmatprep.subr.bf16.mxu0 %v1003
  %1057 = vmatpush1.bf16.msra.mxu0 %v1002
  %1058 = vmatprep.subr.bf16.mxu0 %v1007
  %1059 = vmatpush1.bf16.msra.mxu0 %v1006
  %1060 = vmatprep.subr.bf16.mxu0 %v1011
  %1061 = vmatpush1.bf16.msra.mxu0 %v1010
  %1062 = vmatprep.subr.bf16.mxu0 0
  %1063 = vmatpush1.bf16.msra.mxu0 0
  %1064 = vmatprep.subr.bf16.mxu0 0
  %1065 = vmatpush1.bf16.msra.mxu0 0
  %1066 = vmatprep.subr.bf16.mxu0 0
  %1067 = vmatpush1.bf16.msra.mxu0 0
  %1068 = vmatprep.subr.bf16.mxu0 0
  %1069 = vmatpush1.bf16.msra.mxu0 0
  %1070 = vmatprep.subr.bf16.mxu0 0
  %1071 = vmatpush1.bf16.msra.mxu0 0
  %1072 = vmatprep.subr.bf16.mxu0 0
  %1073 = vmatpush1.bf16.msra.mxu0 0
  %1074 = vmatprep.subr.bf16.mxu0 0
  %1075 = vmatpush1.bf16.msra.mxu0 0
  %1076 = vmatprep.subr.bf16.mxu0 0
  %1077 = vmatpush1.bf16.msra.mxu0 0
  %1078 = vmatprep.mubr.bf16.mxu0 0
  %1079 = vmatmul.mubr.bf16.gmra.mrb[0].mxu0 %v448
  %v1080 = vpop.f32.mrb[0].mxu0
  %v1081 = vadd.f32 0.0, %v1080
  %v1082 = vpop.f32.mrb[0].mxu0
  %v1083 = vadd.f32 0.0, %v1082
  %v1084 = vpop.f32.mrb[0].mxu0
  %v1085 = vpop.f32.mrb[0].mxu0
  %1086 = vdwg.mxu0
  %1087 = vmatprep.subr.bf16.mxu0 %v985
  %1088 = vmatpush1.bf16.msra.mxu0 %v984
  %1089 = vmatprep.subr.bf16.mxu0 %v989
  %1090 = vmatpush1.bf16.msra.mxu0 %v988
  %1091 = vmatprep.subr.bf16.mxu0 %v993
  %1092 = vmatpush1.bf16.msra.mxu0 %v992
  %1093 = vmatprep.subr.bf16.mxu0 %v997
  %1094 = vmatpush1.bf16.msra.mxu0 %v996
  %1095 = vmatprep.subr.bf16.mxu0 %v1001
  %1096 = vmatpush1.bf16.msra.mxu0 %v1000
  %1097 = vmatprep.subr.bf16.mxu0 %v1005
  %1098 = vmatpush1.bf16.msra.mxu0 %v1004
  %1099 = vmatprep.subr.bf16.mxu0 %v1009
  %1100 = vmatpush1.bf16.msra.mxu0 %v1008
  %1101 = vmatprep.subr.bf16.mxu0 %v1013
  %1102 = vmatpush1.bf16.msra.mxu0 %v1012
  %1103 = vmatprep.subr.bf16.mxu0 0
  %1104 = vmatpush1.bf16.msra.mxu0 0
  %1105 = vmatprep.subr.bf16.mxu0 0
  %1106 = vmatpush1.bf16.msra.mxu0 0
  %1107 = vmatprep.subr.bf16.mxu0 0
  %1108 = vmatpush1.bf16.msra.mxu0 0
  %1109 = vmatprep.subr.bf16.mxu0 0
  %1110 = vmatpush1.bf16.msra.mxu0 0
  %1111 = vmatprep.subr.bf16.mxu0 0
  %1112 = vmatpush1.bf16.msra.mxu0 0
  %1113 = vmatprep.subr.bf16.mxu0 0
  %1114 = vmatpush1.bf16.msra.mxu0 0
  %1115 = vmatprep.subr.bf16.mxu0 0
  %1116 = vmatpush1.bf16.msra.mxu0 0
  %1117 = vmatprep.subr.bf16.mxu0 0
  %1118 = vmatpush1.bf16.msra.mxu0 0
  %1119 = vmatprep.mubr.bf16.mxu0 0
  %1120 = vmatmul.mubr.bf16.gmra.mrb[0].mxu0 %v448
  %v1121 = vpop.f32.mrb[0].mxu0
  %v1122 = vadd.f32 0.0, %v1121
  %v1123 = vpop.f32.mrb[0].mxu0
  %v1124 = vadd.f32 0.0, %v1123
  %v1125 = vpop.f32.mrb[0].mxu0
  %v1126 = vpop.f32.mrb[0].mxu0
  %1127 = vdwg.mxu0
  %v1128 = vadd.f32 %v882, %v1081
  %v1129 = vadd.f32 %v883, %v1083
  %v1130 = vadd.f32 %v884, %v1122
  %v1131 = vadd.f32 %v885, %v1124
  %v1132 = vxor.u32 %v1128, 2147483648
  %v1133 = vmul.f32 %v1132, 1.442695
  %v1134 = vpow.pop %v1133
  %v1135 = vadd.f32 %v1134, 1.0
  %v1136 = vrcp.pop %v1135
  %v1137 = vmul.f32 1.0, %v1136
  %v1138 = vxor.u32 %v1129, 2147483648
  %v1139 = vmul.f32 %v1138, 1.442695
  %v1140 = vpow.pop %v1139
  %v1141 = vadd.f32 %v1140, 1.0
  %v1142 = vrcp.pop %v1141
  %v1143 = vmul.f32 1.0, %v1142
  %v1144 = vtanh.pop %v1130
  %v1145 = vxor.u32 %v1131, 2147483648
  %v1146 = vmul.f32 %v1145, 1.442695
  %v1147 = vpow.pop %v1146
  %v1148 = vadd.f32 %v1147, 1.0
  %v1149 = vrcp.pop %v1148
  %v1150 = vmul.f32 1.0, %v1149
  %v1151 = vmul.f32 %v1143, %v442
  %v1152 = vmul.f32 %v1137, %v1144
  %v1153 = vadd.f32 %v1151, %v1152
  %v1154 = vtanh.pop %v1153
  %v1155 = vmul.f32 %v1150, %v1154
  %v1156 = vpack.c.bf16 %v1155, %v1155
  %1157 = vst [vmem:[#allocation3] sm:$0xf] %v1156
  %v1158 = vsub.s32 %v33, 1
  %vm1159 = vcmp.eq.s32.totalorder %v1158, 0
  %v1160 = vsel %vm1159, 1, 0
  %1161 = vset.pattern.permute.xlu0 0
  %1162 = vperm.xlu0 %1161, %v1160
  %v1163 = vpop.permute.xlu0 %1162
  %vm1164 = vcmp.eq.s32.totalorder %v1163, 1
  %v1165 = vsel %vm1164, %v881, 0.0
  %v1166 = vpack.c.bf16 %v881, %v881
  %1167 = vst [vmem:[#allocation3 + $0x4] sm:$0xf] %v1166
  %v1168 = vld [vmem:[#allocation3] sm:$0xff]
  %v1170 = vunpack.c.l.b16 %v1168
  %v1171 = vunpack.c.h.b16 %v1168
  %v1172 = vpack.c.b16 %v1170, %v1170
  %v1173 = vpack.c.b16 %v1171, %v1171
  %1176 = vmatprep.subr.bf16.mxu0 %v649
  %1177 = vmatpush1.bf16.msra.mxu0 %v648
  %1178 = vmatprep.subr.bf16.mxu0 %v653
  %1179 = vmatpush1.bf16.msra.mxu0 %v652
  %1180 = vmatprep.subr.bf16.mxu0 %v657
  %1181 = vmatpush1.bf16.msra.mxu0 %v656
  %1182 = vmatprep.subr.bf16.mxu0 %v661
  %1183 = vmatpush1.bf16.msra.mxu0 %v660
  %1184 = vmatprep.subr.bf16.mxu0 %v665
  %1185 = vmatpush1.bf16.msra.mxu0 %v664
  %1186 = vmatprep.subr.bf16.mxu0 %v669
  %1187 = vmatpush1.bf16.msra.mxu0 %v668
  %1188 = vmatprep.subr.bf16.mxu0 %v673
  %1189 = vmatpush1.bf16.msra.mxu0 %v672
  %1190 = vmatprep.subr.bf16.mxu0 %v677
  %1191 = vmatpush1.bf16.msra.mxu0 %v676
  %1192 = vmatprep.subr.bf16.mxu0 %v681
  %1193 = vmatpush1.bf16.msra.mxu0 %v680
  %1194 = vmatprep.subr.bf16.mxu0 %v685
  %1195 = vmatpush1.bf16.msra.mxu0 %v684
  %1196 = vmatprep.subr.bf16.mxu0 %v689
  %1197 = vmatpush1.bf16.msra.mxu0 %v688
  %1198 = vmatprep.subr.bf16.mxu0 %v693
  %1199 = vmatpush1.bf16.msra.mxu0 %v692
  %1200 = vmatprep.subr.bf16.mxu0 %v697
  %1201 = vmatpush1.bf16.msra.mxu0 %v696
  %1202 = vmatprep.subr.bf16.mxu0 %v701
  %1203 = vmatpush1.bf16.msra.mxu0 %v700
  %1204 = vmatprep.subr.bf16.mxu0 %v705
  %1205 = vmatpush1.bf16.msra.mxu0 %v704
  %1206 = vmatprep.subr.bf16.mxu0 %v709
  %1207 = vmatpush1.bf16.msra.mxu0 %v708
  %1208 = vmatprep.mubr.bf16.mxu0 %v1173
  %1209 = vmatmul.mubr.bf16.gmra.mrb[0].mxu0 %v1172
  %v1210 = vpop.f32.mrb[0].mxu0
  %v1211 = vadd.f32 %v135, %v1210
  %v1212 = vpop.f32.mrb[0].mxu0
  %v1213 = vadd.f32 %v139, %v1212
  %v1214 = vpop.f32.mrb[0].mxu0
  %v1215 = vpop.f32.mrb[0].mxu0
  %1216 = vdwg.mxu0
  %1217 = vmatprep.subr.bf16.mxu0 %v651
  %1218 = vmatpush1.bf16.msra.mxu0 %v650
  %1219 = vmatprep.subr.bf16.mxu0 %v655
  %1220 = vmatpush1.bf16.msra.mxu0 %v654
  %1221 = vmatprep.subr.bf16.mxu0 %v659
  %1222 = vmatpush1.bf16.msra.mxu0 %v658
  %1223 = vmatprep.subr.bf16.mxu0 %v663
  %1224 = vmatpush1.bf16.msra.mxu0 %v662
  %1225 = vmatprep.subr.bf16.mxu0 %v667
  %1226 = vmatpush1.bf16.msra.mxu0 %v666
  %1227 = vmatprep.subr.bf16.mxu0 %v671
  %1228 = vmatpush1.bf16.msra.mxu0 %v670
  %1229 = vmatprep.subr.bf16.mxu0 %v675
  %1230 = vmatpush1.bf16.msra.mxu0 %v674
  %1231 = vmatprep.subr.bf16.mxu0 %v679
  %1232 = vmatpush1.bf16.msra.mxu0 %v678
  %1233 = vmatprep.subr.bf16.mxu0 %v683
  %1234 = vmatpush1.bf16.msra.mxu0 %v682
  %1235 = vmatprep.subr.bf16.mxu0 %v687
  %1236 = vmatpush1.bf16.msra.mxu0 %v686
  %1237 = vmatprep.subr.bf16.mxu0 %v691
  %1238 = vmatpush1.bf16.msra.mxu0 %v690
  %1239 = vmatprep.subr.bf16.mxu0 %v695
  %1240 = vmatpush1.bf16.msra.mxu0 %v694
  %1241 = vmatprep.subr.bf16.mxu0 %v699
  %1242 = vmatpush1.bf16.msra.mxu0 %v698
  %1243 = vmatprep.subr.bf16.mxu0 %v703
  %1244 = vmatpush1.bf16.msra.mxu0 %v702
  %1245 = vmatprep.subr.bf16.mxu0 %v707
  %1246 = vmatpush1.bf16.msra.mxu0 %v706
  %1247 = vmatprep.subr.bf16.mxu0 %v711
  %1248 = vmatpush1.bf16.msra.mxu0 %v710
  %1249 = vmatprep.mubr.bf16.mxu0 %v1173
  %1250 = vmatmul.mubr.bf16.gmra.mrb[0].mxu0 %v1172
  %v1251 = vpop.f32.mrb[0].mxu0
  %v1252 = vadd.f32 %v143, %v1251
  %v1253 = vpop.f32.mrb[0].mxu0
  %v1254 = vadd.f32 %v147, %v1253
  %v1255 = vpop.f32.mrb[0].mxu0
  %v1256 = vpop.f32.mrb[0].mxu0
  %1257 = vdwg.mxu0
  %v1258 = vxor.u32 %v1211, 2147483648
  %v1259 = vmul.f32 %v1258, 1.442695
  %v1260 = vpow.pop %v1259
  %v1261 = vadd.f32 %v1260, 1.0
  %v1262 = vrcp.pop %v1261
  %v1263 = vmul.f32 1.0, %v1262
  %v1264 = vxor.u32 %v1213, 2147483648
  %v1265 = vmul.f32 %v1264, 1.442695
  %v1266 = vpow.pop %v1265
  %v1267 = vadd.f32 %v1266, 1.0
  %v1268 = vrcp.pop %v1267
  %v1269 = vmul.f32 1.0, %v1268
  %v1270 = vtanh.pop %v1252
  %v1271 = vxor.u32 %v1254, 2147483648
  %v1272 = vmul.f32 %v1271, 1.442695
  %v1273 = vpow.pop %v1272
  %v1274 = vadd.f32 %v1273, 1.0
  %v1275 = vrcp.pop %v1274
  %v1276 = vmul.f32 1.0, %v1275
  %v1277 = vmul.f32 %v1269, %v879
  %v1278 = vmul.f32 %v1263, %v1270
  %v1279 = vadd.f32 %v1277, %v1278
  %v1280 = vtanh.pop %v1279
  %v1281 = vmul.f32 %v1276, %v1280
  %v1282 = vld [vmem:[#allocation2 + $0x40] sm:$0xff]
  %v1283 = vld [vmem:[#allocation2 + $0x48] sm:$0xff]
  %v1284 = vld [vmem:[#allocation2 + $0x50] sm:$0xff]
  %v1285 = vld [vmem:[#allocation2 + $0x58] sm:$0xff]
  %1286 = vmatprep.subr.bf16.mxu0 %v983
  %1287 = vmatpush1.bf16.msra.mxu0 %v982
  %1288 = vmatprep.subr.bf16.mxu0 %v987
  %1289 = vmatpush1.bf16.msra.mxu0 %v986
  %1290 = vmatprep.subr.bf16.mxu0 %v991
  %1291 = vmatpush1.bf16.msra.mxu0 %v990
  %1292 = vmatprep.subr.bf16.mxu0 %v995
  %1293 = vmatpush1.bf16.msra.mxu0 %v994
  %1294 = vmatprep.subr.bf16.mxu0 %v999
  %1295 = vmatpush1.bf16.msra.mxu0 %v998
  %1296 = vmatprep.subr.bf16.mxu0 %v1003
  %1297 = vmatpush1.bf16.msra.mxu0 %v1002
  %1298 = vmatprep.subr.bf16.mxu0 %v1007
  %1299 = vmatpush1.bf16.msra.mxu0 %v1006
  %1300 = vmatprep.subr.bf16.mxu0 %v1011
  %1301 = vmatpush1.bf16.msra.mxu0 %v1010
  %1302 = vmatprep.subr.bf16.mxu0 0
  %1303 = vmatpush1.bf16.msra.mxu0 0
  %1304 = vmatprep.subr.bf16.mxu0 0
  %1305 = vmatpush1.bf16.msra.mxu0 0
  %1306 = vmatprep.subr.bf16.mxu0 0
  %1307 = vmatpush1.bf16.msra.mxu0 0
  %1308 = vmatprep.subr.bf16.mxu0 0
  %1309 = vmatpush1.bf16.msra.mxu0 0
  %1310 = vmatprep.subr.bf16.mxu0 0
  %1311 = vmatpush1.bf16.msra.mxu0 0
  %1312 = vmatprep.subr.bf16.mxu0 0
  %1313 = vmatpush1.bf16.msra.mxu0 0
  %1314 = vmatprep.subr.bf16.mxu0 0
  %1315 = vmatpush1.bf16.msra.mxu0 0
  %1316 = vmatprep.subr.bf16.mxu0 0
  %1317 = vmatpush1.bf16.msra.mxu0 0
  %1318 = vmatprep.mubr.bf16.mxu0 0
  %1319 = vmatmul.mubr.bf16.gmra.mrb[0].mxu0 %v1168
  %v1320 = vpop.f32.mrb[0].mxu0
  %v1321 = vadd.f32 0.0, %v1320
  %v1322 = vpop.f32.mrb[0].mxu0
  %v1323 = vadd.f32 0.0, %v1322
  %v1324 = vpop.f32.mrb[0].mxu0
  %v1325 = vpop.f32.mrb[0].mxu0
  %1326 = vdwg.mxu0
  %1327 = vmatprep.subr.bf16.mxu0 %v985
  %1328 = vmatpush1.bf16.msra.mxu0 %v984
  %1329 = vmatprep.subr.bf16.mxu0 %v989
  %1330 = vmatpush1.bf16.msra.mxu0 %v988
  %1331 = vmatprep.subr.bf16.mxu0 %v993
  %1332 = vmatpush1.bf16.msra.mxu0 %v992
  %1333 = vmatprep.subr.bf16.mxu0 %v997
  %1334 = vmatpush1.bf16.msra.mxu0 %v996
  %1335 = vmatprep.subr.bf16.mxu0 %v1001
  %1336 = vmatpush1.bf16.msra.mxu0 %v1000
  %1337 = vmatprep.subr.bf16.mxu0 %v1005
  %1338 = vmatpush1.bf16.msra.mxu0 %v1004
  %1339 = vmatprep.subr.bf16.mxu0 %v1009
  %1340 = vmatpush1.bf16.msra.mxu0 %v1008
  %1341 = vmatprep.subr.bf16.mxu0 %v1013
  %1342 = vmatpush1.bf16.msra.mxu0 %v1012
  %1343 = vmatprep.subr.bf16.mxu0 0
  %1344 = vmatpush1.bf16.msra.mxu0 0
  %1345 = vmatprep.subr.bf16.mxu0 0
  %1346 = vmatpush1.bf16.msra.mxu0 0
  %1347 = vmatprep.subr.bf16.mxu0 0
  %1348 = vmatpush1.bf16.msra.mxu0 0
  %1349 = vmatprep.subr.bf16.mxu0 0
  %1350 = vmatpush1.bf16.msra.mxu0 0
  %1351 = vmatprep.subr.bf16.mxu0 0
  %1352 = vmatpush1.bf16.msra.mxu0 0
  %1353 = vmatprep.subr.bf16.mxu0 0
  %1354 = vmatpush1.bf16.msra.mxu0 0
  %1355 = vmatprep.subr.bf16.mxu0 0
  %1356 = vmatpush1.bf16.msra.mxu0 0
  %1357 = vmatprep.subr.bf16.mxu0 0
  %1358 = vmatpush1.bf16.msra.mxu0 0
  %1359 = vmatprep.mubr.bf16.mxu0 0
  %1360 = vmatmul.mubr.bf16.gmra.mrb[0].mxu0 %v1168
  %v1361 = vpop.f32.mrb[0].mxu0
  %v1362 = vadd.f32 0.0, %v1361
  %v1363 = vpop.f32.mrb[0].mxu0
  %v1364 = vadd.f32 0.0, %v1363
  %v1365 = vpop.f32.mrb[0].mxu0
  %v1366 = vpop.f32.mrb[0].mxu0
  %1367 = vdwg.mxu0
  %v1368 = vadd.f32 %v1282, %v1321
  %v1369 = vadd.f32 %v1283, %v1323
  %v1370 = vadd.f32 %v1284, %v1362
  %v1371 = vadd.f32 %v1285, %v1364
  %v1372 = vxor.u32 %v1368, 2147483648
  %v1373 = vmul.f32 %v1372, 1.442695
  %v1374 = vpow.pop %v1373
  %v1375 = vadd.f32 %v1374, 1.0
  %v1376 = vrcp.pop %v1375
  %v1377 = vmul.f32 1.0, %v1376
  %v1378 = vxor.u32 %v1369, 2147483648
  %v1379 = vmul.f32 %v1378, 1.442695
  %v1380 = vpow.pop %v1379
  %v1381 = vadd.f32 %v1380, 1.0
  %v1382 = vrcp.pop %v1381
  %v1383 = vmul.f32 1.0, %v1382
  %v1384 = vtanh.pop %v1370
  %v1385 = vxor.u32 %v1371, 2147483648
  %v1386 = vmul.f32 %v1385, 1.442695
  %v1387 = vpow.pop %v1386
  %v1388 = vadd.f32 %v1387, 1.0
  %v1389 = vrcp.pop %v1388
  %v1390 = vmul.f32 1.0, %v1389
  %v1391 = vmul.f32 %v1383, %v1153
  %v1392 = vmul.f32 %v1377, %v1384
  %v1393 = vadd.f32 %v1391, %v1392
  %v1394 = vtanh.pop %v1393
  %v1395 = vmul.f32 %v1390, %v1394
  %v1396 = vpack.c.bf16 %v1395, %v1395
  %1397 = vst [vmem:[#allocation3] sm:$0xf] %v1396
  %vm1398 = vcmp.eq.s32.totalorder %v1158, 1
  %v1399 = vsel %vm1398, 1, 0
  %1400 = vset.pattern.permute.xlu0 0
  %1401 = vperm.xlu0 %1400, %v1399
  %v1402 = vpop.permute.xlu0 %1401
  %vm1403 = vcmp.eq.s32.totalorder %v1402, 1
  %v1404 = vsel %vm1403, %v1281, %v1165
  %v1405 = vpack.c.bf16 %v1281, %v1281
  %1406 = vst [vmem:[#allocation3 + $0x4] sm:$0xf] %v1405
  %v1407 = vld [vmem:[#allocation3] sm:$0xff]
  %v1409 = vunpack.c.l.b16 %v1407
  %v1410 = vunpack.c.h.b16 %v1407
  %v1411 = vpack.c.b16 %v1409, %v1409
  %v1412 = vpack.c.b16 %v1410, %v1410
  %1415 = vmatprep.subr.bf16.mxu0 %v649
  %1416 = vmatpush1.bf16.msra.mxu0 %v648
  %1417 = vmatprep.subr.bf16.mxu0 %v653
  %1418 = vmatpush1.bf16.msra.mxu0 %v652
  %1419 = vmatprep.subr.bf16.mxu0 %v657
  %1420 = vmatpush1.bf16.msra.mxu0 %v656
  %1421 = vmatprep.subr.bf16.mxu0 %v661
  %1422 = vmatpush1.bf16.msra.mxu0 %v660
  %1423 = vmatprep.subr.bf16.mxu0 %v665
  %1424 = vmatpush1.bf16.msra.mxu0 %v664
  %1425 = vmatprep.subr.bf16.mxu0 %v669
  %1426 = vmatpush1.bf16.msra.mxu0 %v668
  %1427 = vmatprep.subr.bf16.mxu0 %v673
  %1428 = vmatpush1.bf16.msra.mxu0 %v672
  %1429 = vmatprep.subr.bf16.mxu0 %v677
  %1430 = vmatpush1.bf16.msra.mxu0 %v676
  %1431 = vmatprep.subr.bf16.mxu0 %v681
  %1432 = vmatpush1.bf16.msra.mxu0 %v680
  %1433 = vmatprep.subr.bf16.mxu0 %v685
  %1434 = vmatpush1.bf16.msra.mxu0 %v684
  %1435 = vmatprep.subr.bf16.mxu0 %v689
  %1436 = vmatpush1.bf16.msra.mxu0 %v688
  %1437 = vmatprep.subr.bf16.mxu0 %v693
  %1438 = vmatpush1.bf16.msra.mxu0 %v692
  %1439 = vmatprep.subr.bf16.mxu0 %v697
  %1440 = vmatpush1.bf16.msra.mxu0 %v696
  %1441 = vmatprep.subr.bf16.mxu0 %v701
  %1442 = vmatpush1.bf16.msra.mxu0 %v700
  %1443 = vmatprep.subr.bf16.mxu0 %v705
  %1444 = vmatpush1.bf16.msra.mxu0 %v704
  %1445 = vmatprep.subr.bf16.mxu0 %v709
  %1446 = vmatpush1.bf16.msra.mxu0 %v708
  %1447 = vmatprep.mubr.bf16.mxu0 %v1412
  %1448 = vmatmul.mubr.bf16.gmra.mrb[0].mxu0 %v1411
  %v1449 = vpop.f32.mrb[0].mxu0
  %v1450 = vadd.f32 %v135, %v1449
  %v1451 = vpop.f32.mrb[0].mxu0
  %v1452 = vadd.f32 %v139, %v1451
  %v1453 = vpop.f32.mrb[0].mxu0
  %v1454 = vpop.f32.mrb[0].mxu0
  %1455 = vdwg.mxu0
  %1456 = vmatprep.subr.bf16.mxu0 %v651
  %1457 = vmatpush1.bf16.msra.mxu0 %v650
  %1458 = vmatprep.subr.bf16.mxu0 %v655
  %1459 = vmatpush1.bf16.msra.mxu0 %v654
  %1460 = vmatprep.subr.bf16.mxu0 %v659
  %1461 = vmatpush1.bf16.msra.mxu0 %v658
  %1462 = vmatprep.subr.bf16.mxu0 %v663
  %1463 = vmatpush1.bf16.msra.mxu0 %v662
  %1464 = vmatprep.subr.bf16.mxu0 %v667
  %1465 = vmatpush1.bf16.msra.mxu0 %v666
  %1466 = vmatprep.subr.bf16.mxu0 %v671
  %1467 = vmatpush1.bf16.msra.mxu0 %v670
  %1468 = vmatprep.subr.bf16.mxu0 %v675
  %1469 = vmatpush1.bf16.msra.mxu0 %v674
  %1470 = vmatprep.subr.bf16.mxu0 %v679
  %1471 = vmatpush1.bf16.msra.mxu0 %v678
  %1472 = vmatprep.subr.bf16.mxu0 %v683
  %1473 = vmatpush1.bf16.msra.mxu0 %v682
  %1474 = vmatprep.subr.bf16.mxu0 %v687
  %1475 = vmatpush1.bf16.msra.mxu0 %v686
  %1476 = vmatprep.subr.bf16.mxu0 %v691
  %1477 = vmatpush1.bf16.msra.mxu0 %v690
  %1478 = vmatprep.subr.bf16.mxu0 %v695
  %1479 = vmatpush1.bf16.msra.mxu0 %v694
  %1480 = vmatprep.subr.bf16.mxu0 %v699
  %1481 = vmatpush1.bf16.msra.mxu0 %v698
  %1482 = vmatprep.subr.bf16.mxu0 %v703
  %1483 = vmatpush1.bf16.msra.mxu0 %v702
  %1484 = vmatprep.subr.bf16.mxu0 %v707
  %1485 = vmatpush1.bf16.msra.mxu0 %v706
  %1486 = vmatprep.subr.bf16.mxu0 %v711
  %1487 = vmatpush1.bf16.msra.mxu0 %v710
  %1488 = vmatprep.mubr.bf16.mxu0 %v1412
  %1489 = vmatmul.mubr.bf16.gmra.mrb[0].mxu0 %v1411
  %v1490 = vpop.f32.mrb[0].mxu0
  %v1491 = vadd.f32 %v143, %v1490
  %v1492 = vpop.f32.mrb[0].mxu0
  %v1493 = vadd.f32 %v147, %v1492
  %v1494 = vpop.f32.mrb[0].mxu0
  %v1495 = vpop.f32.mrb[0].mxu0
  %1496 = vdwg.mxu0
  %v1497 = vxor.u32 %v1450, 2147483648
  %v1498 = vmul.f32 %v1497, 1.442695
  %v1499 = vpow.pop %v1498
  %v1500 = vadd.f32 %v1499, 1.0
  %v1501 = vrcp.pop %v1500
  %v1502 = vmul.f32 1.0, %v1501
  %v1503 = vxor.u32 %v1452, 2147483648
  %v1504 = vmul.f32 %v1503, 1.442695
  %v1505 = vpow.pop %v1504
  %v1506 = vadd.f32 %v1505, 1.0
  %v1507 = vrcp.pop %v1506
  %v1508 = vmul.f32 1.0, %v1507
  %v1509 = vtanh.pop %v1491
  %v1510 = vxor.u32 %v1493, 2147483648
  %v1511 = vmul.f32 %v1510, 1.442695
  %v1512 = vpow.pop %v1511
  %v1513 = vadd.f32 %v1512, 1.0
  %v1514 = vrcp.pop %v1513
  %v1515 = vmul.f32 1.0, %v1514
  %v1516 = vmul.f32 %v1508, %v1279
  %v1517 = vmul.f32 %v1502, %v1509
  %v1518 = vadd.f32 %v1516, %v1517
  %v1519 = vtanh.pop %v1518
  %v1520 = vmul.f32 %v1515, %v1519
  %v1521 = vld [vmem:[#allocation2 + $0x60] sm:$0xff]
  %v1522 = vld [vmem:[#allocation2 + $0x68] sm:$0xff]
  %v1523 = vld [vmem:[#allocation2 + $0x70] sm:$0xff]
  %v1524 = vld [vmem:[#allocation2 + $0x78] sm:$0xff]
  %1525 = vmatprep.subr.bf16.mxu0 %v983
  %1526 = vmatpush1.bf16.msra.mxu0 %v982
  %1527 = vmatprep.subr.bf16.mxu0 %v987
  %1528 = vmatpush1.bf16.msra.mxu0 %v986
  %1529 = vmatprep.subr.bf16.mxu0 %v991
  %1530 = vmatpush1.bf16.msra.mxu0 %v990
  %1531 = vmatprep.subr.bf16.mxu0 %v995
  %1532 = vmatpush1.bf16.msra.mxu0 %v994
  %1533 = vmatprep.subr.bf16.mxu0 %v999
  %1534 = vmatpush1.bf16.msra.mxu0 %v998
  %1535 = vmatprep.subr.bf16.mxu0 %v1003
  %1536 = vmatpush1.bf16.msra.mxu0 %v1002
  %1537 = vmatprep.subr.bf16.mxu0 %v1007
  %1538 = vmatpush1.bf16.msra.mxu0 %v1006
  %1539 = vmatprep.subr.bf16.mxu0 %v1011
  %1540 = vmatpush1.bf16.msra.mxu0 %v1010
  %1541 = vmatprep.subr.bf16.mxu0 0
  %1542 = vmatpush1.bf16.msra.mxu0 0
  %1543 = vmatprep.subr.bf16.mxu0 0
  %1544 = vmatpush1.bf16.msra.mxu0 0
  %1545 = vmatprep.subr.bf16.mxu0 0
  %1546 = vmatpush1.bf16.msra.mxu0 0
  %1547 = vmatprep.subr.bf16.mxu0 0
  %1548 = vmatpush1.bf16.msra.mxu0 0
  %1549 = vmatprep.subr.bf16.mxu0 0
  %1550 = vmatpush1.bf16.msra.mxu0 0
  %1551 = vmatprep.subr.bf16.mxu0 0
  %1552 = vmatpush1.bf16.msra.mxu0 0
  %1553 = vmatprep.subr.bf16.mxu0 0
  %1554 = vmatpush1.bf16.msra.mxu0 0
  %1555 = vmatprep.subr.bf16.mxu0 0
  %1556 = vmatpush1.bf16.msra.mxu0 0
  %1557 = vmatprep.mubr.bf16.mxu0 0
  %1558 = vmatmul.mubr.bf16.gmra.mrb[0].mxu0 %v1407
  %v1559 = vpop.f32.mrb[0].mxu0
  %v1560 = vadd.f32 0.0, %v1559
  %v1561 = vpop.f32.mrb[0].mxu0
  %v1562 = vadd.f32 0.0, %v1561
  %v1563 = vpop.f32.mrb[0].mxu0
  %v1564 = vpop.f32.mrb[0].mxu0
  %1565 = vdwg.mxu0
  %1566 = vmatprep.subr.bf16.mxu0 %v985
  %1567 = vmatpush1.bf16.msra.mxu0 %v984
  %1568 = vmatprep.subr.bf16.mxu0 %v989
  %1569 = vmatpush1.bf16.msra.mxu0 %v988
  %1570 = vmatprep.subr.bf16.mxu0 %v993
  %1571 = vmatpush1.bf16.msra.mxu0 %v992
  %1572 = vmatprep.subr.bf16.mxu0 %v997
  %1573 = vmatpush1.bf16.msra.mxu0 %v996
  %1574 = vmatprep.subr.bf16.mxu0 %v1001
  %1575 = vmatpush1.bf16.msra.mxu0 %v1000
  %1576 = vmatprep.subr.bf16.mxu0 %v1005
  %1577 = vmatpush1.bf16.msra.mxu0 %v1004
  %1578 = vmatprep.subr.bf16.mxu0 %v1009
  %1579 = vmatpush1.bf16.msra.mxu0 %v1008
  %1580 = vmatprep.subr.bf16.mxu0 %v1013
  %1581 = vmatpush1.bf16.msra.mxu0 %v1012
  %1582 = vmatprep.subr.bf16.mxu0 0
  %1583 = vmatpush1.bf16.msra.mxu0 0
  %1584 = vmatprep.subr.bf16.mxu0 0
  %1585 = vmatpush1.bf16.msra.mxu0 0
  %1586 = vmatprep.subr.bf16.mxu0 0
  %1587 = vmatpush1.bf16.msra.mxu0 0
  %1588 = vmatprep.subr.bf16.mxu0 0
  %1589 = vmatpush1.bf16.msra.mxu0 0
  %1590 = vmatprep.subr.bf16.mxu0 0
  %1591 = vmatpush1.bf16.msra.mxu0 0
  %1592 = vmatprep.subr.bf16.mxu0 0
  %1593 = vmatpush1.bf16.msra.mxu0 0
  %1594 = vmatprep.subr.bf16.mxu0 0
  %1595 = vmatpush1.bf16.msra.mxu0 0
  %1596 = vmatprep.subr.bf16.mxu0 0
  %1597 = vmatpush1.bf16.msra.mxu0 0
  %1598 = vmatprep.mubr.bf16.mxu0 0
  %1599 = vmatmul.mubr.bf16.gmra.mrb[0].mxu0 %v1407
  %v1600 = vpop.f32.mrb[0].mxu0
  %v1601 = vadd.f32 0.0, %v1600
  %v1602 = vpop.f32.mrb[0].mxu0
  %v1603 = vadd.f32 0.0, %v1602
  %v1604 = vpop.f32.mrb[0].mxu0
  %v1605 = vpop.f32.mrb[0].mxu0
  %1606 = vdwg.mxu0
  %v1607 = vadd.f32 %v1521, %v1560
  %v1608 = vadd.f32 %v1522, %v1562
  %v1609 = vadd.f32 %v1523, %v1601
  %v1610 = vadd.f32 %v1524, %v1603
  %v1611 = vxor.u32 %v1607, 2147483648
  %v1612 = vmul.f32 %v1611, 1.442695
  %v1613 = vpow.pop %v1612
  %v1614 = vadd.f32 %v1613, 1.0
  %v1615 = vrcp.pop %v1614
  %v1616 = vmul.f32 1.0, %v1615
  %v1617 = vxor.u32 %v1608, 2147483648
  %v1618 = vmul.f32 %v1617, 1.442695
  %v1619 = vpow.pop %v1618
  %v1620 = vadd.f32 %v1619, 1.0
  %v1621 = vrcp.pop %v1620
  %v1622 = vmul.f32 1.0, %v1621
  %v1623 = vtanh.pop %v1609
  %v1624 = vxor.u32 %v1610, 2147483648
  %v1625 = vmul.f32 %v1624, 1.442695
  %v1626 = vpow.pop %v1625
  %v1627 = vadd.f32 %v1626, 1.0
  %v1628 = vrcp.pop %v1627
  %v1629 = vmul.f32 1.0, %v1628
  %v1630 = vmul.f32 %v1622, %v1393
  %v1631 = vmul.f32 %v1616, %v1623
  %v1632 = vadd.f32 %v1630, %v1631
  %v1633 = vtanh.pop %v1632
  %v1634 = vmul.f32 %v1629, %v1633
  %v1635 = vpack.c.bf16 %v1634, %v1634
  %1636 = vst [vmem:[#allocation3] sm:$0xf] %v1635
  %vm1637 = vcmp.eq.s32.totalorder %v1158, 2
  %v1638 = vsel %vm1637, 1, 0
  %1639 = vset.pattern.permute.xlu0 0
  %1640 = vperm.xlu0 %1639, %v1638
  %v1641 = vpop.permute.xlu0 %1640
  %vm1642 = vcmp.eq.s32.totalorder %v1641, 1
  %v1643 = vsel %vm1642, %v1520, %v1404
  %v1644 = vpack.c.bf16 %v1520, %v1520
  %1645 = vst [vmem:[#allocation3 + $0x4] sm:$0xf] %v1644
  %v1646 = vld [vmem:[#allocation3] sm:$0xff]
  %v1648 = vunpack.c.l.b16 %v1646
  %v1649 = vunpack.c.h.b16 %v1646
  %v1650 = vpack.c.b16 %v1648, %v1648
  %v1651 = vpack.c.b16 %v1649, %v1649
  %1654 = vmatprep.subr.bf16.mxu0 %v649
  %1655 = vmatpush1.bf16.msra.mxu0 %v648
  %1656 = vmatprep.subr.bf16.mxu0 %v653
  %1657 = vmatpush1.bf16.msra.mxu0 %v652
  %1658 = vmatprep.subr.bf16.mxu0 %v657
  %1659 = vmatpush1.bf16.msra.mxu0 %v656
  %1660 = vmatprep.subr.bf16.mxu0 %v661
  %1661 = vmatpush1.bf16.msra.mxu0 %v660
  %1662 = vmatprep.subr.bf16.mxu0 %v665
  %1663 = vmatpush1.bf16.msra.mxu0 %v664
  %1664 = vmatprep.subr.bf16.mxu0 %v669
  %1665 = vmatpush1.bf16.msra.mxu0 %v668
  %1666 = vmatprep.subr.bf16.mxu0 %v673
  %1667 = vmatpush1.bf16.msra.mxu0 %v672
  %1668 = vmatprep.subr.bf16.mxu0 %v677
  %1669 = vmatpush1.bf16.msra.mxu0 %v676
  %1670 = vmatprep.subr.bf16.mxu0 %v681
  %1671 = vmatpush1.bf16.msra.mxu0 %v680
  %1672 = vmatprep.subr.bf16.mxu0 %v685
  %1673 = vmatpush1.bf16.msra.mxu0 %v684
  %1674 = vmatprep.subr.bf16.mxu0 %v689
  %1675 = vmatpush1.bf16.msra.mxu0 %v688
  %1676 = vmatprep.subr.bf16.mxu0 %v693
  %1677 = vmatpush1.bf16.msra.mxu0 %v692
  %1678 = vmatprep.subr.bf16.mxu0 %v697
  %1679 = vmatpush1.bf16.msra.mxu0 %v696
  %1680 = vmatprep.subr.bf16.mxu0 %v701
  %1681 = vmatpush1.bf16.msra.mxu0 %v700
  %1682 = vmatprep.subr.bf16.mxu0 %v705
  %1683 = vmatpush1.bf16.msra.mxu0 %v704
  %1684 = vmatprep.subr.bf16.mxu0 %v709
  %1685 = vmatpush1.bf16.msra.mxu0 %v708
  %1686 = vmatprep.mubr.bf16.mxu0 %v1651
  %1687 = vmatmul.mubr.bf16.gmra.mrb[0].mxu0 %v1650
  %v1688 = vpop.f32.mrb[0].mxu0
  %v1689 = vadd.f32 %v135, %v1688
  %v1690 = vpop.f32.mrb[0].mxu0
  %v1691 = vadd.f32 %v139, %v1690
  %v1692 = vpop.f32.mrb[0].mxu0
  %v1693 = vpop.f32.mrb[0].mxu0
  %1694 = vdwg.mxu0
  %1695 = vmatprep.subr.bf16.mxu0 %v651
  %1696 = vmatpush1.bf16.msra.mxu0 %v650
  %1697 = vmatprep.subr.bf16.mxu0 %v655
  %1698 = vmatpush1.bf16.msra.mxu0 %v654
  %1699 = vmatprep.subr.bf16.mxu0 %v659
  %1700 = vmatpush1.bf16.msra.mxu0 %v658
  %1701 = vmatprep.subr.bf16.mxu0 %v663
  %1702 = vmatpush1.bf16.msra.mxu0 %v662
  %1703 = vmatprep.subr.bf16.mxu0 %v667
  %1704 = vmatpush1.bf16.msra.mxu0 %v666
  %1705 = vmatprep.subr.bf16.mxu0 %v671
  %1706 = vmatpush1.bf16.msra.mxu0 %v670
  %1707 = vmatprep.subr.bf16.mxu0 %v675
  %1708 = vmatpush1.bf16.msra.mxu0 %v674
  %1709 = vmatprep.subr.bf16.mxu0 %v679
  %1710 = vmatpush1.bf16.msra.mxu0 %v678
  %1711 = vmatprep.subr.bf16.mxu0 %v683
  %1712 = vmatpush1.bf16.msra.mxu0 %v682
  %1713 = vmatprep.subr.bf16.mxu0 %v687
  %1714 = vmatpush1.bf16.msra.mxu0 %v686
  %1715 = vmatprep.subr.bf16.mxu0 %v691
  %1716 = vmatpush1.bf16.msra.mxu0 %v690
  %1717 = vmatprep.subr.bf16.mxu0 %v695
  %1718 = vmatpush1.bf16.msra.mxu0 %v694
  %1719 = vmatprep.subr.bf16.mxu0 %v699
  %1720 = vmatpush1.bf16.msra.mxu0 %v698
  %1721 = vmatprep.subr.bf16.mxu0 %v703
  %1722 = vmatpush1.bf16.msra.mxu0 %v702
  %1723 = vmatprep.subr.bf16.mxu0 %v707
  %1724 = vmatpush1.bf16.msra.mxu0 %v706
  %1725 = vmatprep.subr.bf16.mxu0 %v711
  %1726 = vmatpush1.bf16.msra.mxu0 %v710
  %1727 = vmatprep.mubr.bf16.mxu0 %v1651
  %1728 = vmatmul.mubr.bf16.gmra.mrb[0].mxu0 %v1650
  %v1729 = vpop.f32.mrb[0].mxu0
  %v1730 = vadd.f32 %v143, %v1729
  %v1731 = vpop.f32.mrb[0].mxu0
  %v1732 = vadd.f32 %v147, %v1731
  %v1733 = vpop.f32.mrb[0].mxu0
  %v1734 = vpop.f32.mrb[0].mxu0
  %1735 = vdwg.mxu0
  %v1736 = vxor.u32 %v1689, 2147483648
  %v1737 = vmul.f32 %v1736, 1.442695
  %v1738 = vpow.pop %v1737
  %v1739 = vadd.f32 %v1738, 1.0
  %v1740 = vrcp.pop %v1739
  %v1741 = vmul.f32 1.0, %v1740
  %v1742 = vxor.u32 %v1691, 2147483648
  %v1743 = vmul.f32 %v1742, 1.442695
  %v1744 = vpow.pop %v1743
  %v1745 = vadd.f32 %v1744, 1.0
  %v1746 = vrcp.pop %v1745
  %v1747 = vmul.f32 1.0, %v1746
  %v1748 = vtanh.pop %v1730
  %v1749 = vxor.u32 %v1732, 2147483648
  %v1750 = vmul.f32 %v1749, 1.442695
  %v1751 = vpow.pop %v1750
  %v1752 = vadd.f32 %v1751, 1.0
  %v1753 = vrcp.pop %v1752
  %v1754 = vmul.f32 1.0, %v1753
  %v1755 = vmul.f32 %v1747, %v1518
  %v1756 = vmul.f32 %v1741, %v1748
  %v1757 = vadd.f32 %v1755, %v1756
  %v1758 = vtanh.pop %v1757
  %v1759 = vmul.f32 %v1754, %v1758
  %v1760 = vld [vmem:[#allocation2 + $0x80] sm:$0xff]
  %v1761 = vld [vmem:[#allocation2 + $0x88] sm:$0xff]
  %v1762 = vld [vmem:[#allocation2 + $0x90] sm:$0xff]
  %v1763 = vld [vmem:[#allocation2 + $0x98] sm:$0xff]
  %1764 = vmatprep.subr.bf16.mxu0 %v983
  %1765 = vmatpush1.bf16.msra.mxu0 %v982
  %1766 = vmatprep.subr.bf16.mxu0 %v987
  %1767 = vmatpush1.bf16.msra.mxu0 %v986
  %1768 = vmatprep.subr.bf16.mxu0 %v991
  %1769 = vmatpush1.bf16.msra.mxu0 %v990
  %1770 = vmatprep.subr.bf16.mxu0 %v995
  %1771 = vmatpush1.bf16.msra.mxu0 %v994
  %1772 = vmatprep.subr.bf16.mxu0 %v999
  %1773 = vmatpush1.bf16.msra.mxu0 %v998
  %1774 = vmatprep.subr.bf16.mxu0 %v1003
  %1775 = vmatpush1.bf16.msra.mxu0 %v1002
  %1776 = vmatprep.subr.bf16.mxu0 %v1007
  %1777 = vmatpush1.bf16.msra.mxu0 %v1006
  %1778 = vmatprep.subr.bf16.mxu0 %v1011
  %1779 = vmatpush1.bf16.msra.mxu0 %v1010
  %1780 = vmatprep.subr.bf16.mxu0 0
  %1781 = vmatpush1.bf16.msra.mxu0 0
  %1782 = vmatprep.subr.bf16.mxu0 0
  %1783 = vmatpush1.bf16.msra.mxu0 0
  %1784 = vmatprep.subr.bf16.mxu0 0
  %1785 = vmatpush1.bf16.msra.mxu0 0
  %1786 = vmatprep.subr.bf16.mxu0 0
  %1787 = vmatpush1.bf16.msra.mxu0 0
  %1788 = vmatprep.subr.bf16.mxu0 0
  %1789 = vmatpush1.bf16.msra.mxu0 0
  %1790 = vmatprep.subr.bf16.mxu0 0
  %1791 = vmatpush1.bf16.msra.mxu0 0
  %1792 = vmatprep.subr.bf16.mxu0 0
  %1793 = vmatpush1.bf16.msra.mxu0 0
  %1794 = vmatprep.subr.bf16.mxu0 0
  %1795 = vmatpush1.bf16.msra.mxu0 0
  %1796 = vmatprep.mubr.bf16.mxu0 0
  %1797 = vmatmul.mubr.bf16.gmra.mrb[0].mxu0 %v1646
  %v1798 = vpop.f32.mrb[0].mxu0
  %v1799 = vadd.f32 0.0, %v1798
  %v1800 = vpop.f32.mrb[0].mxu0
  %v1801 = vadd.f32 0.0, %v1800
  %v1802 = vpop.f32.mrb[0].mxu0
  %v1803 = vpop.f32.mrb[0].mxu0
  %1804 = vdwg.mxu0
  %1805 = vmatprep.subr.bf16.mxu0 %v985
  %1806 = vmatpush1.bf16.msra.mxu0 %v984
  %1807 = vmatprep.subr.bf16.mxu0 %v989
  %1808 = vmatpush1.bf16.msra.mxu0 %v988
  %1809 = vmatprep.subr.bf16.mxu0 %v993
  %1810 = vmatpush1.bf16.msra.mxu0 %v992
  %1811 = vmatprep.subr.bf16.mxu0 %v997
  %1812 = vmatpush1.bf16.msra.mxu0 %v996
  %1813 = vmatprep.subr.bf16.mxu0 %v1001
  %1814 = vmatpush1.bf16.msra.mxu0 %v1000
  %1815 = vmatprep.subr.bf16.mxu0 %v1005
  %1816 = vmatpush1.bf16.msra.mxu0 %v1004
  %1817 = vmatprep.subr.bf16.mxu0 %v1009
  %1818 = vmatpush1.bf16.msra.mxu0 %v1008
  %1819 = vmatprep.subr.bf16.mxu0 %v1013
  %1820 = vmatpush1.bf16.msra.mxu0 %v1012
  %1821 = vmatprep.subr.bf16.mxu0 0
  %1822 = vmatpush1.bf16.msra.mxu0 0
  %1823 = vmatprep.subr.bf16.mxu0 0
  %1824 = vmatpush1.bf16.msra.mxu0 0
  %1825 = vmatprep.subr.bf16.mxu0 0
  %1826 = vmatpush1.bf16.msra.mxu0 0
  %1827 = vmatprep.subr.bf16.mxu0 0
  %1828 = vmatpush1.bf16.msra.mxu0 0
  %1829 = vmatprep.subr.bf16.mxu0 0
  %1830 = vmatpush1.bf16.msra.mxu0 0
  %1831 = vmatprep.subr.bf16.mxu0 0
  %1832 = vmatpush1.bf16.msra.mxu0 0
  %1833 = vmatprep.subr.bf16.mxu0 0
  %1834 = vmatpush1.bf16.msra.mxu0 0
  %1835 = vmatprep.subr.bf16.mxu0 0
  %1836 = vmatpush1.bf16.msra.mxu0 0
  %1837 = vmatprep.mubr.bf16.mxu0 0
  %1838 = vmatmul.mubr.bf16.gmra.mrb[0].mxu0 %v1646
  %v1839 = vpop.f32.mrb[0].mxu0
  %v1840 = vadd.f32 0.0, %v1839
  %v1841 = vpop.f32.mrb[0].mxu0
  %v1842 = vadd.f32 0.0, %v1841
  %v1843 = vpop.f32.mrb[0].mxu0
  %v1844 = vpop.f32.mrb[0].mxu0
  %1845 = vdwg.mxu0
  %v1846 = vadd.f32 %v1760, %v1799
  %v1847 = vadd.f32 %v1761, %v1801
  %v1848 = vadd.f32 %v1762, %v1840
  %v1849 = vadd.f32 %v1763, %v1842
  %v1850 = vxor.u32 %v1846, 2147483648
  %v1851 = vmul.f32 %v1850, 1.442695
  %v1852 = vpow.pop %v1851
  %v1853 = vadd.f32 %v1852, 1.0
  %v1854 = vrcp.pop %v1853
  %v1855 = vmul.f32 1.0, %v1854
  %v1856 = vxor.u32 %v1847, 2147483648
  %v1857 = vmul.f32 %v1856, 1.442695
  %v1858 = vpow.pop %v1857
  %v1859 = vadd.f32 %v1858, 1.0
  %v1860 = vrcp.pop %v1859
  %v1861 = vmul.f32 1.0, %v1860
  %v1862 = vtanh.pop %v1848
  %v1863 = vxor.u32 %v1849, 2147483648
  %v1864 = vmul.f32 %v1863, 1.442695
  %v1865 = vpow.pop %v1864
  %v1866 = vadd.f32 %v1865, 1.0
  %v1867 = vrcp.pop %v1866
  %v1868 = vmul.f32 1.0, %v1867
  %v1869 = vmul.f32 %v1861, %v1632
  %v1870 = vmul.f32 %v1855, %v1862
  %v1871 = vadd.f32 %v1869, %v1870
  %v1872 = vtanh.pop %v1871
  %v1873 = vmul.f32 %v1868, %v1872
  %v1874 = vpack.c.bf16 %v1873, %v1873
  %1875 = vst [vmem:[#allocation3] sm:$0xf] %v1874
  %vm1876 = vcmp.eq.s32.totalorder %v1158, 3
  %v1877 = vsel %vm1876, 1, 0
  %1878 = vset.pattern.permute.xlu0 0
  %1879 = vperm.xlu0 %1878, %v1877
  %v1880 = vpop.permute.xlu0 %1879
  %vm1881 = vcmp.eq.s32.totalorder %v1880, 1
  %v1882 = vsel %vm1881, %v1759, %v1643
  %v1883 = vpack.c.bf16 %v1759, %v1759
  %1884 = vst [vmem:[#allocation3 + $0x4] sm:$0xf] %v1883
  %v1885 = vld [vmem:[#allocation3] sm:$0xff]
  %v1887 = vunpack.c.l.b16 %v1885
  %v1888 = vunpack.c.h.b16 %v1885
  %v1889 = vpack.c.b16 %v1887, %v1887
  %v1890 = vpack.c.b16 %v1888, %v1888
  %1893 = vmatprep.subr.bf16.mxu0 %v649
  %1894 = vmatpush1.bf16.msra.mxu0 %v648
  %1895 = vmatprep.subr.bf16.mxu0 %v653
  %1896 = vmatpush1.bf16.msra.mxu0 %v652
  %1897 = vmatprep.subr.bf16.mxu0 %v657
  %1898 = vmatpush1.bf16.msra.mxu0 %v656
  %1899 = vmatprep.subr.bf16.mxu0 %v661
  %1900 = vmatpush1.bf16.msra.mxu0 %v660
  %1901 = vmatprep.subr.bf16.mxu0 %v665
  %1902 = vmatpush1.bf16.msra.mxu0 %v664
  %1903 = vmatprep.subr.bf16.mxu0 %v669
  %1904 = vmatpush1.bf16.msra.mxu0 %v668
  %1905 = vmatprep.subr.bf16.mxu0 %v673
  %1906 = vmatpush1.bf16.msra.mxu0 %v672
  %1907 = vmatprep.subr.bf16.mxu0 %v677
  %1908 = vmatpush1.bf16.msra.mxu0 %v676
  %1909 = vmatprep.subr.bf16.mxu0 %v681
  %1910 = vmatpush1.bf16.msra.mxu0 %v680
  %1911 = vmatprep.subr.bf16.mxu0 %v685
  %1912 = vmatpush1.bf16.msra.mxu0 %v684
  %1913 = vmatprep.subr.bf16.mxu0 %v689
  %1914 = vmatpush1.bf16.msra.mxu0 %v688
  %1915 = vmatprep.subr.bf16.mxu0 %v693
  %1916 = vmatpush1.bf16.msra.mxu0 %v692
  %1917 = vmatprep.subr.bf16.mxu0 %v697
  %1918 = vmatpush1.bf16.msra.mxu0 %v696
  %1919 = vmatprep.subr.bf16.mxu0 %v701
  %1920 = vmatpush1.bf16.msra.mxu0 %v700
  %1921 = vmatprep.subr.bf16.mxu0 %v705
  %1922 = vmatpush1.bf16.msra.mxu0 %v704
  %1923 = vmatprep.subr.bf16.mxu0 %v709
  %1924 = vmatpush1.bf16.msra.mxu0 %v708
  %1925 = vmatprep.mubr.bf16.mxu0 %v1890
  %1926 = vmatmul.mubr.bf16.gmra.mrb[0].mxu0 %v1889
  %v1927 = vpop.f32.mrb[0].mxu0
  %v1928 = vadd.f32 %v135, %v1927
  %v1929 = vpop.f32.mrb[0].mxu0
  %v1930 = vadd.f32 %v139, %v1929
  %v1931 = vpop.f32.mrb[0].mxu0
  %v1932 = vpop.f32.mrb[0].mxu0
  %1933 = vdwg.mxu0
  %1934 = vmatprep.subr.bf16.mxu0 %v651
  %1935 = vmatpush1.bf16.msra.mxu0 %v650
  %1936 = vmatprep.subr.bf16.mxu0 %v655
  %1937 = vmatpush1.bf16.msra.mxu0 %v654
  %1938 = vmatprep.subr.bf16.mxu0 %v659
  %1939 = vmatpush1.bf16.msra.mxu0 %v658
  %1940 = vmatprep.subr.bf16.mxu0 %v663
  %1941 = vmatpush1.bf16.msra.mxu0 %v662
  %1942 = vmatprep.subr.bf16.mxu0 %v667
  %1943 = vmatpush1.bf16.msra.mxu0 %v666
  %1944 = vmatprep.subr.bf16.mxu0 %v671
  %1945 = vmatpush1.bf16.msra.mxu0 %v670
  %1946 = vmatprep.subr.bf16.mxu0 %v675
  %1947 = vmatpush1.bf16.msra.mxu0 %v674
  %1948 = vmatprep.subr.bf16.mxu0 %v679
  %1949 = vmatpush1.bf16.msra.mxu0 %v678
  %1950 = vmatprep.subr.bf16.mxu0 %v683
  %1951 = vmatpush1.bf16.msra.mxu0 %v682
  %1952 = vmatprep.subr.bf16.mxu0 %v687
  %1953 = vmatpush1.bf16.msra.mxu0 %v686
  %1954 = vmatprep.subr.bf16.mxu0 %v691
  %1955 = vmatpush1.bf16.msra.mxu0 %v690
  %1956 = vmatprep.subr.bf16.mxu0 %v695
  %1957 = vmatpush1.bf16.msra.mxu0 %v694
  %1958 = vmatprep.subr.bf16.mxu0 %v699
  %1959 = vmatpush1.bf16.msra.mxu0 %v698
  %1960 = vmatprep.subr.bf16.mxu0 %v703
  %1961 = vmatpush1.bf16.msra.mxu0 %v702
  %1962 = vmatprep.subr.bf16.mxu0 %v707
  %1963 = vmatpush1.bf16.msra.mxu0 %v706
  %1964 = vmatprep.subr.bf16.mxu0 %v711
  %1965 = vmatpush1.bf16.msra.mxu0 %v710
  %1966 = vmatprep.mubr.bf16.mxu0 %v1890
  %1967 = vmatmul.mubr.bf16.gmra.mrb[0].mxu0 %v1889
  %v1968 = vpop.f32.mrb[0].mxu0
  %v1969 = vadd.f32 %v143, %v1968
  %v1970 = vpop.f32.mrb[0].mxu0
  %v1971 = vadd.f32 %v147, %v1970
  %v1972 = vpop.f32.mrb[0].mxu0
  %v1973 = vpop.f32.mrb[0].mxu0
  %1974 = vdwg.mxu0
  %v1975 = vxor.u32 %v1928, 2147483648
  %v1976 = vmul.f32 %v1975, 1.442695
  %v1977 = vpow.pop %v1976
  %v1978 = vadd.f32 %v1977, 1.0
  %v1979 = vrcp.pop %v1978
  %v1980 = vmul.f32 1.0, %v1979
  %v1981 = vxor.u32 %v1930, 2147483648
  %v1982 = vmul.f32 %v1981, 1.442695
  %v1983 = vpow.pop %v1982
  %v1984 = vadd.f32 %v1983, 1.0
  %v1985 = vrcp.pop %v1984
  %v1986 = vmul.f32 1.0, %v1985
  %v1987 = vtanh.pop %v1969
  %v1988 = vxor.u32 %v1971, 2147483648
  %v1989 = vmul.f32 %v1988, 1.442695
  %v1990 = vpow.pop %v1989
  %v1991 = vadd.f32 %v1990, 1.0
  %v1992 = vrcp.pop %v1991
  %v1993 = vmul.f32 1.0, %v1992
  %v1994 = vmul.f32 %v1986, %v1757
  %v1995 = vmul.f32 %v1980, %v1987
  %v1996 = vadd.f32 %v1994, %v1995
  %v1997 = vtanh.pop %v1996
  %v1998 = vmul.f32 %v1993, %v1997
  %v1999 = vld [vmem:[#allocation2 + $0xa0] sm:$0xff]
  %v2000 = vld [vmem:[#allocation2 + $0xa8] sm:$0xff]
  %v2001 = vld [vmem:[#allocation2 + $0xb0] sm:$0xff]
  %v2002 = vld [vmem:[#allocation2 + $0xb8] sm:$0xff]
  %2003 = vmatprep.subr.bf16.mxu0 %v983
  %2004 = vmatpush1.bf16.msra.mxu0 %v982
  %2005 = vmatprep.subr.bf16.mxu0 %v987
  %2006 = vmatpush1.bf16.msra.mxu0 %v986
  %2007 = vmatprep.subr.bf16.mxu0 %v991
  %2008 = vmatpush1.bf16.msra.mxu0 %v990
  %2009 = vmatprep.subr.bf16.mxu0 %v995
  %2010 = vmatpush1.bf16.msra.mxu0 %v994
  %2011 = vmatprep.subr.bf16.mxu0 %v999
  %2012 = vmatpush1.bf16.msra.mxu0 %v998
  %2013 = vmatprep.subr.bf16.mxu0 %v1003
  %2014 = vmatpush1.bf16.msra.mxu0 %v1002
  %2015 = vmatprep.subr.bf16.mxu0 %v1007
  %2016 = vmatpush1.bf16.msra.mxu0 %v1006
  %2017 = vmatprep.subr.bf16.mxu0 %v1011
  %2018 = vmatpush1.bf16.msra.mxu0 %v1010
  %2019 = vmatprep.subr.bf16.mxu0 0
  %2020 = vmatpush1.bf16.msra.mxu0 0
  %2021 = vmatprep.subr.bf16.mxu0 0
  %2022 = vmatpush1.bf16.msra.mxu0 0
  %2023 = vmatprep.subr.bf16.mxu0 0
  %2024 = vmatpush1.bf16.msra.mxu0 0
  %2025 = vmatprep.subr.bf16.mxu0 0
  %2026 = vmatpush1.bf16.msra.mxu0 0
  %2027 = vmatprep.subr.bf16.mxu0 0
  %2028 = vmatpush1.bf16.msra.mxu0 0
  %2029 = vmatprep.subr.bf16.mxu0 0
  %2030 = vmatpush1.bf16.msra.mxu0 0
  %2031 = vmatprep.subr.bf16.mxu0 0
  %2032 = vmatpush1.bf16.msra.mxu0 0
  %2033 = vmatprep.subr.bf16.mxu0 0
  %2034 = vmatpush1.bf16.msra.mxu0 0
  %2035 = vmatprep.mubr.bf16.mxu0 0
  %2036 = vmatmul.mubr.bf16.gmra.mrb[0].mxu0 %v1885
  %v2037 = vpop.f32.mrb[0].mxu0
  %v2038 = vadd.f32 0.0, %v2037
  %v2039 = vpop.f32.mrb[0].mxu0
  %v2040 = vadd.f32 0.0, %v2039
  %v2041 = vpop.f32.mrb[0].mxu0
  %v2042 = vpop.f32.mrb[0].mxu0
  %2043 = vdwg.mxu0
  %2044 = vmatprep.subr.bf16.mxu0 %v985
  %2045 = vmatpush1.bf16.msra.mxu0 %v984
  %2046 = vmatprep.subr.bf16.mxu0 %v989
  %2047 = vmatpush1.bf16.msra.mxu0 %v988
  %2048 = vmatprep.subr.bf16.mxu0 %v993
  %2049 = vmatpush1.bf16.msra.mxu0 %v992
  %2050 = vmatprep.subr.bf16.mxu0 %v997
  %2051 = vmatpush1.bf16.msra.mxu0 %v996
  %2052 = vmatprep.subr.bf16.mxu0 %v1001
  %2053 = vmatpush1.bf16.msra.mxu0 %v1000
  %2054 = vmatprep.subr.bf16.mxu0 %v1005
  %2055 = vmatpush1.bf16.msra.mxu0 %v1004
  %2056 = vmatprep.subr.bf16.mxu0 %v1009
  %2057 = vmatpush1.bf16.msra.mxu0 %v1008
  %2058 = vmatprep.subr.bf16.mxu0 %v1013
  %2059 = vmatpush1.bf16.msra.mxu0 %v1012
  %2060 = vmatprep.subr.bf16.mxu0 0
  %2061 = vmatpush1.bf16.msra.mxu0 0
  %2062 = vmatprep.subr.bf16.mxu0 0
  %2063 = vmatpush1.bf16.msra.mxu0 0
  %2064 = vmatprep.subr.bf16.mxu0 0
  %2065 = vmatpush1.bf16.msra.mxu0 0
  %2066 = vmatprep.subr.bf16.mxu0 0
  %2067 = vmatpush1.bf16.msra.mxu0 0
  %2068 = vmatprep.subr.bf16.mxu0 0
  %2069 = vmatpush1.bf16.msra.mxu0 0
  %2070 = vmatprep.subr.bf16.mxu0 0
  %2071 = vmatpush1.bf16.msra.mxu0 0
  %2072 = vmatprep.subr.bf16.mxu0 0
  %2073 = vmatpush1.bf16.msra.mxu0 0
  %2074 = vmatprep.subr.bf16.mxu0 0
  %2075 = vmatpush1.bf16.msra.mxu0 0
  %2076 = vmatprep.mubr.bf16.mxu0 0
  %2077 = vmatmul.mubr.bf16.gmra.mrb[0].mxu0 %v1885
  %v2078 = vpop.f32.mrb[0].mxu0
  %v2079 = vadd.f32 0.0, %v2078
  %v2080 = vpop.f32.mrb[0].mxu0
  %v2081 = vadd.f32 0.0, %v2080
  %v2082 = vpop.f32.mrb[0].mxu0
  %v2083 = vpop.f32.mrb[0].mxu0
  %2084 = vdwg.mxu0
  %v2085 = vadd.f32 %v1999, %v2038
  %v2086 = vadd.f32 %v2000, %v2040
  %v2087 = vadd.f32 %v2001, %v2079
  %v2088 = vadd.f32 %v2002, %v2081
  %v2089 = vxor.u32 %v2085, 2147483648
  %v2090 = vmul.f32 %v2089, 1.442695
  %v2091 = vpow.pop %v2090
  %v2092 = vadd.f32 %v2091, 1.0
  %v2093 = vrcp.pop %v2092
  %v2094 = vmul.f32 1.0, %v2093
  %v2095 = vxor.u32 %v2086, 2147483648
  %v2096 = vmul.f32 %v2095, 1.442695
  %v2097 = vpow.pop %v2096
  %v2098 = vadd.f32 %v2097, 1.0
  %v2099 = vrcp.pop %v2098
  %v2100 = vmul.f32 1.0, %v2099
  %v2101 = vtanh.pop %v2087
  %v2102 = vxor.u32 %v2088, 2147483648
  %v2103 = vmul.f32 %v2102, 1.442695
  %v2104 = vpow.pop %v2103
  %v2105 = vadd.f32 %v2104, 1.0
  %v2106 = vrcp.pop %v2105
  %v2107 = vmul.f32 1.0, %v2106
  %v2108 = vmul.f32 %v2100, %v1871
  %v2109 = vmul.f32 %v2094, %v2101
  %v2110 = vadd.f32 %v2108, %v2109
  %v2111 = vtanh.pop %v2110
  %v2112 = vmul.f32 %v2107, %v2111
  %v2113 = vpack.c.bf16 %v2112, %v2112
  %2114 = vst [vmem:[#allocation3] sm:$0xf] %v2113
  %vm2115 = vcmp.eq.s32.totalorder %v1158, 4
  %v2116 = vsel %vm2115, 1, 0
  %2117 = vset.pattern.permute.xlu0 0
  %2118 = vperm.xlu0 %2117, %v2116
  %v2119 = vpop.permute.xlu0 %2118
  %vm2120 = vcmp.eq.s32.totalorder %v2119, 1
  %v2121 = vsel %vm2120, %v1998, %v1882
  %v2122 = vpack.c.bf16 %v1998, %v1998
  %2123 = vst [vmem:[#allocation3 + $0x4] sm:$0xf] %v2122
  %v2124 = vld [vmem:[#allocation3] sm:$0xff]
  %v2126 = vunpack.c.l.b16 %v2124
  %v2127 = vunpack.c.h.b16 %v2124
  %v2128 = vpack.c.b16 %v2126, %v2126
  %v2129 = vpack.c.b16 %v2127, %v2127
  %2132 = vmatprep.subr.bf16.mxu0 %v649
  %2133 = vmatpush1.bf16.msra.mxu0 %v648
  %2134 = vmatprep.subr.bf16.mxu0 %v653
  %2135 = vmatpush1.bf16.msra.mxu0 %v652
  %2136 = vmatprep.subr.bf16.mxu0 %v657
  %2137 = vmatpush1.bf16.msra.mxu0 %v656
  %2138 = vmatprep.subr.bf16.mxu0 %v661
  %2139 = vmatpush1.bf16.msra.mxu0 %v660
  %2140 = vmatprep.subr.bf16.mxu0 %v665
  %2141 = vmatpush1.bf16.msra.mxu0 %v664
  %2142 = vmatprep.subr.bf16.mxu0 %v669
  %2143 = vmatpush1.bf16.msra.mxu0 %v668
  %2144 = vmatprep.subr.bf16.mxu0 %v673
  %2145 = vmatpush1.bf16.msra.mxu0 %v672
  %2146 = vmatprep.subr.bf16.mxu0 %v677
  %2147 = vmatpush1.bf16.msra.mxu0 %v676
  %2148 = vmatprep.subr.bf16.mxu0 %v681
  %2149 = vmatpush1.bf16.msra.mxu0 %v680
  %2150 = vmatprep.subr.bf16.mxu0 %v685
  %2151 = vmatpush1.bf16.msra.mxu0 %v684
  %2152 = vmatprep.subr.bf16.mxu0 %v689
  %2153 = vmatpush1.bf16.msra.mxu0 %v688
  %2154 = vmatprep.subr.bf16.mxu0 %v693
  %2155 = vmatpush1.bf16.msra.mxu0 %v692
  %2156 = vmatprep.subr.bf16.mxu0 %v697
  %2157 = vmatpush1.bf16.msra.mxu0 %v696
  %2158 = vmatprep.subr.bf16.mxu0 %v701
  %2159 = vmatpush1.bf16.msra.mxu0 %v700
  %2160 = vmatprep.subr.bf16.mxu0 %v705
  %2161 = vmatpush1.bf16.msra.mxu0 %v704
  %2162 = vmatprep.subr.bf16.mxu0 %v709
  %2163 = vmatpush1.bf16.msra.mxu0 %v708
  %2164 = vmatprep.mubr.bf16.mxu0 %v2129
  %2165 = vmatmul.mubr.bf16.gmra.mrb[0].mxu0 %v2128
  %v2166 = vpop.f32.mrb[0].mxu0
  %v2167 = vadd.f32 %v135, %v2166
  %v2168 = vpop.f32.mrb[0].mxu0
  %v2169 = vadd.f32 %v139, %v2168
  %v2170 = vpop.f32.mrb[0].mxu0
  %v2171 = vpop.f32.mrb[0].mxu0
  %2172 = vdwg.mxu0
  %2173 = vmatprep.subr.bf16.mxu0 %v651
  %2174 = vmatpush1.bf16.msra.mxu0 %v650
  %2175 = vmatprep.subr.bf16.mxu0 %v655
  %2176 = vmatpush1.bf16.msra.mxu0 %v654
  %2177 = vmatprep.subr.bf16.mxu0 %v659
  %2178 = vmatpush1.bf16.msra.mxu0 %v658
  %2179 = vmatprep.subr.bf16.mxu0 %v663
  %2180 = vmatpush1.bf16.msra.mxu0 %v662
  %2181 = vmatprep.subr.bf16.mxu0 %v667
  %2182 = vmatpush1.bf16.msra.mxu0 %v666
  %2183 = vmatprep.subr.bf16.mxu0 %v671
  %2184 = vmatpush1.bf16.msra.mxu0 %v670
  %2185 = vmatprep.subr.bf16.mxu0 %v675
  %2186 = vmatpush1.bf16.msra.mxu0 %v674
  %2187 = vmatprep.subr.bf16.mxu0 %v679
  %2188 = vmatpush1.bf16.msra.mxu0 %v678
  %2189 = vmatprep.subr.bf16.mxu0 %v683
  %2190 = vmatpush1.bf16.msra.mxu0 %v682
  %2191 = vmatprep.subr.bf16.mxu0 %v687
  %2192 = vmatpush1.bf16.msra.mxu0 %v686
  %2193 = vmatprep.subr.bf16.mxu0 %v691
  %2194 = vmatpush1.bf16.msra.mxu0 %v690
  %2195 = vmatprep.subr.bf16.mxu0 %v695
  %2196 = vmatpush1.bf16.msra.mxu0 %v694
  %2197 = vmatprep.subr.bf16.mxu0 %v699
  %2198 = vmatpush1.bf16.msra.mxu0 %v698
  %2199 = vmatprep.subr.bf16.mxu0 %v703
  %2200 = vmatpush1.bf16.msra.mxu0 %v702
  %2201 = vmatprep.subr.bf16.mxu0 %v707
  %2202 = vmatpush1.bf16.msra.mxu0 %v706
  %2203 = vmatprep.subr.bf16.mxu0 %v711
  %2204 = vmatpush1.bf16.msra.mxu0 %v710
  %2205 = vmatprep.mubr.bf16.mxu0 %v2129
  %2206 = vmatmul.mubr.bf16.gmra.mrb[0].mxu0 %v2128
  %v2207 = vpop.f32.mrb[0].mxu0
  %v2208 = vadd.f32 %v143, %v2207
  %v2209 = vpop.f32.mrb[0].mxu0
  %v2210 = vadd.f32 %v147, %v2209
  %v2211 = vpop.f32.mrb[0].mxu0
  %v2212 = vpop.f32.mrb[0].mxu0
  %2213 = vdwg.mxu0
  %v2214 = vxor.u32 %v2167, 2147483648
  %v2215 = vmul.f32 %v2214, 1.442695
  %v2216 = vpow.pop %v2215
  %v2217 = vadd.f32 %v2216, 1.0
  %v2218 = vrcp.pop %v2217
  %v2219 = vmul.f32 1.0, %v2218
  %v2220 = vxor.u32 %v2169, 2147483648
  %v2221 = vmul.f32 %v2220, 1.442695
  %v2222 = vpow.pop %v2221
  %v2223 = vadd.f32 %v2222, 1.0
  %v2224 = vrcp.pop %v2223
  %v2225 = vmul.f32 1.0, %v2224
  %v2226 = vtanh.pop %v2208
  %v2227 = vxor.u32 %v2210, 2147483648
  %v2228 = vmul.f32 %v2227, 1.442695
  %v2229 = vpow.pop %v2228
  %v2230 = vadd.f32 %v2229, 1.0
  %v2231 = vrcp.pop %v2230
  %v2232 = vmul.f32 1.0, %v2231
  %v2233 = vmul.f32 %v2225, %v1996
  %v2234 = vmul.f32 %v2219, %v2226
  %v2235 = vadd.f32 %v2233, %v2234
  %v2236 = vtanh.pop %v2235
  %v2237 = vmul.f32 %v2232, %v2236
  %v2238 = vld [vmem:[#allocation2 + $0xc0] sm:$0xff]
  %v2239 = vld [vmem:[#allocation2 + $0xc8] sm:$0xff]
  %v2240 = vld [vmem:[#allocation2 + $0xd0] sm:$0xff]
  %v2241 = vld [vmem:[#allocation2 + $0xd8] sm:$0xff]
  %2242 = vmatprep.subr.bf16.mxu0 %v983
  %2243 = vmatpush1.bf16.msra.mxu0 %v982
  %2244 = vmatprep.subr.bf16.mxu0 %v987
  %2245 = vmatpush1.bf16.msra.mxu0 %v986
  %2246 = vmatprep.subr.bf16.mxu0 %v991
  %2247 = vmatpush1.bf16.msra.mxu0 %v990
  %2248 = vmatprep.subr.bf16.mxu0 %v995
  %2249 = vmatpush1.bf16.msra.mxu0 %v994
  %2250 = vmatprep.subr.bf16.mxu0 %v999
  %2251 = vmatpush1.bf16.msra.mxu0 %v998
  %2252 = vmatprep.subr.bf16.mxu0 %v1003
  %2253 = vmatpush1.bf16.msra.mxu0 %v1002
  %2254 = vmatprep.subr.bf16.mxu0 %v1007
  %2255 = vmatpush1.bf16.msra.mxu0 %v1006
  %2256 = vmatprep.subr.bf16.mxu0 %v1011
  %2257 = vmatpush1.bf16.msra.mxu0 %v1010
  %2258 = vmatprep.subr.bf16.mxu0 0
  %2259 = vmatpush1.bf16.msra.mxu0 0
  %2260 = vmatprep.subr.bf16.mxu0 0
  %2261 = vmatpush1.bf16.msra.mxu0 0
  %2262 = vmatprep.subr.bf16.mxu0 0
  %2263 = vmatpush1.bf16.msra.mxu0 0
  %2264 = vmatprep.subr.bf16.mxu0 0
  %2265 = vmatpush1.bf16.msra.mxu0 0
  %2266 = vmatprep.subr.bf16.mxu0 0
  %2267 = vmatpush1.bf16.msra.mxu0 0
  %2268 = vmatprep.subr.bf16.mxu0 0
  %2269 = vmatpush1.bf16.msra.mxu0 0
  %2270 = vmatprep.subr.bf16.mxu0 0
  %2271 = vmatpush1.bf16.msra.mxu0 0
  %2272 = vmatprep.subr.bf16.mxu0 0
  %2273 = vmatpush1.bf16.msra.mxu0 0
  %2274 = vmatprep.mubr.bf16.mxu0 0
  %2275 = vmatmul.mubr.bf16.gmra.mrb[0].mxu0 %v2124
  %v2276 = vpop.f32.mrb[0].mxu0
  %v2277 = vadd.f32 0.0, %v2276
  %v2278 = vpop.f32.mrb[0].mxu0
  %v2279 = vadd.f32 0.0, %v2278
  %v2280 = vpop.f32.mrb[0].mxu0
  %v2281 = vpop.f32.mrb[0].mxu0
  %2282 = vdwg.mxu0
  %2283 = vmatprep.subr.bf16.mxu0 %v985
  %2284 = vmatpush1.bf16.msra.mxu0 %v984
  %2285 = vmatprep.subr.bf16.mxu0 %v989
  %2286 = vmatpush1.bf16.msra.mxu0 %v988
  %2287 = vmatprep.subr.bf16.mxu0 %v993
  %2288 = vmatpush1.bf16.msra.mxu0 %v992
  %2289 = vmatprep.subr.bf16.mxu0 %v997
  %2290 = vmatpush1.bf16.msra.mxu0 %v996
  %2291 = vmatprep.subr.bf16.mxu0 %v1001
  %2292 = vmatpush1.bf16.msra.mxu0 %v1000
  %2293 = vmatprep.subr.bf16.mxu0 %v1005
  %2294 = vmatpush1.bf16.msra.mxu0 %v1004
  %2295 = vmatprep.subr.bf16.mxu0 %v1009
  %2296 = vmatpush1.bf16.msra.mxu0 %v1008
  %2297 = vmatprep.subr.bf16.mxu0 %v1013
  %2298 = vmatpush1.bf16.msra.mxu0 %v1012
  %2299 = vmatprep.subr.bf16.mxu0 0
  %2300 = vmatpush1.bf16.msra.mxu0 0
  %2301 = vmatprep.subr.bf16.mxu0 0
  %2302 = vmatpush1.bf16.msra.mxu0 0
  %2303 = vmatprep.subr.bf16.mxu0 0
  %2304 = vmatpush1.bf16.msra.mxu0 0
  %2305 = vmatprep.subr.bf16.mxu0 0
  %2306 = vmatpush1.bf16.msra.mxu0 0
  %2307 = vmatprep.subr.bf16.mxu0 0
  %2308 = vmatpush1.bf16.msra.mxu0 0
  %2309 = vmatprep.subr.bf16.mxu0 0
  %2310 = vmatpush1.bf16.msra.mxu0 0
  %2311 = vmatprep.subr.bf16.mxu0 0
  %2312 = vmatpush1.bf16.msra.mxu0 0
  %2313 = vmatprep.subr.bf16.mxu0 0
  %2314 = vmatpush1.bf16.msra.mxu0 0
  %2315 = vmatprep.mubr.bf16.mxu0 0
  %2316 = vmatmul.mubr.bf16.gmra.mrb[0].mxu0 %v2124
  %v2317 = vpop.f32.mrb[0].mxu0
  %v2318 = vadd.f32 0.0, %v2317
  %v2319 = vpop.f32.mrb[0].mxu0
  %v2320 = vadd.f32 0.0, %v2319
  %v2321 = vpop.f32.mrb[0].mxu0
  %v2322 = vpop.f32.mrb[0].mxu0
  %2323 = vdwg.mxu0
  %v2324 = vadd.f32 %v2238, %v2277
  %v2325 = vadd.f32 %v2239, %v2279
  %v2326 = vadd.f32 %v2240, %v2318
  %v2327 = vadd.f32 %v2241, %v2320
  %v2328 = vxor.u32 %v2324, 2147483648
  %v2329 = vmul.f32 %v2328, 1.442695
  %v2330 = vpow.pop %v2329
  %v2331 = vadd.f32 %v2330, 1.0
  %v2332 = vrcp.pop %v2331
  %v2333 = vmul.f32 1.0, %v2332
  %v2334 = vxor.u32 %v2325, 2147483648
  %v2335 = vmul.f32 %v2334, 1.442695
  %v2336 = vpow.pop %v2335
  %v2337 = vadd.f32 %v2336, 1.0
  %v2338 = vrcp.pop %v2337
  %v2339 = vmul.f32 1.0, %v2338
  %v2340 = vtanh.pop %v2326
  %v2341 = vxor.u32 %v2327, 2147483648
  %v2342 = vmul.f32 %v2341, 1.442695
  %v2343 = vpow.pop %v2342
  %v2344 = vadd.f32 %v2343, 1.0
  %v2345 = vrcp.pop %v2344
  %v2346 = vmul.f32 1.0, %v2345
  %v2347 = vmul.f32 %v2339, %v2110
  %v2348 = vmul.f32 %v2333, %v2340
  %v2349 = vadd.f32 %v2347, %v2348
  %v2350 = vtanh.pop %v2349
  %v2351 = vmul.f32 %v2346, %v2350
  %v2352 = vpack.c.bf16 %v2351, %v2351
  %2353 = vst [vmem:[#allocation3] sm:$0xf] %v2352
  %vm2354 = vcmp.eq.s32.totalorder %v1158, 5
  %v2355 = vsel %vm2354, 1, 0
  %2356 = vset.pattern.permute.xlu0 0
  %2357 = vperm.xlu0 %2356, %v2355
  %v2358 = vpop.permute.xlu0 %2357
  %vm2359 = vcmp.eq.s32.totalorder %v2358, 1
  %v2360 = vsel %vm2359, %v2237, %v2121
  %v2361 = vpack.c.bf16 %v2237, %v2237
  %2362 = vst [vmem:[#allocation3 + $0x4] sm:$0xf] %v2361
  %v2363 = vld [vmem:[#allocation3] sm:$0xff]
  %v2365 = vunpack.c.l.b16 %v2363
  %v2366 = vunpack.c.h.b16 %v2363
  %v2367 = vpack.c.b16 %v2365, %v2365
  %v2368 = vpack.c.b16 %v2366, %v2366
  %2371 = vmatprep.subr.bf16.mxu0 %v649
  %2372 = vmatpush1.bf16.msra.mxu0 %v648
  %2373 = vmatprep.subr.bf16.mxu0 %v653
  %2374 = vmatpush1.bf16.msra.mxu0 %v652
  %2375 = vmatprep.subr.bf16.mxu0 %v657
  %2376 = vmatpush1.bf16.msra.mxu0 %v656
  %2377 = vmatprep.subr.bf16.mxu0 %v661
  %2378 = vmatpush1.bf16.msra.mxu0 %v660
  %2379 = vmatprep.subr.bf16.mxu0 %v665
  %2380 = vmatpush1.bf16.msra.mxu0 %v664
  %2381 = vmatprep.subr.bf16.mxu0 %v669
  %2382 = vmatpush1.bf16.msra.mxu0 %v668
  %2383 = vmatprep.subr.bf16.mxu0 %v673
  %2384 = vmatpush1.bf16.msra.mxu0 %v672
  %2385 = vmatprep.subr.bf16.mxu0 %v677
  %2386 = vmatpush1.bf16.msra.mxu0 %v676
  %2387 = vmatprep.subr.bf16.mxu0 %v681
  %2388 = vmatpush1.bf16.msra.mxu0 %v680
  %2389 = vmatprep.subr.bf16.mxu0 %v685
  %2390 = vmatpush1.bf16.msra.mxu0 %v684
  %2391 = vmatprep.subr.bf16.mxu0 %v689
  %2392 = vmatpush1.bf16.msra.mxu0 %v688
  %2393 = vmatprep.subr.bf16.mxu0 %v693
  %2394 = vmatpush1.bf16.msra.mxu0 %v692
  %2395 = vmatprep.subr.bf16.mxu0 %v697
  %2396 = vmatpush1.bf16.msra.mxu0 %v696
  %2397 = vmatprep.subr.bf16.mxu0 %v701
  %2398 = vmatpush1.bf16.msra.mxu0 %v700
  %2399 = vmatprep.subr.bf16.mxu0 %v705
  %2400 = vmatpush1.bf16.msra.mxu0 %v704
  %2401 = vmatprep.subr.bf16.mxu0 %v709
  %2402 = vmatpush1.bf16.msra.mxu0 %v708
  %2403 = vmatprep.mubr.bf16.mxu0 %v2368
  %2404 = vmatmul.mubr.bf16.gmra.mrb[0].mxu0 %v2367
  %v2405 = vpop.f32.mrb[0].mxu0
  %v2406 = vadd.f32 %v135, %v2405
  %v2407 = vpop.f32.mrb[0].mxu0
  %v2408 = vadd.f32 %v139, %v2407
  %v2409 = vpop.f32.mrb[0].mxu0
  %v2410 = vpop.f32.mrb[0].mxu0
  %2411 = vdwg.mxu0
  %2412 = vmatprep.subr.bf16.mxu0 %v651
  %2413 = vmatpush1.bf16.msra.mxu0 %v650
  %2414 = vmatprep.subr.bf16.mxu0 %v655
  %2415 = vmatpush1.bf16.msra.mxu0 %v654
  %2416 = vmatprep.subr.bf16.mxu0 %v659
  %2417 = vmatpush1.bf16.msra.mxu0 %v658
  %2418 = vmatprep.subr.bf16.mxu0 %v663
  %2419 = vmatpush1.bf16.msra.mxu0 %v662
  %2420 = vmatprep.subr.bf16.mxu0 %v667
  %2421 = vmatpush1.bf16.msra.mxu0 %v666
  %2422 = vmatprep.subr.bf16.mxu0 %v671
  %2423 = vmatpush1.bf16.msra.mxu0 %v670
  %2424 = vmatprep.subr.bf16.mxu0 %v675
  %2425 = vmatpush1.bf16.msra.mxu0 %v674
  %2426 = vmatprep.subr.bf16.mxu0 %v679
  %2427 = vmatpush1.bf16.msra.mxu0 %v678
  %2428 = vmatprep.subr.bf16.mxu0 %v683
  %2429 = vmatpush1.bf16.msra.mxu0 %v682
  %2430 = vmatprep.subr.bf16.mxu0 %v687
  %2431 = vmatpush1.bf16.msra.mxu0 %v686
  %2432 = vmatprep.subr.bf16.mxu0 %v691
  %2433 = vmatpush1.bf16.msra.mxu0 %v690
  %2434 = vmatprep.subr.bf16.mxu0 %v695
  %2435 = vmatpush1.bf16.msra.mxu0 %v694
  %2436 = vmatprep.subr.bf16.mxu0 %v699
  %2437 = vmatpush1.bf16.msra.mxu0 %v698
  %2438 = vmatprep.subr.bf16.mxu0 %v703
  %2439 = vmatpush1.bf16.msra.mxu0 %v702
  %2440 = vmatprep.subr.bf16.mxu0 %v707
  %2441 = vmatpush1.bf16.msra.mxu0 %v706
  %2442 = vmatprep.subr.bf16.mxu0 %v711
  %2443 = vmatpush1.bf16.msra.mxu0 %v710
  %2444 = vmatprep.mubr.bf16.mxu0 %v2368
  %2445 = vmatmul.mubr.bf16.gmra.mrb[0].mxu0 %v2367
  %v2446 = vpop.f32.mrb[0].mxu0
  %v2447 = vadd.f32 %v143, %v2446
  %v2448 = vpop.f32.mrb[0].mxu0
  %v2449 = vadd.f32 %v147, %v2448
  %v2450 = vpop.f32.mrb[0].mxu0
  %v2451 = vpop.f32.mrb[0].mxu0
  %2452 = vdwg.mxu0
  %v2453 = vxor.u32 %v2406, 2147483648
  %v2454 = vmul.f32 %v2453, 1.442695
  %v2455 = vpow.pop %v2454
  %v2456 = vadd.f32 %v2455, 1.0
  %v2457 = vrcp.pop %v2456
  %v2458 = vmul.f32 1.0, %v2457
  %v2459 = vxor.u32 %v2408, 2147483648
  %v2460 = vmul.f32 %v2459, 1.442695
  %v2461 = vpow.pop %v2460
  %v2462 = vadd.f32 %v2461, 1.0
  %v2463 = vrcp.pop %v2462
  %v2464 = vmul.f32 1.0, %v2463
  %v2465 = vtanh.pop %v2447
  %v2466 = vxor.u32 %v2449, 2147483648
  %v2467 = vmul.f32 %v2466, 1.442695
  %v2468 = vpow.pop %v2467
  %v2469 = vadd.f32 %v2468, 1.0
  %v2470 = vrcp.pop %v2469
  %v2471 = vmul.f32 1.0, %v2470
  %v2472 = vmul.f32 %v2464, %v2235
  %v2473 = vmul.f32 %v2458, %v2465
  %v2474 = vadd.f32 %v2472, %v2473
  %v2475 = vtanh.pop %v2474
  %v2476 = vmul.f32 %v2471, %v2475
  %v2477 = vld [vmem:[#allocation2 + $0xe0] sm:$0xff]
  %v2478 = vld [vmem:[#allocation2 + $0xe8] sm:$0xff]
  %v2479 = vld [vmem:[#allocation2 + $0xf0] sm:$0xff]
  %v2480 = vld [vmem:[#allocation2 + $0xf8] sm:$0xff]
  %2481 = vmatprep.subr.bf16.mxu0 %v983
  %2482 = vmatpush1.bf16.msra.mxu0 %v982
  %2483 = vmatprep.subr.bf16.mxu0 %v987
  %2484 = vmatpush1.bf16.msra.mxu0 %v986
  %2485 = vmatprep.subr.bf16.mxu0 %v991
  %2486 = vmatpush1.bf16.msra.mxu0 %v990
  %2487 = vmatprep.subr.bf16.mxu0 %v995
  %2488 = vmatpush1.bf16.msra.mxu0 %v994
  %2489 = vmatprep.subr.bf16.mxu0 %v999
  %2490 = vmatpush1.bf16.msra.mxu0 %v998
  %2491 = vmatprep.subr.bf16.mxu0 %v1003
  %2492 = vmatpush1.bf16.msra.mxu0 %v1002
  %2493 = vmatprep.subr.bf16.mxu0 %v1007
  %2494 = vmatpush1.bf16.msra.mxu0 %v1006
  %2495 = vmatprep.subr.bf16.mxu0 %v1011
  %2496 = vmatpush1.bf16.msra.mxu0 %v1010
  %2497 = vmatprep.subr.bf16.mxu0 0
  %2498 = vmatpush1.bf16.msra.mxu0 0
  %2499 = vmatprep.subr.bf16.mxu0 0
  %2500 = vmatpush1.bf16.msra.mxu0 0
  %2501 = vmatprep.subr.bf16.mxu0 0
  %2502 = vmatpush1.bf16.msra.mxu0 0
  %2503 = vmatprep.subr.bf16.mxu0 0
  %2504 = vmatpush1.bf16.msra.mxu0 0
  %2505 = vmatprep.subr.bf16.mxu0 0
  %2506 = vmatpush1.bf16.msra.mxu0 0
  %2507 = vmatprep.subr.bf16.mxu0 0
  %2508 = vmatpush1.bf16.msra.mxu0 0
  %2509 = vmatprep.subr.bf16.mxu0 0
  %2510 = vmatpush1.bf16.msra.mxu0 0
  %2511 = vmatprep.subr.bf16.mxu0 0
  %2512 = vmatpush1.bf16.msra.mxu0 0
  %2513 = vmatprep.mubr.bf16.mxu0 0
  %2514 = vmatmul.mubr.bf16.gmra.mrb[0].mxu0 %v2363
  %v2515 = vpop.f32.mrb[0].mxu0
  %v2516 = vadd.f32 0.0, %v2515
  %v2517 = vpop.f32.mrb[0].mxu0
  %v2518 = vadd.f32 0.0, %v2517
  %v2519 = vpop.f32.mrb[0].mxu0
  %v2520 = vpop.f32.mrb[0].mxu0
  %2521 = vdwg.mxu0
  %2522 = vmatprep.subr.bf16.mxu0 %v985
  %2523 = vmatpush1.bf16.msra.mxu0 %v984
  %2524 = vmatprep.subr.bf16.mxu0 %v989
  %2525 = vmatpush1.bf16.msra.mxu0 %v988
  %2526 = vmatprep.subr.bf16.mxu0 %v993
  %2527 = vmatpush1.bf16.msra.mxu0 %v992
  %2528 = vmatprep.subr.bf16.mxu0 %v997
  %2529 = vmatpush1.bf16.msra.mxu0 %v996
  %2530 = vmatprep.subr.bf16.mxu0 %v1001
  %2531 = vmatpush1.bf16.msra.mxu0 %v1000
  %2532 = vmatprep.subr.bf16.mxu0 %v1005
  %2533 = vmatpush1.bf16.msra.mxu0 %v1004
  %2534 = vmatprep.subr.bf16.mxu0 %v1009
  %2535 = vmatpush1.bf16.msra.mxu0 %v1008
  %2536 = vmatprep.subr.bf16.mxu0 %v1013
  %2537 = vmatpush1.bf16.msra.mxu0 %v1012
  %2538 = vmatprep.subr.bf16.mxu0 0
  %2539 = vmatpush1.bf16.msra.mxu0 0
  %2540 = vmatprep.subr.bf16.mxu0 0
  %2541 = vmatpush1.bf16.msra.mxu0 0
  %2542 = vmatprep.subr.bf16.mxu0 0
  %2543 = vmatpush1.bf16.msra.mxu0 0
  %2544 = vmatprep.subr.bf16.mxu0 0
  %2545 = vmatpush1.bf16.msra.mxu0 0
  %2546 = vmatprep.subr.bf16.mxu0 0
  %2547 = vmatpush1.bf16.msra.mxu0 0
  %2548 = vmatprep.subr.bf16.mxu0 0
  %2549 = vmatpush1.bf16.msra.mxu0 0
  %2550 = vmatprep.subr.bf16.mxu0 0
  %2551 = vmatpush1.bf16.msra.mxu0 0
  %2552 = vmatprep.subr.bf16.mxu0 0
  %2553 = vmatpush1.bf16.msra.mxu0 0
  %2554 = vmatprep.mubr.bf16.mxu0 0
  %2555 = vmatmul.mubr.bf16.gmra.mrb[0].mxu0 %v2363
  %v2556 = vpop.f32.mrb[0].mxu0
  %v2557 = vadd.f32 0.0, %v2556
  %v2558 = vpop.f32.mrb[0].mxu0
  %v2559 = vadd.f32 0.0, %v2558
  %v2560 = vpop.f32.mrb[0].mxu0
  %v2561 = vpop.f32.mrb[0].mxu0
  %2562 = vdwg.mxu0
  %v2563 = vadd.f32 %v2477, %v2516
  %v2564 = vadd.f32 %v2478, %v2518
  %v2565 = vadd.f32 %v2479, %v2557
  %v2566 = vadd.f32 %v2480, %v2559
  %v2567 = vxor.u32 %v2563, 2147483648
  %v2568 = vmul.f32 %v2567, 1.442695
  %v2569 = vpow.pop %v2568
  %v2570 = vadd.f32 %v2569, 1.0
  %v2571 = vrcp.pop %v2570
  %v2572 = vmul.f32 1.0, %v2571
  %v2573 = vxor.u32 %v2564, 2147483648
  %v2574 = vmul.f32 %v2573, 1.442695
  %v2575 = vpow.pop %v2574
  %v2576 = vadd.f32 %v2575, 1.0
  %v2577 = vrcp.pop %v2576
  %v2578 = vmul.f32 1.0, %v2577
  %v2579 = vtanh.pop %v2565
  %v2580 = vxor.u32 %v2566, 2147483648
  %v2581 = vmul.f32 %v2580, 1.442695
  %v2582 = vpow.pop %v2581
  %v2583 = vadd.f32 %v2582, 1.0
  %v2584 = vrcp.pop %v2583
  %v2585 = vmul.f32 1.0, %v2584
  %v2586 = vmul.f32 %v2578, %v2349
  %v2587 = vmul.f32 %v2572, %v2579
  %v2588 = vadd.f32 %v2586, %v2587
  %v2589 = vtanh.pop %v2588
  %v2590 = vmul.f32 %v2585, %v2589
  %v2591 = vpack.c.bf16 %v2590, %v2590
  %2592 = vst [vmem:[#allocation3] sm:$0xf] %v2591
  %vm2593 = vcmp.eq.s32.totalorder %v1158, 6
  %v2594 = vsel %vm2593, 1, 0
  %2595 = vset.pattern.permute.xlu0 0
  %2596 = vperm.xlu0 %2595, %v2594
  %v2597 = vpop.permute.xlu0 %2596
  %vm2598 = vcmp.eq.s32.totalorder %v2597, 1
  %v2599 = vsel %vm2598, %v2476, %v2360
  %v2600 = vpack.c.bf16 %v2476, %v2476
  %2601 = vst [vmem:[#allocation3 + $0x4] sm:$0xf] %v2600
  %v2602 = vld [vmem:[#allocation3] sm:$0xff]
  %v2604 = vunpack.c.l.b16 %v2602
  %v2605 = vunpack.c.h.b16 %v2602
  %v2606 = vpack.c.b16 %v2604, %v2604
  %v2607 = vpack.c.b16 %v2605, %v2605
  %2610 = vmatprep.subr.bf16.mxu0 %v649
  %2611 = vmatpush1.bf16.msra.mxu0 %v648
  %2612 = vmatprep.subr.bf16.mxu0 %v653
  %2613 = vmatpush1.bf16.msra.mxu0 %v652
  %2614 = vmatprep.subr.bf16.mxu0 %v657
  %2615 = vmatpush1.bf16.msra.mxu0 %v656
  %2616 = vmatprep.subr.bf16.mxu0 %v661
  %2617 = vmatpush1.bf16.msra.mxu0 %v660
  %2618 = vmatprep.subr.bf16.mxu0 %v665
  %2619 = vmatpush1.bf16.msra.mxu0 %v664
  %2620 = vmatprep.subr.bf16.mxu0 %v669
  %2621 = vmatpush1.bf16.msra.mxu0 %v668
  %2622 = vmatprep.subr.bf16.mxu0 %v673
  %2623 = vmatpush1.bf16.msra.mxu0 %v672
  %2624 = vmatprep.subr.bf16.mxu0 %v677
  %2625 = vmatpush1.bf16.msra.mxu0 %v676
  %2626 = vmatprep.subr.bf16.mxu0 %v681
  %2627 = vmatpush1.bf16.msra.mxu0 %v680
  %2628 = vmatprep.subr.bf16.mxu0 %v685
  %2629 = vmatpush1.bf16.msra.mxu0 %v684
  %2630 = vmatprep.subr.bf16.mxu0 %v689
  %2631 = vmatpush1.bf16.msra.mxu0 %v688
  %2632 = vmatprep.subr.bf16.mxu0 %v693
  %2633 = vmatpush1.bf16.msra.mxu0 %v692
  %2634 = vmatprep.subr.bf16.mxu0 %v697
  %2635 = vmatpush1.bf16.msra.mxu0 %v696
  %2636 = vmatprep.subr.bf16.mxu0 %v701
  %2637 = vmatpush1.bf16.msra.mxu0 %v700
  %2638 = vmatprep.subr.bf16.mxu0 %v705
  %2639 = vmatpush1.bf16.msra.mxu0 %v704
  %2640 = vmatprep.subr.bf16.mxu0 %v709
  %2641 = vmatpush1.bf16.msra.mxu0 %v708
  %2642 = vmatprep.mubr.bf16.mxu0 %v2607
  %2643 = vmatmul.mubr.bf16.gmra.mrb[0].mxu0 %v2606
  %v2644 = vpop.f32.mrb[0].mxu0
  %v2645 = vadd.f32 %v135, %v2644
  %v2646 = vpop.f32.mrb[0].mxu0
  %v2647 = vadd.f32 %v139, %v2646
  %v2648 = vpop.f32.mrb[0].mxu0
  %v2649 = vpop.f32.mrb[0].mxu0
  %2650 = vdwg.mxu0
  %2651 = vmatprep.subr.bf16.mxu0 %v651
  %2652 = vmatpush1.bf16.msra.mxu0 %v650
  %2653 = vmatprep.subr.bf16.mxu0 %v655
  %2654 = vmatpush1.bf16.msra.mxu0 %v654
  %2655 = vmatprep.subr.bf16.mxu0 %v659
  %2656 = vmatpush1.bf16.msra.mxu0 %v658
  %2657 = vmatprep.subr.bf16.mxu0 %v663
  %2658 = vmatpush1.bf16.msra.mxu0 %v662
  %2659 = vmatprep.subr.bf16.mxu0 %v667
  %2660 = vmatpush1.bf16.msra.mxu0 %v666
  %2661 = vmatprep.subr.bf16.mxu0 %v671
  %2662 = vmatpush1.bf16.msra.mxu0 %v670
  %2663 = vmatprep.subr.bf16.mxu0 %v675
  %2664 = vmatpush1.bf16.msra.mxu0 %v674
  %2665 = vmatprep.subr.bf16.mxu0 %v679
  %2666 = vmatpush1.bf16.msra.mxu0 %v678
  %2667 = vmatprep.subr.bf16.mxu0 %v683
  %2668 = vmatpush1.bf16.msra.mxu0 %v682
  %2669 = vmatprep.subr.bf16.mxu0 %v687
  %2670 = vmatpush1.bf16.msra.mxu0 %v686
  %2671 = vmatprep.subr.bf16.mxu0 %v691
  %2672 = vmatpush1.bf16.msra.mxu0 %v690
  %2673 = vmatprep.subr.bf16.mxu0 %v695
  %2674 = vmatpush1.bf16.msra.mxu0 %v694
  %2675 = vmatprep.subr.bf16.mxu0 %v699
  %2676 = vmatpush1.bf16.msra.mxu0 %v698
  %2677 = vmatprep.subr.bf16.mxu0 %v703
  %2678 = vmatpush1.bf16.msra.mxu0 %v702
  %2679 = vmatprep.subr.bf16.mxu0 %v707
  %2680 = vmatpush1.bf16.msra.mxu0 %v706
  %2681 = vmatprep.subr.bf16.mxu0 %v711
  %2682 = vmatpush1.bf16.msra.mxu0 %v710
  %2683 = vmatprep.mubr.bf16.mxu0 %v2607
  %2684 = vmatmul.mubr.bf16.gmra.mrb[0].mxu0 %v2606
  %v2685 = vpop.f32.mrb[0].mxu0
  %v2686 = vadd.f32 %v143, %v2685
  %v2687 = vpop.f32.mrb[0].mxu0
  %v2688 = vadd.f32 %v147, %v2687
  %v2689 = vpop.f32.mrb[0].mxu0
  %v2690 = vpop.f32.mrb[0].mxu0
  %2691 = vdwg.mxu0
  %v2692 = vxor.u32 %v2645, 2147483648
  %v2693 = vmul.f32 %v2692, 1.442695
  %v2694 = vpow.pop %v2693
  %v2695 = vadd.f32 %v2694, 1.0
  %v2696 = vrcp.pop %v2695
  %v2697 = vmul.f32 1.0, %v2696
  %v2698 = vxor.u32 %v2647, 2147483648
  %v2699 = vmul.f32 %v2698, 1.442695
  %v2700 = vpow.pop %v2699
  %v2701 = vadd.f32 %v2700, 1.0
  %v2702 = vrcp.pop %v2701
  %v2703 = vmul.f32 1.0, %v2702
  %v2704 = vtanh.pop %v2686
  %v2705 = vxor.u32 %v2688, 2147483648
  %v2706 = vmul.f32 %v2705, 1.442695
  %v2707 = vpow.pop %v2706
  %v2708 = vadd.f32 %v2707, 1.0
  %v2709 = vrcp.pop %v2708
  %v2710 = vmul.f32 1.0, %v2709
  %v2711 = vmul.f32 %v2703, %v2474
  %v2712 = vmul.f32 %v2697, %v2704
  %v2713 = vadd.f32 %v2711, %v2712
  %v2714 = vtanh.pop %v2713
  %v2715 = vmul.f32 %v2710, %v2714
  %vm2716 = vcmp.eq.s32.totalorder %v1158, 7
  %v2717 = vsel %vm2716, 1, 0
  %2718 = vset.pattern.permute.xlu0 0
  %2719 = vperm.xlu0 %2718, %v2717
  %v2720 = vpop.permute.xlu0 %2719
  %vm2721 = vcmp.eq.s32.totalorder %v2720, 1
  %v2722 = vsel %vm2721, %v2715, %v2599
  %v2723 = vpack.c.bf16 %v2715, %v2715
  %2724 = vst [vmem:[#allocation3 + $0x4] sm:$0xf] %v2723
  %v2725 = vld [vmem:[%s7] sm:$0xff]
  %v2726 = vld [vmem:[%s7 + $0x8] sm:$0xff]
  %v2727 = vld [vmem:[%s7 + $0x10] sm:$0xff]
  %v2728 = vld [vmem:[%s7 + $0x18] sm:$0xff]
  %v2729 = vld [vmem:[%s7 + $0x20] sm:$0xff]
  %v2730 = vld [vmem:[%s7 + $0x28] sm:$0xff]
  %v2731 = vld [vmem:[%s7 + $0x30] sm:$0xff]
  %v2732 = vld [vmem:[%s7 + $0x38] sm:$0xff]
  %v2733 = vld [vmem:[%s7 + $0x40] sm:$0xff]
  %v2734 = vld [vmem:[%s7 + $0x48] sm:$0xff]
  %v2735 = vld [vmem:[%s7 + $0x50] sm:$0xff]
  %v2736 = vld [vmem:[%s7 + $0x58] sm:$0xff]
  %v2737 = vld [vmem:[%s7 + $0x60] sm:$0xff]
  %v2738 = vld [vmem:[%s7 + $0x68] sm:$0xff]
  %v2739 = vld [vmem:[%s7 + $0x70] sm:$0xff]
  %v2740 = vld [vmem:[%s7 + $0x78] sm:$0xff]
  %v2741 = vld [vmem:[%s8] sm:$0x1]
  %v2743 = vlaneseq
  %v2744 = vshrl.u32 %v2743, 7
  %v2745 = vsub.s32 0, %v2744
  %v2746 = vrot.slane %v2741, %v2745
  %2748 = vmatprep.subr.mxu0 0.0
  %2749 = vmatpush1.msra.mxu0 %v2725
  %2750 = vmatprep.subr.mxu0 0.0
  %2751 = vmatpush1.msra.mxu0 %v2726
  %2752 = vmatprep.subr.mxu0 0.0
  %2753 = vmatpush1.msra.mxu0 %v2727
  %2754 = vmatprep.subr.mxu0 0.0
  %2755 = vmatpush1.msra.mxu0 %v2728
  %2756 = vmatprep.subr.mxu0 0.0
  %2757 = vmatpush1.msra.mxu0 %v2729
  %2758 = vmatprep.subr.mxu0 0.0
  %2759 = vmatpush1.msra.mxu0 %v2730
  %2760 = vmatprep.subr.mxu0 0.0
  %2761 = vmatpush1.msra.mxu0 %v2731
  %2762 = vmatprep.subr.mxu0 0.0
  %2763 = vmatpush1.msra.mxu0 %v2732
  %2764 = vmatprep.subr.mxu0 0.0
  %2765 = vmatpush1.msra.mxu0 %v2733
  %2766 = vmatprep.subr.mxu0 0.0
  %2767 = vmatpush1.msra.mxu0 %v2734
  %2768 = vmatprep.subr.mxu0 0.0
  %2769 = vmatpush1.msra.mxu0 %v2735
  %2770 = vmatprep.subr.mxu0 0.0
  %2771 = vmatpush1.msra.mxu0 %v2736
  %2772 = vmatprep.subr.mxu0 0.0
  %2773 = vmatpush1.msra.mxu0 %v2737
  %2774 = vmatprep.subr.mxu0 0.0
  %2775 = vmatpush1.msra.mxu0 %v2738
  %2776 = vmatprep.subr.mxu0 0.0
  %2777 = vmatpush1.msra.mxu0 %v2739
  %2778 = vmatprep.subr.mxu0 0.0
  %2779 = vmatpush1.msra.mxu0 %v2740
  %2780 = vmatprep.subr.mxu0 0.0
  %2781 = vmatpush1.msra.mxu0 0.0
  %2782 = vmatprep.subr.mxu0 0.0
  %2783 = vmatpush1.msra.mxu0 0.0
  %2784 = vmatprep.subr.mxu0 0.0
  %2785 = vmatpush1.msra.mxu0 0.0
  %2786 = vmatprep.subr.mxu0 0.0
  %2787 = vmatpush1.msra.mxu0 0.0
  %2788 = vmatprep.subr.mxu0 0.0
  %2789 = vmatpush1.msra.mxu0 0.0
  %2790 = vmatprep.subr.mxu0 0.0
  %2791 = vmatpush1.msra.mxu0 0.0
  %2792 = vmatprep.subr.mxu0 0.0
  %2793 = vmatpush1.msra.mxu0 0.0
  %2794 = vmatprep.subr.mxu0 0.0
  %2795 = vmatpush1.msra.mxu0 0.0
  %2796 = vmatprep.subr.mxu0 0.0
  %2797 = vmatpush1.msra.mxu0 0.0
  %2798 = vmatprep.subr.mxu0 0.0
  %2799 = vmatpush1.msra.mxu0 0.0
  %2800 = vmatprep.subr.mxu0 0.0
  %2801 = vmatpush1.msra.mxu0 0.0
  %2802 = vmatprep.subr.mxu0 0.0
  %2803 = vmatpush1.msra.mxu0 0.0
  %2804 = vmatprep.subr.mxu0 0.0
  %2805 = vmatpush1.msra.mxu0 0.0
  %2806 = vmatprep.subr.mxu0 0.0
  %2807 = vmatpush1.msra.mxu0 0.0
  %2808 = vmatprep.subr.mxu0 0.0
  %2809 = vmatpush1.msra.mxu0 0.0
  %2810 = vmatprep.subr.mxu0 0.0
  %2811 = vmatpush1.msra.mxu0 0.0
  %2812 = vmatprep.mubr.f32.mxu0 0.0
  %2813 = vmatmul.mubr.f32.gmra.mrb[0].mxu0 %v2722
  %v2814 = vpop.f32.mrb[0].mxu0
  %v2815 = vadd.f32 %v2746, %v2814
  %v2816 = vpop.f32.mrb[0].mxu0
  %2817 = vdwg.mxu0
  %2818 = vst [vmem:[%s9] sm:$0xff] %v2815
  // Predicated region
  $region38: #{bilstm_forward.1} parent=0 // pred_check
    _
  $region39: #{bilstm_forward.1} parent=0 // pred_check_branch
    %2820 = sbr.rel (0) target = $region41
  $region40: #{bilstm_forward.1} parent=0 // pred_region
    _
  $region41: #{bilstm_forward.1} parent=0 // pred_fallthru
    _
  // Predicated region
  $region42: #{bilstm_forward.1} parent=0 // pred_check
    _
  $region43: #{bilstm_forward.1} parent=0 // pred_check_branch
    %2822 = sbr.rel (0) target = $region45
  $region44: #{bilstm_forward.1} parent=0 // pred_region
    _
  $region45: #{bilstm_forward.1} parent=0 // pred_fallthru
    _

</llo_original>
